<compile_context>
chip_gen: v6e
topology: v6e:2x2x1
jax: 0.10.0
libtpu: 0.0.40
codegen_flags: <defaults>
</compile_context>

<pallas_src>
import numpy as np
import jax
import jax.numpy as jnp
from jax import lax
from jax.experimental import pallas as pl
from jax.experimental.pallas import tpu as pltpu

# ---- small problem sizes ----
B, C, H, W = 2, 4, 16, 16          # batch, channels, spatial
T = 8                              # diffusion steps
BETA_1, BETA_T = 1e-4, 0.02
BH, WC = B * H, W * C              # lane-folded layout: (B*H, W*C) = (32, 64)


def _sampler_kernel(x_T_ref, noise_ref, m_ref, s_ref, bias_ref, coef_ref, out_ref):
    """Entire reverse-diffusion loop in one invocation (state in registers)."""
    # conv operands, hoisted out of the loop
    m_m1 = m_ref[0]                                   # (WC, WC)  dy = -1 taps
    m_0  = m_ref[1]                                   # (WC, WC)  dy =  0 taps
    m_p1 = m_ref[2]                                   # (WC, WC)  dy = +1 taps
    s_m1 = s_ref[0]                                   # (BH, BH)  row shift y-1
    s_p1 = s_ref[1]                                   # (BH, BH)  row shift y+1
    bias = jnp.broadcast_to(bias_ref[...], (BH, WC))  # hoisted broadcast

    def step(s, x_t):
        # ---- synthetic eps-model: 3x3 "same" conv as lane-folded matmuls ----
        xu = jnp.dot(s_m1, x_t, preferred_element_type=jnp.float32)   # x[y-1]
        xd = jnp.dot(s_p1, x_t, preferred_element_type=jnp.float32)   # x[y+1]
        eps = (jnp.dot(xu, m_m1, preferred_element_type=jnp.float32)
               + jnp.dot(x_t, m_0, preferred_element_type=jnp.float32)
               + jnp.dot(xd, m_p1, preferred_element_type=jnp.float32)
               + bias)

        # ---- diffusion update (epsilon / fixedlarge), schedule from SMEM ----
        srab = coef_ref[0, s]     # sqrt(1/alphas_bar)[t]
        srm1 = coef_ref[1, s]     # sqrt(1/alphas_bar - 1)[t]
        c1   = coef_ref[2, s]     # posterior_mean_coef1[t]
        c2   = coef_ref[3, s]     # posterior_mean_coef2[t]
        # time_step == 0 (last reverse step s == T-1): no noise added
        sigma = jnp.where(s == T - 1, 0.0, coef_ref[4, s])

        x0 = jnp.clip(srab * x_t - srm1 * eps, -1.0, 1.0)
        mean = c1 * x0 + c2 * x_t
        return mean + sigma * noise_ref[s]

    x_final = lax.fori_loop(0, T, step, x_T_ref[...], unroll=True)
    out_ref[...] = jnp.clip(x_final, -1.0, 1.0)       # final x_0 clip


def _build_lane_folded_conv(w_np, b_np):
    """Re-layout the (3,3,Cin,Cout) HWIO conv weights for the (B*H, W*C) layout.

    eps2 = (S_{-1} @ X) @ M_{-1} + X @ M_0 + (S_{+1} @ X) @ M_{+1} + bias_row
    where X[b*H+y, x*C+c] = x[b, y, x, c]; W boundaries are encoded in M_dy,
    H/batch boundaries in S_dy (zero rows outside the image).
    """
    m = np.zeros((3, WC, WC), np.float32)
    for kyi in range(3):               # dy = kyi - 1
        for kxi in range(3):           # dx = kxi - 1
            dx = kxi - 1
            for x in range(W):
                xs = x + dx
                if 0 <= xs < W:
                    m[kyi, xs * C:(xs + 1) * C, x * C:(x + 1) * C] = w_np[kyi, kxi]
    s = np.zeros((2, BH, BH), np.float32)
    for b_ in range(B):
        for y in range(H):
            r = b_ * H + y
            if y - 1 >= 0:
                s[0, r, r - 1] = 1.0   # source row for dy = -1
            if y + 1 < H:
                s[1, r, r + 1] = 1.0   # source row for dy = +1
    bias_row = np.tile(b_np.astype(np.float32), W).reshape(1, WC)
    return jnp.asarray(m), jnp.asarray(s), jnp.asarray(bias_row)


def gaussian_diffusion_sample(x_T, noise_steps, w, b, coefs):
    """x_T: (B,H,W,C); noise_steps: (T,B,H,W,C); w: (3,3,C,C); b: (C,);
    coefs: 5 arrays of shape (T,), indexed by reverse step s (s=0 -> t=T-1)."""
    m_mats, s_mats, bias_row = _build_lane_folded_conv(np.asarray(w), np.asarray(b))
    coef = jnp.stack(coefs, axis=0).astype(jnp.float32)     # (5, T) -> SMEM
    x2 = x_T.reshape(BH, WC)                                 # lane-dense fold (free)
    n2 = noise_steps.reshape(T, BH, WC)

    vmem = pl.BlockSpec(memory_space=pltpu.MemorySpace.VMEM)
    smem = pl.BlockSpec(memory_space=pltpu.MemorySpace.SMEM)

    out2 = pl.pallas_call(
        _sampler_kernel,
        out_shape=jax.ShapeDtypeStruct((BH, WC), jnp.float32),
        in_specs=[vmem, vmem, vmem, vmem, vmem, smem],
        out_specs=vmem,
    )(x2, n2, m_mats, s_mats, bias_row, coef)
    return out2.reshape(B, H, W, C)


# -------------------------- pure-JAX reference ------------------------------
def _conv3x3_ref(x, w, b):
    xp = jnp.pad(x, ((0, 0), (1, 1), (1, 1), (0, 0)))
    patches = jnp.stack([xp[:, ky:ky + H, kx:kx + W, :]
                         for ky in range(3) for kx in range(3)], axis=3)  # (B,H,W,9,C)
    return jnp.einsum('bhwkc,kcd->bhwd', patches, w.reshape(9, C, C),
                      precision=lax.Precision.HIGHEST) + b.reshape(1, 1, 1, C)


def sampler_reference(x_T, noise_steps, w, b, coefs):
    srab, srm1, c1, c2, sigma = coefs
    x_t = x_T
    for s in range(T):
        eps = _conv3x3_ref(x_t, w, b)
        x0 = jnp.clip(srab[s] * x_t - srm1[s] * eps, -1.0, 1.0)
        mean = c1[s] * x0 + c2[s] * x_t
        noise = noise_steps[s] if s < T - 1 else 0.0   # time_step == 0: no noise
        x_t = mean + sigma[s] * noise
    return jnp.clip(x_t, -1.0, 1.0)


if __name__ == "__main__":
    # ---- diffusion schedule (float64 on host, mirrors torch double buffers) --
    betas = np.linspace(BETA_1, BETA_T, T, dtype=np.float64)
    alphas = 1.0 - betas
    alphas_bar = np.cumprod(alphas)
    alphas_bar_prev = np.concatenate([[1.0], alphas_bar[:-1]])
    sqrt_recip_alphas_bar = np.sqrt(1.0 / alphas_bar)
    sqrt_recipm1_alphas_bar = np.sqrt(1.0 / alphas_bar - 1.0)
    posterior_var = betas * (1.0 - alphas_bar_prev) / (1.0 - alphas_bar)
    posterior_mean_coef1 = np.sqrt(alphas_bar_prev) * betas / (1.0 - alphas_bar)
    posterior_mean_coef2 = np.sqrt(alphas) * (1.0 - alphas_bar_prev) / (1.0 - alphas_bar)
    # var_type == 'fixedlarge'
    model_log_var = np.log(np.concatenate([posterior_var[1:2], betas[1:]]))
    sigma_np = np.exp(0.5 * model_log_var)

    def rev32(a):  # index by reverse step s (s=0 -> t=T-1)
        return jnp.asarray(np.ascontiguousarray(a[::-1]), dtype=jnp.float32)

    coefs = (rev32(sqrt_recip_alphas_bar), rev32(sqrt_recipm1_alphas_bar),
             rev32(posterior_mean_coef1), rev32(posterior_mean_coef2),
             rev32(sigma_np))

    # ---- deterministic inputs / synthetic model params ----------------------
    key = jax.random.PRNGKey(0)
    k_x, k_n, k_w, k_b = jax.random.split(key, 4)
    x_T = jax.random.normal(k_x, (B, H, W, C), dtype=jnp.float32)
    noise_steps = jax.random.normal(k_n, (T, B, H, W, C), dtype=jnp.float32)
    noise_steps = noise_steps.at[T - 1].set(0.0)   # host contract (kernel also gates)
    w = 0.05 * jax.random.normal(k_w, (3, 3, C, C), dtype=jnp.float32)
    b = 0.01 * jax.random.normal(k_b, (C,), dtype=jnp.float32)

    out = gaussian_diffusion_sample(x_T, noise_steps, w, b, coefs)
    out = jax.block_until_ready(out)

    ref = sampler_reference(x_T, noise_steps, w, b, coefs)
    if not np.allclose(np.asarray(out), np.asarray(ref), rtol=2e-3, atol=2e-3):
        raise AssertionError("Pallas sampler does not match JAX reference")
    print("KERNEL_OK")
</pallas_src>

<mosaic_0001>
module attributes {stable_mosaic.version = 11 : i64} {
  func.func @_sampler_kernel(%arg0: memref<32x64xf32, #tpu.memory_space<vmem>>, %arg1: memref<8x32x64xf32, #tpu.memory_space<vmem>>, %arg2: memref<3x64x64xf32, #tpu.memory_space<vmem>>, %arg3: memref<2x32x32xf32, #tpu.memory_space<vmem>>, %arg4: memref<1x64xf32, #tpu.memory_space<vmem>>, %arg5: memref<5x8xf32, #tpu.memory_space<smem>>, %arg6: memref<32x64xf32, #tpu.memory_space<vmem>>) attributes {dimension_semantics = [], scalar_prefetch = 0 : i64, scratch_operands = 0 : i64, tpu.core_type = #tpu.core_type<tc>} {
    %c0 = arith.constant 0 : index
    %c0_0 = arith.constant 0 : index
    %c0_1 = arith.constant 0 : index
    %0 = vector.load %arg2[%c0, %c0_0, %c0_1] : memref<3x64x64xf32, #tpu.memory_space<vmem>>, vector<1x64x64xf32>
    %1 = vector.shape_cast %0 : vector<1x64x64xf32> to vector<64x64xf32>
    %c1 = arith.constant 1 : index
    %c0_2 = arith.constant 0 : index
    %c0_3 = arith.constant 0 : index
    %2 = vector.load %arg2[%c1, %c0_2, %c0_3] : memref<3x64x64xf32, #tpu.memory_space<vmem>>, vector<1x64x64xf32>
    %3 = vector.shape_cast %2 : vector<1x64x64xf32> to vector<64x64xf32>
    %c2 = arith.constant 2 : index
    %c0_4 = arith.constant 0 : index
    %c0_5 = arith.constant 0 : index
    %4 = vector.load %arg2[%c2, %c0_4, %c0_5] : memref<3x64x64xf32, #tpu.memory_space<vmem>>, vector<1x64x64xf32>
    %5 = vector.shape_cast %4 : vector<1x64x64xf32> to vector<64x64xf32>
    %c0_6 = arith.constant 0 : index
    %c0_7 = arith.constant 0 : index
    %c0_8 = arith.constant 0 : index
    %6 = vector.load %arg3[%c0_6, %c0_7, %c0_8] : memref<2x32x32xf32, #tpu.memory_space<vmem>>, vector<1x32x32xf32>
    %7 = vector.shape_cast %6 : vector<1x32x32xf32> to vector<32x32xf32>
    %c1_9 = arith.constant 1 : index
    %c0_10 = arith.constant 0 : index
    %c0_11 = arith.constant 0 : index
    %8 = vector.load %arg3[%c1_9, %c0_10, %c0_11] : memref<2x32x32xf32, #tpu.memory_space<vmem>>, vector<1x32x32xf32>
    %9 = vector.shape_cast %8 : vector<1x32x32xf32> to vector<32x32xf32>
    %c0_12 = arith.constant 0 : index
    %c0_13 = arith.constant 0 : index
    %10 = vector.load %arg4[%c0_12, %c0_13] : memref<1x64xf32, #tpu.memory_space<vmem>>, vector<1x64xf32>
    %11 = vector.shape_cast %10 : vector<1x64xf32> to vector<1x64xf32>
    %12 = vector.broadcast %11 : vector<1x64xf32> to vector<32x64xf32>
    %c0_14 = arith.constant 0 : index
    %c0_15 = arith.constant 0 : index
    %13 = vector.load %arg0[%c0_14, %c0_15] : memref<32x64xf32, #tpu.memory_space<vmem>>, vector<32x64xf32>
    %c0_i32 = arith.constant 0 : i32
    %cst = arith.constant dense<0.000000e+00> : vector<32x64xf32>
    %14 = tpu.matmul %7, %13, %cst {dimension_numbers = #tpu.dot_dimension_numbers<[1], [0], [0], [1], [0, 0, 1, 1], [], []>} : vector<32x32xf32>, vector<32x64xf32>, vector<32x64xf32> -> vector<32x64xf32>
    %cst_16 = arith.constant dense<0.000000e+00> : vector<32x64xf32>
    %15 = tpu.matmul %9, %13, %cst_16 {dimension_numbers = #tpu.dot_dimension_numbers<[1], [0], [0], [1], [0, 0, 1, 1], [], []>} : vector<32x32xf32>, vector<32x64xf32>, vector<32x64xf32> -> vector<32x64xf32>
    %cst_17 = arith.constant dense<0.000000e+00> : vector<32x64xf32>
    %16 = tpu.matmul %14, %1, %cst_17 {dimension_numbers = #tpu.dot_dimension_numbers<[1], [0], [0], [1], [0, 0, 1, 1], [], []>} : vector<32x64xf32>, vector<64x64xf32>, vector<32x64xf32> -> vector<32x64xf32>
    %cst_18 = arith.constant dense<0.000000e+00> : vector<32x64xf32>
    %17 = tpu.matmul %13, %3, %cst_18 {dimension_numbers = #tpu.dot_dimension_numbers<[1], [0], [0], [1], [0, 0, 1, 1], [], []>} : vector<32x64xf32>, vector<64x64xf32>, vector<32x64xf32> -> vector<32x64xf32>
    %18 = arith.addf %16, %17 : vector<32x64xf32>
    %cst_19 = arith.constant dense<0.000000e+00> : vector<32x64xf32>
    %19 = tpu.matmul %15, %5, %cst_19 {dimension_numbers = #tpu.dot_dimension_numbers<[1], [0], [0], [1], [0, 0, 1, 1], [], []>} : vector<32x64xf32>, vector<64x64xf32>, vector<32x64xf32> -> vector<32x64xf32>
    %20 = arith.addf %18, %19 : vector<32x64xf32>
    %21 = arith.addf %20, %12 : vector<32x64xf32>
    %c0_20 = arith.constant 0 : index
    %22 = arith.index_cast %c0_i32 : i32 to index
    %23 = memref.load %arg5[%c0_20, %22] : memref<5x8xf32, #tpu.memory_space<smem>>
    %c1_21 = arith.constant 1 : index
    %24 = arith.index_cast %c0_i32 : i32 to index
    %25 = memref.load %arg5[%c1_21, %24] : memref<5x8xf32, #tpu.memory_space<smem>>
    %c2_22 = arith.constant 2 : index
    %26 = arith.index_cast %c0_i32 : i32 to index
    %27 = memref.load %arg5[%c2_22, %26] : memref<5x8xf32, #tpu.memory_space<smem>>
    %c3 = arith.constant 3 : index
    %28 = arith.index_cast %c0_i32 : i32 to index
    %29 = memref.load %arg5[%c3, %28] : memref<5x8xf32, #tpu.memory_space<smem>>
    %c7_i32 = arith.constant 7 : i32
    %30 = arith.cmpi eq, %c0_i32, %c7_i32 : i32
    %c4 = arith.constant 4 : index
    %31 = arith.index_cast %c0_i32 : i32 to index
    %32 = memref.load %arg5[%c4, %31] : memref<5x8xf32, #tpu.memory_space<smem>>
    %cst_23 = arith.constant 0.000000e+00 : f32
    %33 = arith.select %30, %cst_23, %32 : f32
    %34 = vector.broadcast %23 : f32 to vector<32x64xf32>
    %35 = arith.mulf %34, %13 : vector<32x64xf32>
    %36 = vector.broadcast %25 : f32 to vector<32x64xf32>
    %37 = arith.mulf %36, %21 : vector<32x64xf32>
    %38 = arith.subf %35, %37 : vector<32x64xf32>
    %cst_24 = arith.constant -1.000000e+00 : f32
    %cst_25 = arith.constant 1.000000e+00 : f32
    %39 = vector.broadcast %cst_24 : f32 to vector<32x64xf32>
    %40 = arith.maximumf %39, %38 : vector<32x64xf32>
    %41 = vector.broadcast %cst_25 : f32 to vector<32x64xf32>
    %42 = arith.minimumf %41, %40 : vector<32x64xf32>
    %43 = vector.broadcast %27 : f32 to vector<32x64xf32>
    %44 = arith.mulf %43, %42 : vector<32x64xf32>
    %45 = vector.broadcast %29 : f32 to vector<32x64xf32>
    %46 = arith.mulf %45, %13 : vector<32x64xf32>
    %47 = arith.addf %44, %46 : vector<32x64xf32>
    %48 = arith.index_cast %c0_i32 : i32 to index
    %c0_26 = arith.constant 0 : index
    %c0_27 = arith.constant 0 : index
    %49 = vector.load %arg1[%48, %c0_26, %c0_27] : memref<8x32x64xf32, #tpu.memory_space<vmem>>, vector<1x32x64xf32>
    %50 = vector.shape_cast %49 : vector<1x32x64xf32> to vector<32x64xf32>
    %51 = vector.broadcast %33 : f32 to vector<32x64xf32>
    %52 = arith.mulf %51, %50 : vector<32x64xf32>
    %53 = arith.addf %47, %52 : vector<32x64xf32>
    %c1_i32 = arith.constant 1 : i32
    %cst_28 = arith.constant dense<0.000000e+00> : vector<32x64xf32>
    %54 = tpu.matmul %7, %53, %cst_28 {dimension_numbers = #tpu.dot_dimension_numbers<[1], [0], [0], [1], [0, 0, 1, 1], [], []>} : vector<32x32xf32>, vector<32x64xf32>, vector<32x64xf32> -> vector<32x64xf32>
    %cst_29 = arith.constant dense<0.000000e+00> : vector<32x64xf32>
    %55 = tpu.matmul %9, %53, %cst_29 {dimension_numbers = #tpu.dot_dimension_numbers<[1], [0], [0], [1], [0, 0, 1, 1], [], []>} : vector<32x32xf32>, vector<32x64xf32>, vector<32x64xf32> -> vector<32x64xf32>
    %cst_30 = arith.constant dense<0.000000e+00> : vector<32x64xf32>
    %56 = tpu.matmul %54, %1, %cst_30 {dimension_numbers = #tpu.dot_dimension_numbers<[1], [0], [0], [1], [0, 0, 1, 1], [], []>} : vector<32x64xf32>, vector<64x64xf32>, vector<32x64xf32> -> vector<32x64xf32>
    %cst_31 = arith.constant dense<0.000000e+00> : vector<32x64xf32>
    %57 = tpu.matmul %53, %3, %cst_31 {dimension_numbers = #tpu.dot_dimension_numbers<[1], [0], [0], [1], [0, 0, 1, 1], [], []>} : vector<32x64xf32>, vector<64x64xf32>, vector<32x64xf32> -> vector<32x64xf32>
    %58 = arith.addf %56, %57 : vector<32x64xf32>
    %cst_32 = arith.constant dense<0.000000e+00> : vector<32x64xf32>
    %59 = tpu.matmul %55, %5, %cst_32 {dimension_numbers = #tpu.dot_dimension_numbers<[1], [0], [0], [1], [0, 0, 1, 1], [], []>} : vector<32x64xf32>, vector<64x64xf32>, vector<32x64xf32> -> vector<32x64xf32>
    %60 = arith.addf %58, %59 : vector<32x64xf32>
    %61 = arith.addf %60, %12 : vector<32x64xf32>
    %c0_33 = arith.constant 0 : index
    %62 = arith.index_cast %c1_i32 : i32 to index
    %63 = memref.load %arg5[%c0_33, %62] : memref<5x8xf32, #tpu.memory_space<smem>>
    %c1_34 = arith.constant 1 : index
    %64 = arith.index_cast %c1_i32 : i32 to index
    %65 = memref.load %arg5[%c1_34, %64] : memref<5x8xf32, #tpu.memory_space<smem>>
    %c2_35 = arith.constant 2 : index
    %66 = arith.index_cast %c1_i32 : i32 to index
    %67 = memref.load %arg5[%c2_35, %66] : memref<5x8xf32, #tpu.memory_space<smem>>
    %c3_36 = arith.constant 3 : index
    %68 = arith.index_cast %c1_i32 : i32 to index
    %69 = memref.load %arg5[%c3_36, %68] : memref<5x8xf32, #tpu.memory_space<smem>>
    %c7_i32_37 = arith.constant 7 : i32
    %70 = arith.cmpi eq, %c1_i32, %c7_i32_37 : i32
    %c4_38 = arith.constant 4 : index
    %71 = arith.index_cast %c1_i32 : i32 to index
    %72 = memref.load %arg5[%c4_38, %71] : memref<5x8xf32, #tpu.memory_space<smem>>
    %cst_39 = arith.constant 0.000000e+00 : f32
    %73 = arith.select %70, %cst_39, %72 : f32
    %74 = vector.broadcast %63 : f32 to vector<32x64xf32>
    %75 = arith.mulf %74, %53 : vector<32x64xf32>
    %76 = vector.broadcast %65 : f32 to vector<32x64xf32>
    %77 = arith.mulf %76, %61 : vector<32x64xf32>
    %78 = arith.subf %75, %77 : vector<32x64xf32>
    %cst_40 = arith.constant -1.000000e+00 : f32
    %cst_41 = arith.constant 1.000000e+00 : f32
    %79 = vector.broadcast %cst_40 : f32 to vector<32x64xf32>
    %80 = arith.maximumf %79, %78 : vector<32x64xf32>
    %81 = vector.broadcast %cst_41 : f32 to vector<32x64xf32>
    %82 = arith.minimumf %81, %80 : vector<32x64xf32>
    %83 = vector.broadcast %67 : f32 to vector<32x64xf32>
    %84 = arith.mulf %83, %82 : vector<32x64xf32>
    %85 = vector.broadcast %69 : f32 to vector<32x64xf32>
    %86 = arith.mulf %85, %53 : vector<32x64xf32>
    %87 = arith.addf %84, %86 : vector<32x64xf32>
    %88 = arith.index_cast %c1_i32 : i32 to index
    %c0_42 = arith.constant 0 : index
    %c0_43 = arith.constant 0 : index
    %89 = vector.load %arg1[%88, %c0_42, %c0_43] : memref<8x32x64xf32, #tpu.memory_space<vmem>>, vector<1x32x64xf32>
    %90 = vector.shape_cast %89 : vector<1x32x64xf32> to vector<32x64xf32>
    %91 = vector.broadcast %73 : f32 to vector<32x64xf32>
    %92 = arith.mulf %91, %90 : vector<32x64xf32>
    %93 = arith.addf %87, %92 : vector<32x64xf32>
    %c2_i32 = arith.constant 2 : i32
    %cst_44 = arith.constant dense<0.000000e+00> : vector<32x64xf32>
    %94 = tpu.matmul %7, %93, %cst_44 {dimension_numbers = #tpu.dot_dimension_numbers<[1], [0], [0], [1], [0, 0, 1, 1], [], []>} : vector<32x32xf32>, vector<32x64xf32>, vector<32x64xf32> -> vector<32x64xf32>
    %cst_45 = arith.constant dense<0.000000e+00> : vector<32x64xf32>
    %95 = tpu.matmul %9, %93, %cst_45 {dimension_numbers = #tpu.dot_dimension_numbers<[1], [0], [0], [1], [0, 0, 1, 1], [], []>} : vector<32x32xf32>, vector<32x64xf32>, vector<32x64xf32> -> vector<32x64xf32>
    %cst_46 = arith.constant dense<0.000000e+00> : vector<32x64xf32>
    %96 = tpu.matmul %94, %1, %cst_46 {dimension_numbers = #tpu.dot_dimension_numbers<[1], [0], [0], [1], [0, 0, 1, 1], [], []>} : vector<32x64xf32>, vector<64x64xf32>, vector<32x64xf32> -> vector<32x64xf32>
    %cst_47 = arith.constant dense<0.000000e+00> : vector<32x64xf32>
    %97 = tpu.matmul %93, %3, %cst_47 {dimension_numbers = #tpu.dot_dimension_numbers<[1], [0], [0], [1], [0, 0, 1, 1], [], []>} : vector<32x64xf32>, vector<64x64xf32>, vector<32x64xf32> -> vector<32x64xf32>
    %98 = arith.addf %96, %97 : vector<32x64xf32>
    %cst_48 = arith.constant dense<0.000000e+00> : vector<32x64xf32>
    %99 = tpu.matmul %95, %5, %cst_48 {dimension_numbers = #tpu.dot_dimension_numbers<[1], [0], [0], [1], [0, 0, 1, 1], [], []>} : vector<32x64xf32>, vector<64x64xf32>, vector<32x64xf32> -> vector<32x64xf32>
    %100 = arith.addf %98, %99 : vector<32x64xf32>
    %101 = arith.addf %100, %12 : vector<32x64xf32>
    %c0_49 = arith.constant 0 : index
    %102 = arith.index_cast %c2_i32 : i32 to index
    %103 = memref.load %arg5[%c0_49, %102] : memref<5x8xf32, #tpu.memory_space<smem>>
    %c1_50 = arith.constant 1 : index
    %104 = arith.index_cast %c2_i32 : i32 to index
    %105 = memref.load %arg5[%c1_50, %104] : memref<5x8xf32, #tpu.memory_space<smem>>
    %c2_51 = arith.constant 2 : index
    %106 = arith.index_cast %c2_i32 : i32 to index
    %107 = memref.load %arg5[%c2_51, %106] : memref<5x8xf32, #tpu.memory_space<smem>>
    %c3_52 = arith.constant 3 : index
    %108 = arith.index_cast %c2_i32 : i32 to index
    %109 = memref.load %arg5[%c3_52, %108] : memref<5x8xf32, #tpu.memory_space<smem>>
    %c7_i32_53 = arith.constant 7 : i32
    %110 = arith.cmpi eq, %c2_i32, %c7_i32_53 : i32
    %c4_54 = arith.constant 4 : index
    %111 = arith.index_cast %c2_i32 : i32 to index
    %112 = memref.load %arg5[%c4_54, %111] : memref<5x8xf32, #tpu.memory_space<smem>>
    %cst_55 = arith.constant 0.000000e+00 : f32
    %113 = arith.select %110, %cst_55, %112 : f32
    %114 = vector.broadcast %103 : f32 to vector<32x64xf32>
    %115 = arith.mulf %114, %93 : vector<32x64xf32>
    %116 = vector.broadcast %105 : f32 to vector<32x64xf32>
    %117 = arith.mulf %116, %101 : vector<32x64xf32>
    %118 = arith.subf %115, %117 : vector<32x64xf32>
    %cst_56 = arith.constant -1.000000e+00 : f32
    %cst_57 = arith.constant 1.000000e+00 : f32
    %119 = vector.broadcast %cst_56 : f32 to vector<32x64xf32>
    %120 = arith.maximumf %119, %118 : vector<32x64xf32>
    %121 = vector.broadcast %cst_57 : f32 to vector<32x64xf32>
    %122 = arith.minimumf %121, %120 : vector<32x64xf32>
    %123 = vector.broadcast %107 : f32 to vector<32x64xf32>
    %124 = arith.mulf %123, %122 : vector<32x64xf32>
    %125 = vector.broadcast %109 : f32 to vector<32x64xf32>
    %126 = arith.mulf %125, %93 : vector<32x64xf32>
    %127 = arith.addf %124, %126 : vector<32x64xf32>
    %128 = arith.index_cast %c2_i32 : i32 to index
    %c0_58 = arith.constant 0 : index
    %c0_59 = arith.constant 0 : index
    %129 = vector.load %arg1[%128, %c0_58, %c0_59] : memref<8x32x64xf32, #tpu.memory_space<vmem>>, vector<1x32x64xf32>
    %130 = vector.shape_cast %129 : vector<1x32x64xf32> to vector<32x64xf32>
    %131 = vector.broadcast %113 : f32 to vector<32x64xf32>
    %132 = arith.mulf %131, %130 : vector<32x64xf32>
    %133 = arith.addf %127, %132 : vector<32x64xf32>
    %c3_i32 = arith.constant 3 : i32
    %cst_60 = arith.constant dense<0.000000e+00> : vector<32x64xf32>
    %134 = tpu.matmul %7, %133, %cst_60 {dimension_numbers = #tpu.dot_dimension_numbers<[1], [0], [0], [1], [0, 0, 1, 1], [], []>} : vector<32x32xf32>, vector<32x64xf32>, vector<32x64xf32> -> vector<32x64xf32>
    %cst_61 = arith.constant dense<0.000000e+00> : vector<32x64xf32>
    %135 = tpu.matmul %9, %133, %cst_61 {dimension_numbers = #tpu.dot_dimension_numbers<[1], [0], [0], [1], [0, 0, 1, 1], [], []>} : vector<32x32xf32>, vector<32x64xf32>, vector<32x64xf32> -> vector<32x64xf32>
    %cst_62 = arith.constant dense<0.000000e+00> : vector<32x64xf32>
    %136 = tpu.matmul %134, %1, %cst_62 {dimension_numbers = #tpu.dot_dimension_numbers<[1], [0], [0], [1], [0, 0, 1, 1], [], []>} : vector<32x64xf32>, vector<64x64xf32>, vector<32x64xf32> -> vector<32x64xf32>
    %cst_63 = arith.constant dense<0.000000e+00> : vector<32x64xf32>
    %137 = tpu.matmul %133, %3, %cst_63 {dimension_numbers = #tpu.dot_dimension_numbers<[1], [0], [0], [1], [0, 0, 1, 1], [], []>} : vector<32x64xf32>, vector<64x64xf32>, vector<32x64xf32> -> vector<32x64xf32>
    %138 = arith.addf %136, %137 : vector<32x64xf32>
    %cst_64 = arith.constant dense<0.000000e+00> : vector<32x64xf32>
    %139 = tpu.matmul %135, %5, %cst_64 {dimension_numbers = #tpu.dot_dimension_numbers<[1], [0], [0], [1], [0, 0, 1, 1], [], []>} : vector<32x64xf32>, vector<64x64xf32>, vector<32x64xf32> -> vector<32x64xf32>
    %140 = arith.addf %138, %139 : vector<32x64xf32>
    %141 = arith.addf %140, %12 : vector<32x64xf32>
    %c0_65 = arith.constant 0 : index
    %142 = arith.index_cast %c3_i32 : i32 to index
    %143 = memref.load %arg5[%c0_65, %142] : memref<5x8xf32, #tpu.memory_space<smem>>
    %c1_66 = arith.constant 1 : index
    %144 = arith.index_cast %c3_i32 : i32 to index
    %145 = memref.load %arg5[%c1_66, %144] : memref<5x8xf32, #tpu.memory_space<smem>>
    %c2_67 = arith.constant 2 : index
    %146 = arith.index_cast %c3_i32 : i32 to index
    %147 = memref.load %arg5[%c2_67, %146] : memref<5x8xf32, #tpu.memory_space<smem>>
    %c3_68 = arith.constant 3 : index
    %148 = arith.index_cast %c3_i32 : i32 to index
    %149 = memref.load %arg5[%c3_68, %148] : memref<5x8xf32, #tpu.memory_space<smem>>
    %c7_i32_69 = arith.constant 7 : i32
    %150 = arith.cmpi eq, %c3_i32, %c7_i32_69 : i32
    %c4_70 = arith.constant 4 : index
    %151 = arith.index_cast %c3_i32 : i32 to index
    %152 = memref.load %arg5[%c4_70, %151] : memref<5x8xf32, #tpu.memory_space<smem>>
    %cst_71 = arith.constant 0.000000e+00 : f32
    %153 = arith.select %150, %cst_71, %152 : f32
    %154 = vector.broadcast %143 : f32 to vector<32x64xf32>
    %155 = arith.mulf %154, %133 : vector<32x64xf32>
    %156 = vector.broadcast %145 : f32 to vector<32x64xf32>
    %157 = arith.mulf %156, %141 : vector<32x64xf32>
    %158 = arith.subf %155, %157 : vector<32x64xf32>
    %cst_72 = arith.constant -1.000000e+00 : f32
    %cst_73 = arith.constant 1.000000e+00 : f32
    %159 = vector.broadcast %cst_72 : f32 to vector<32x64xf32>
    %160 = arith.maximumf %159, %158 : vector<32x64xf32>
    %161 = vector.broadcast %cst_73 : f32 to vector<32x64xf32>
    %162 = arith.minimumf %161, %160 : vector<32x64xf32>
    %163 = vector.broadcast %147 : f32 to vector<32x64xf32>
    %164 = arith.mulf %163, %162 : vector<32x64xf32>
    %165 = vector.broadcast %149 : f32 to vector<32x64xf32>
    %166 = arith.mulf %165, %133 : vector<32x64xf32>
    %167 = arith.addf %164, %166 : vector<32x64xf32>
    %168 = arith.index_cast %c3_i32 : i32 to index
    %c0_74 = arith.constant 0 : index
    %c0_75 = arith.constant 0 : index
    %169 = vector.load %arg1[%168, %c0_74, %c0_75] : memref<8x32x64xf32, #tpu.memory_space<vmem>>, vector<1x32x64xf32>
    %170 = vector.shape_cast %169 : vector<1x32x64xf32> to vector<32x64xf32>
    %171 = vector.broadcast %153 : f32 to vector<32x64xf32>
    %172 = arith.mulf %171, %170 : vector<32x64xf32>
    %173 = arith.addf %167, %172 : vector<32x64xf32>
    %c4_i32 = arith.constant 4 : i32
    %cst_76 = arith.constant dense<0.000000e+00> : vector<32x64xf32>
    %174 = tpu.matmul %7, %173, %cst_76 {dimension_numbers = #tpu.dot_dimension_numbers<[1], [0], [0], [1], [0, 0, 1, 1], [], []>} : vector<32x32xf32>, vector<32x64xf32>, vector<32x64xf32> -> vector<32x64xf32>
    %cst_77 = arith.constant dense<0.000000e+00> : vector<32x64xf32>
    %175 = tpu.matmul %9, %173, %cst_77 {dimension_numbers = #tpu.dot_dimension_numbers<[1], [0], [0], [1], [0, 0, 1, 1], [], []>} : vector<32x32xf32>, vector<32x64xf32>, vector<32x64xf32> -> vector<32x64xf32>
    %cst_78 = arith.constant dense<0.000000e+00> : vector<32x64xf32>
    %176 = tpu.matmul %174, %1, %cst_78 {dimension_numbers = #tpu.dot_dimension_numbers<[1], [0], [0], [1], [0, 0, 1, 1], [], []>} : vector<32x64xf32>, vector<64x64xf32>, vector<32x64xf32> -> vector<32x64xf32>
    %cst_79 = arith.constant dense<0.000000e+00> : vector<32x64xf32>
    %177 = tpu.matmul %173, %3, %cst_79 {dimension_numbers = #tpu.dot_dimension_numbers<[1], [0], [0], [1], [0, 0, 1, 1], [], []>} : vector<32x64xf32>, vector<64x64xf32>, vector<32x64xf32> -> vector<32x64xf32>
    %178 = arith.addf %176, %177 : vector<32x64xf32>
    %cst_80 = arith.constant dense<0.000000e+00> : vector<32x64xf32>
    %179 = tpu.matmul %175, %5, %cst_80 {dimension_numbers = #tpu.dot_dimension_numbers<[1], [0], [0], [1], [0, 0, 1, 1], [], []>} : vector<32x64xf32>, vector<64x64xf32>, vector<32x64xf32> -> vector<32x64xf32>
    %180 = arith.addf %178, %179 : vector<32x64xf32>
    %181 = arith.addf %180, %12 : vector<32x64xf32>
    %c0_81 = arith.constant 0 : index
    %182 = arith.index_cast %c4_i32 : i32 to index
    %183 = memref.load %arg5[%c0_81, %182] : memref<5x8xf32, #tpu.memory_space<smem>>
    %c1_82 = arith.constant 1 : index
    %184 = arith.index_cast %c4_i32 : i32 to index
    %185 = memref.load %arg5[%c1_82, %184] : memref<5x8xf32, #tpu.memory_space<smem>>
    %c2_83 = arith.constant 2 : index
    %186 = arith.index_cast %c4_i32 : i32 to index
    %187 = memref.load %arg5[%c2_83, %186] : memref<5x8xf32, #tpu.memory_space<smem>>
    %c3_84 = arith.constant 3 : index
    %188 = arith.index_cast %c4_i32 : i32 to index
    %189 = memref.load %arg5[%c3_84, %188] : memref<5x8xf32, #tpu.memory_space<smem>>
    %c7_i32_85 = arith.constant 7 : i32
    %190 = arith.cmpi eq, %c4_i32, %c7_i32_85 : i32
    %c4_86 = arith.constant 4 : index
    %191 = arith.index_cast %c4_i32 : i32 to index
    %192 = memref.load %arg5[%c4_86, %191] : memref<5x8xf32, #tpu.memory_space<smem>>
    %cst_87 = arith.constant 0.000000e+00 : f32
    %193 = arith.select %190, %cst_87, %192 : f32
    %194 = vector.broadcast %183 : f32 to vector<32x64xf32>
    %195 = arith.mulf %194, %173 : vector<32x64xf32>
    %196 = vector.broadcast %185 : f32 to vector<32x64xf32>
    %197 = arith.mulf %196, %181 : vector<32x64xf32>
    %198 = arith.subf %195, %197 : vector<32x64xf32>
    %cst_88 = arith.constant -1.000000e+00 : f32
    %cst_89 = arith.constant 1.000000e+00 : f32
    %199 = vector.broadcast %cst_88 : f32 to vector<32x64xf32>
    %200 = arith.maximumf %199, %198 : vector<32x64xf32>
    %201 = vector.broadcast %cst_89 : f32 to vector<32x64xf32>
    %202 = arith.minimumf %201, %200 : vector<32x64xf32>
    %203 = vector.broadcast %187 : f32 to vector<32x64xf32>
    %204 = arith.mulf %203, %202 : vector<32x64xf32>
    %205 = vector.broadcast %189 : f32 to vector<32x64xf32>
    %206 = arith.mulf %205, %173 : vector<32x64xf32>
    %207 = arith.addf %204, %206 : vector<32x64xf32>
    %208 = arith.index_cast %c4_i32 : i32 to index
    %c0_90 = arith.constant 0 : index
    %c0_91 = arith.constant 0 : index
    %209 = vector.load %arg1[%208, %c0_90, %c0_91] : memref<8x32x64xf32, #tpu.memory_space<vmem>>, vector<1x32x64xf32>
    %210 = vector.shape_cast %209 : vector<1x32x64xf32> to vector<32x64xf32>
    %211 = vector.broadcast %193 : f32 to vector<32x64xf32>
    %212 = arith.mulf %211, %210 : vector<32x64xf32>
    %213 = arith.addf %207, %212 : vector<32x64xf32>
    %c5_i32 = arith.constant 5 : i32
    %cst_92 = arith.constant dense<0.000000e+00> : vector<32x64xf32>
    %214 = tpu.matmul %7, %213, %cst_92 {dimension_numbers = #tpu.dot_dimension_numbers<[1], [0], [0], [1], [0, 0, 1, 1], [], []>} : vector<32x32xf32>, vector<32x64xf32>, vector<32x64xf32> -> vector<32x64xf32>
    %cst_93 = arith.constant dense<0.000000e+00> : vector<32x64xf32>
    %215 = tpu.matmul %9, %213, %cst_93 {dimension_numbers = #tpu.dot_dimension_numbers<[1], [0], [0], [1], [0, 0, 1, 1], [], []>} : vector<32x32xf32>, vector<32x64xf32>, vector<32x64xf32> -> vector<32x64xf32>
    %cst_94 = arith.constant dense<0.000000e+00> : vector<32x64xf32>
    %216 = tpu.matmul %214, %1, %cst_94 {dimension_numbers = #tpu.dot_dimension_numbers<[1], [0], [0], [1], [0, 0, 1, 1], [], []>} : vector<32x64xf32>, vector<64x64xf32>, vector<32x64xf32> -> vector<32x64xf32>
    %cst_95 = arith.constant dense<0.000000e+00> : vector<32x64xf32>
    %217 = tpu.matmul %213, %3, %cst_95 {dimension_numbers = #tpu.dot_dimension_numbers<[1], [0], [0], [1], [0, 0, 1, 1], [], []>} : vector<32x64xf32>, vector<64x64xf32>, vector<32x64xf32> -> vector<32x64xf32>
    %218 = arith.addf %216, %217 : vector<32x64xf32>
    %cst_96 = arith.constant dense<0.000000e+00> : vector<32x64xf32>
    %219 = tpu.matmul %215, %5, %cst_96 {dimension_numbers = #tpu.dot_dimension_numbers<[1], [0], [0], [1], [0, 0, 1, 1], [], []>} : vector<32x64xf32>, vector<64x64xf32>, vector<32x64xf32> -> vector<32x64xf32>
    %220 = arith.addf %218, %219 : vector<32x64xf32>
    %221 = arith.addf %220, %12 : vector<32x64xf32>
    %c0_97 = arith.constant 0 : index
    %222 = arith.index_cast %c5_i32 : i32 to index
    %223 = memref.load %arg5[%c0_97, %222] : memref<5x8xf32, #tpu.memory_space<smem>>
    %c1_98 = arith.constant 1 : index
    %224 = arith.index_cast %c5_i32 : i32 to index
    %225 = memref.load %arg5[%c1_98, %224] : memref<5x8xf32, #tpu.memory_space<smem>>
    %c2_99 = arith.constant 2 : index
    %226 = arith.index_cast %c5_i32 : i32 to index
    %227 = memref.load %arg5[%c2_99, %226] : memref<5x8xf32, #tpu.memory_space<smem>>
    %c3_100 = arith.constant 3 : index
    %228 = arith.index_cast %c5_i32 : i32 to index
    %229 = memref.load %arg5[%c3_100, %228] : memref<5x8xf32, #tpu.memory_space<smem>>
    %c7_i32_101 = arith.constant 7 : i32
    %230 = arith.cmpi eq, %c5_i32, %c7_i32_101 : i32
    %c4_102 = arith.constant 4 : index
    %231 = arith.index_cast %c5_i32 : i32 to index
    %232 = memref.load %arg5[%c4_102, %231] : memref<5x8xf32, #tpu.memory_space<smem>>
    %cst_103 = arith.constant 0.000000e+00 : f32
    %233 = arith.select %230, %cst_103, %232 : f32
    %234 = vector.broadcast %223 : f32 to vector<32x64xf32>
    %235 = arith.mulf %234, %213 : vector<32x64xf32>
    %236 = vector.broadcast %225 : f32 to vector<32x64xf32>
    %237 = arith.mulf %236, %221 : vector<32x64xf32>
    %238 = arith.subf %235, %237 : vector<32x64xf32>
    %cst_104 = arith.constant -1.000000e+00 : f32
    %cst_105 = arith.constant 1.000000e+00 : f32
    %239 = vector.broadcast %cst_104 : f32 to vector<32x64xf32>
    %240 = arith.maximumf %239, %238 : vector<32x64xf32>
    %241 = vector.broadcast %cst_105 : f32 to vector<32x64xf32>
    %242 = arith.minimumf %241, %240 : vector<32x64xf32>
    %243 = vector.broadcast %227 : f32 to vector<32x64xf32>
    %244 = arith.mulf %243, %242 : vector<32x64xf32>
    %245 = vector.broadcast %229 : f32 to vector<32x64xf32>
    %246 = arith.mulf %245, %213 : vector<32x64xf32>
    %247 = arith.addf %244, %246 : vector<32x64xf32>
    %248 = arith.index_cast %c5_i32 : i32 to index
    %c0_106 = arith.constant 0 : index
    %c0_107 = arith.constant 0 : index
    %249 = vector.load %arg1[%248, %c0_106, %c0_107] : memref<8x32x64xf32, #tpu.memory_space<vmem>>, vector<1x32x64xf32>
    %250 = vector.shape_cast %249 : vector<1x32x64xf32> to vector<32x64xf32>
    %251 = vector.broadcast %233 : f32 to vector<32x64xf32>
    %252 = arith.mulf %251, %250 : vector<32x64xf32>
    %253 = arith.addf %247, %252 : vector<32x64xf32>
    %c6_i32 = arith.constant 6 : i32
    %cst_108 = arith.constant dense<0.000000e+00> : vector<32x64xf32>
    %254 = tpu.matmul %7, %253, %cst_108 {dimension_numbers = #tpu.dot_dimension_numbers<[1], [0], [0], [1], [0, 0, 1, 1], [], []>} : vector<32x32xf32>, vector<32x64xf32>, vector<32x64xf32> -> vector<32x64xf32>
    %cst_109 = arith.constant dense<0.000000e+00> : vector<32x64xf32>
    %255 = tpu.matmul %9, %253, %cst_109 {dimension_numbers = #tpu.dot_dimension_numbers<[1], [0], [0], [1], [0, 0, 1, 1], [], []>} : vector<32x32xf32>, vector<32x64xf32>, vector<32x64xf32> -> vector<32x64xf32>
    %cst_110 = arith.constant dense<0.000000e+00> : vector<32x64xf32>
    %256 = tpu.matmul %254, %1, %cst_110 {dimension_numbers = #tpu.dot_dimension_numbers<[1], [0], [0], [1], [0, 0, 1, 1], [], []>} : vector<32x64xf32>, vector<64x64xf32>, vector<32x64xf32> -> vector<32x64xf32>
    %cst_111 = arith.constant dense<0.000000e+00> : vector<32x64xf32>
    %257 = tpu.matmul %253, %3, %cst_111 {dimension_numbers = #tpu.dot_dimension_numbers<[1], [0], [0], [1], [0, 0, 1, 1], [], []>} : vector<32x64xf32>, vector<64x64xf32>, vector<32x64xf32> -> vector<32x64xf32>
    %258 = arith.addf %256, %257 : vector<32x64xf32>
    %cst_112 = arith.constant dense<0.000000e+00> : vector<32x64xf32>
    %259 = tpu.matmul %255, %5, %cst_112 {dimension_numbers = #tpu.dot_dimension_numbers<[1], [0], [0], [1], [0, 0, 1, 1], [], []>} : vector<32x64xf32>, vector<64x64xf32>, vector<32x64xf32> -> vector<32x64xf32>
    %260 = arith.addf %258, %259 : vector<32x64xf32>
    %261 = arith.addf %260, %12 : vector<32x64xf32>
    %c0_113 = arith.constant 0 : index
    %262 = arith.index_cast %c6_i32 : i32 to index
    %263 = memref.load %arg5[%c0_113, %262] : memref<5x8xf32, #tpu.memory_space<smem>>
    %c1_114 = arith.constant 1 : index
    %264 = arith.index_cast %c6_i32 : i32 to index
    %265 = memref.load %arg5[%c1_114, %264] : memref<5x8xf32, #tpu.memory_space<smem>>
    %c2_115 = arith.constant 2 : index
    %266 = arith.index_cast %c6_i32 : i32 to index
    %267 = memref.load %arg5[%c2_115, %266] : memref<5x8xf32, #tpu.memory_space<smem>>
    %c3_116 = arith.constant 3 : index
    %268 = arith.index_cast %c6_i32 : i32 to index
    %269 = memref.load %arg5[%c3_116, %268] : memref<5x8xf32, #tpu.memory_space<smem>>
    %c7_i32_117 = arith.constant 7 : i32
    %270 = arith.cmpi eq, %c6_i32, %c7_i32_117 : i32
    %c4_118 = arith.constant 4 : index
    %271 = arith.index_cast %c6_i32 : i32 to index
    %272 = memref.load %arg5[%c4_118, %271] : memref<5x8xf32, #tpu.memory_space<smem>>
    %cst_119 = arith.constant 0.000000e+00 : f32
    %273 = arith.select %270, %cst_119, %272 : f32
    %274 = vector.broadcast %263 : f32 to vector<32x64xf32>
    %275 = arith.mulf %274, %253 : vector<32x64xf32>
    %276 = vector.broadcast %265 : f32 to vector<32x64xf32>
    %277 = arith.mulf %276, %261 : vector<32x64xf32>
    %278 = arith.subf %275, %277 : vector<32x64xf32>
    %cst_120 = arith.constant -1.000000e+00 : f32
    %cst_121 = arith.constant 1.000000e+00 : f32
    %279 = vector.broadcast %cst_120 : f32 to vector<32x64xf32>
    %280 = arith.maximumf %279, %278 : vector<32x64xf32>
    %281 = vector.broadcast %cst_121 : f32 to vector<32x64xf32>
    %282 = arith.minimumf %281, %280 : vector<32x64xf32>
    %283 = vector.broadcast %267 : f32 to vector<32x64xf32>
    %284 = arith.mulf %283, %282 : vector<32x64xf32>
    %285 = vector.broadcast %269 : f32 to vector<32x64xf32>
    %286 = arith.mulf %285, %253 : vector<32x64xf32>
    %287 = arith.addf %284, %286 : vector<32x64xf32>
    %288 = arith.index_cast %c6_i32 : i32 to index
    %c0_122 = arith.constant 0 : index
    %c0_123 = arith.constant 0 : index
    %289 = vector.load %arg1[%288, %c0_122, %c0_123] : memref<8x32x64xf32, #tpu.memory_space<vmem>>, vector<1x32x64xf32>
    %290 = vector.shape_cast %289 : vector<1x32x64xf32> to vector<32x64xf32>
    %291 = vector.broadcast %273 : f32 to vector<32x64xf32>
    %292 = arith.mulf %291, %290 : vector<32x64xf32>
    %293 = arith.addf %287, %292 : vector<32x64xf32>
    %c7_i32_124 = arith.constant 7 : i32
    %cst_125 = arith.constant dense<0.000000e+00> : vector<32x64xf32>
    %294 = tpu.matmul %7, %293, %cst_125 {dimension_numbers = #tpu.dot_dimension_numbers<[1], [0], [0], [1], [0, 0, 1, 1], [], []>} : vector<32x32xf32>, vector<32x64xf32>, vector<32x64xf32> -> vector<32x64xf32>
    %cst_126 = arith.constant dense<0.000000e+00> : vector<32x64xf32>
    %295 = tpu.matmul %9, %293, %cst_126 {dimension_numbers = #tpu.dot_dimension_numbers<[1], [0], [0], [1], [0, 0, 1, 1], [], []>} : vector<32x32xf32>, vector<32x64xf32>, vector<32x64xf32> -> vector<32x64xf32>
    %cst_127 = arith.constant dense<0.000000e+00> : vector<32x64xf32>
    %296 = tpu.matmul %294, %1, %cst_127 {dimension_numbers = #tpu.dot_dimension_numbers<[1], [0], [0], [1], [0, 0, 1, 1], [], []>} : vector<32x64xf32>, vector<64x64xf32>, vector<32x64xf32> -> vector<32x64xf32>
    %cst_128 = arith.constant dense<0.000000e+00> : vector<32x64xf32>
    %297 = tpu.matmul %293, %3, %cst_128 {dimension_numbers = #tpu.dot_dimension_numbers<[1], [0], [0], [1], [0, 0, 1, 1], [], []>} : vector<32x64xf32>, vector<64x64xf32>, vector<32x64xf32> -> vector<32x64xf32>
    %298 = arith.addf %296, %297 : vector<32x64xf32>
    %cst_129 = arith.constant dense<0.000000e+00> : vector<32x64xf32>
    %299 = tpu.matmul %295, %5, %cst_129 {dimension_numbers = #tpu.dot_dimension_numbers<[1], [0], [0], [1], [0, 0, 1, 1], [], []>} : vector<32x64xf32>, vector<64x64xf32>, vector<32x64xf32> -> vector<32x64xf32>
    %300 = arith.addf %298, %299 : vector<32x64xf32>
    %301 = arith.addf %300, %12 : vector<32x64xf32>
    %c0_130 = arith.constant 0 : index
    %302 = arith.index_cast %c7_i32_124 : i32 to index
    %303 = memref.load %arg5[%c0_130, %302] : memref<5x8xf32, #tpu.memory_space<smem>>
    %c1_131 = arith.constant 1 : index
    %304 = arith.index_cast %c7_i32_124 : i32 to index
    %305 = memref.load %arg5[%c1_131, %304] : memref<5x8xf32, #tpu.memory_space<smem>>
    %c2_132 = arith.constant 2 : index
    %306 = arith.index_cast %c7_i32_124 : i32 to index
    %307 = memref.load %arg5[%c2_132, %306] : memref<5x8xf32, #tpu.memory_space<smem>>
    %c3_133 = arith.constant 3 : index
    %308 = arith.index_cast %c7_i32_124 : i32 to index
    %309 = memref.load %arg5[%c3_133, %308] : memref<5x8xf32, #tpu.memory_space<smem>>
    %c7_i32_134 = arith.constant 7 : i32
    %310 = arith.cmpi eq, %c7_i32_124, %c7_i32_134 : i32
    %c4_135 = arith.constant 4 : index
    %311 = arith.index_cast %c7_i32_124 : i32 to index
    %312 = memref.load %arg5[%c4_135, %311] : memref<5x8xf32, #tpu.memory_space<smem>>
    %cst_136 = arith.constant 0.000000e+00 : f32
    %313 = arith.select %310, %cst_136, %312 : f32
    %314 = vector.broadcast %303 : f32 to vector<32x64xf32>
    %315 = arith.mulf %314, %293 : vector<32x64xf32>
    %316 = vector.broadcast %305 : f32 to vector<32x64xf32>
    %317 = arith.mulf %316, %301 : vector<32x64xf32>
    %318 = arith.subf %315, %317 : vector<32x64xf32>
    %cst_137 = arith.constant -1.000000e+00 : f32
    %cst_138 = arith.constant 1.000000e+00 : f32
    %319 = vector.broadcast %cst_137 : f32 to vector<32x64xf32>
    %320 = arith.maximumf %319, %318 : vector<32x64xf32>
    %321 = vector.broadcast %cst_138 : f32 to vector<32x64xf32>
    %322 = arith.minimumf %321, %320 : vector<32x64xf32>
    %323 = vector.broadcast %307 : f32 to vector<32x64xf32>
    %324 = arith.mulf %323, %322 : vector<32x64xf32>
    %325 = vector.broadcast %309 : f32 to vector<32x64xf32>
    %326 = arith.mulf %325, %293 : vector<32x64xf32>
    %327 = arith.addf %324, %326 : vector<32x64xf32>
    %328 = arith.index_cast %c7_i32_124 : i32 to index
    %c0_139 = arith.constant 0 : index
    %c0_140 = arith.constant 0 : index
    %329 = vector.load %arg1[%328, %c0_139, %c0_140] : memref<8x32x64xf32, #tpu.memory_space<vmem>>, vector<1x32x64xf32>
    %330 = vector.shape_cast %329 : vector<1x32x64xf32> to vector<32x64xf32>
    %331 = vector.broadcast %313 : f32 to vector<32x64xf32>
    %332 = arith.mulf %331, %330 : vector<32x64xf32>
    %333 = arith.addf %327, %332 : vector<32x64xf32>
    %c8_i32 = arith.constant 8 : i32
    %cst_141 = arith.constant -1.000000e+00 : f32
    %cst_142 = arith.constant 1.000000e+00 : f32
    %334 = vector.broadcast %cst_141 : f32 to vector<32x64xf32>
    %335 = arith.maximumf %334, %333 : vector<32x64xf32>
    %336 = vector.broadcast %cst_142 : f32 to vector<32x64xf32>
    %337 = arith.minimumf %336, %335 : vector<32x64xf32>
    %c0_143 = arith.constant 0 : index
    %c0_144 = arith.constant 0 : index
    %338 = vector.load %arg6[%c0_143, %c0_144] : memref<32x64xf32, #tpu.memory_space<vmem>>, vector<32x64xf32>
    tpu.vector_store %arg6[%c0_143, %c0_144], %337 {strides = array<i32>} : memref<32x64xf32, #tpu.memory_space<vmem>>, vector<32x64xf32>,
    return
  }
}

</mosaic_0001>

<llo_original>
// kernel: tpu_custom_call.1
$region0: #{tpu_custom_call.1}
  #allocation0 [shape = 'u32[]', space=smem, size = 0x4, offset = 0x4, fixed_abs, tag = 'smem constant byte address 0x4 - core index']
  #allocation1 [shape = 'u32[144,128]{1,0:T(1,128)}', space=vmem, size = 0x12000, scoped, tag = 'internal scratch']
  %s0 = inlined_call_operand.hbm [shape: f32[32,64], index: 0, kind: input, shape index: {}]
  %s1 = inlined_call_operand.hbm [shape: f32[8,32,64], index: 1, kind: input, shape index: {}]
  %s2 = inlined_call_operand.hbm [shape: f32[3,64,64], index: 2, kind: input, shape index: {}]
  %s3 = inlined_call_operand.hbm [shape: f32[2,32,32], index: 3, kind: input, shape index: {}]
  %s4 = inlined_call_operand.vmem [shape: f32[1,64], index: 4, kind: input, shape index: {}]
  %s5 = inlined_call_operand.vmem [shape: f32[5,8], index: 5, kind: input, shape index: {}]
  %s6 = inlined_call_operand.hbm [shape: f32[32,64], index: 6, kind: output, shape index: {}]
  %s7 = sld [smem:[#allocation0]]
  $region54: #{tpu_custom_call.1} parent=0
    _
  %s9 = ssub.s32 1, %s7
  %s10 = scalar_select 0, %s9, %s7
  $region1: #{tpu_custom_call.1} parent=0
    #allocation2 [shape = 'u8[16384]{0}', space=vmem, size = 0x4000, scoped, tag = 'input window, operand 0, single buffered']
    #allocation3 [shape = 's32[1]{0}', space=sflag, size = 0x4, scoped, tag = 'scoped memory for tpu_custom_call.1']
    #allocation4 [shape = 's32[1]{0}', space=sflag, size = 0x4, scoped, tag = 'scoped memory for tpu_custom_call.1']
    #allocation5 [shape = 's32[1]{0}', space=sflag, size = 0x4, scoped, tag = 'scoped memory for tpu_custom_call.1']
    #allocation6 [shape = 'u8[131072]{0}', space=vmem, size = 0x20000, scoped, tag = 'input window, operand 1, single buffered']
    #allocation7 [shape = 's32[1]{0}', space=sflag, size = 0x4, scoped, tag = 'scoped memory for tpu_custom_call.1']
    #allocation8 [shape = 'u8[98304]{0}', space=vmem, size = 0x18000, scoped, tag = 'input window, operand 2, single buffered']
    #allocation9 [shape = 'u8[32768]{0}', space=vmem, size = 0x8000, scoped, tag = 'input window, operand 3, single buffered']
    #allocation10 [shape = 's32[1]{0}', space=sflag, size = 0x4, scoped, tag = 'scoped memory for tpu_custom_call.1']
    #allocation11 [shape = 'u8[4096]{0}', space=smem, size = 0x1000, scoped, tag = 'input window, operand 5, single buffered']
    #allocation12 [shape = 'u8[16384]{0}', space=vmem, size = 0x4000, scoped, tag = 'output window, operand 0, single buffered']
    %11 = vsyncpa [#allocation3], 0
    %12 = vsyncpa [#allocation7], 0
    %13 = vsyncpa [#allocation10], 0
    %14 = vsyncpa [#allocation5], 0
    %15 = vsyncpa [#allocation4], 0
    // Predicated region
    $region2: #{tpu_custom_call.1} parent=1 // pred_check
      _
    $region3: #{tpu_custom_call.1} parent=1 // pred_check_branch
      %17 = sbr.rel (0) target = $region5
    $region4: #{tpu_custom_call.1} parent=1 // pred_region
      %s19 = ssub.s32 512, 512
      %20 = vsyncadd [#allocation3], %s19
      %s21 = sshll.u32 [#allocation2], 4
      %s22 = int_to_ptr.vmem [resolvable:$true] %s21
      %27 = dma.hbm_to_vmem [thread:$0]  %s0, 512, %s22, [#allocation3], 128, 128, 8
    $region5: #{tpu_custom_call.1} parent=1 // pred_fallthru
      _
    // Predicated region
    $region6: #{tpu_custom_call.1} parent=1 // pred_check
      _
    $region7: #{tpu_custom_call.1} parent=1 // pred_check_branch
      %29 = sbr.rel (0) target = $region9
    $region8: #{tpu_custom_call.1} parent=1 // pred_region
      %s31 = ssub.s32 4096, 4096
      %32 = vsyncadd [#allocation7], %s31
      %s33 = sshll.u32 [#allocation6], 4
      %s34 = int_to_ptr.vmem [resolvable:$true] %s33
      %39 = dma.hbm_to_vmem [thread:$0]  %s1, 4096, %s34, [#allocation7], 128, 128, 8
    $region9: #{tpu_custom_call.1} parent=1 // pred_fallthru
      _
    // Predicated region
    $region10: #{tpu_custom_call.1} parent=1 // pred_check
      _
    $region11: #{tpu_custom_call.1} parent=1 // pred_check_branch
      %41 = sbr.rel (0) target = $region13
    $region12: #{tpu_custom_call.1} parent=1 // pred_region
      %s43 = ssub.s32 3072, 3072
      %44 = vsyncadd [#allocation7], %s43
      %s45 = sshll.u32 [#allocation8], 4
      %s46 = int_to_ptr.vmem [resolvable:$true] %s45
      %51 = dma.hbm_to_vmem [thread:$0]  %s2, 3072, %s46, [#allocation7], 128, 128, 8
    $region13: #{tpu_custom_call.1} parent=1 // pred_fallthru
      _
    // Predicated region
    $region14: #{tpu_custom_call.1} parent=1 // pred_check
      _
    $region15: #{tpu_custom_call.1} parent=1 // pred_check_branch
      %53 = sbr.rel (0) target = $region17
    $region16: #{tpu_custom_call.1} parent=1 // pred_region
      %s55 = ssub.s32 1024, 1024
      %56 = vsyncadd [#allocation10], %s55
      %s57 = sshll.u32 [#allocation9], 4
      %s58 = int_to_ptr.vmem [resolvable:$true] %s57
      %63 = dma.hbm_to_vmem [thread:$0]  %s3, 1024, %s58, [#allocation10], 128, 128, 8
    $region17: #{tpu_custom_call.1} parent=1 // pred_fallthru
      _
    // Predicated region
    $region18: #{tpu_custom_call.1} parent=1 // pred_check
      _
    $region19: #{tpu_custom_call.1} parent=1 // pred_check_branch
      %65 = sbr.rel (0) target = $region21
    $region20: #{tpu_custom_call.1} parent=1 // pred_region
      _
    $region21: #{tpu_custom_call.1} parent=1 // pred_fallthru
      _
    // Predicated region
    $region22: #{tpu_custom_call.1} parent=1 // pred_check
      _
    $region23: #{tpu_custom_call.1} parent=1 // pred_check_branch
      %67 = sbr.rel (0) target = $region25
    $region24: #{tpu_custom_call.1} parent=1 // pred_region
      %s69 = ssub.s32 128, 128
      %70 = vsyncadd [#allocation5], %s69
      %s72 = sshll.u32 %s5, 4
      %s73 = int_to_ptr.vmem [resolvable:$true] %s72
      %75 = dma.vmem_to_smem %s73, 128, [#allocation11], [#allocation5]
    $region25: #{tpu_custom_call.1} parent=1 // pred_fallthru
      _
    // Predicated region
    $region26: #{tpu_custom_call.1} parent=1 // pred_check
      _
    $region27: #{tpu_custom_call.1} parent=1 // pred_check_branch
      %77 = sbr.rel (0) target = $region29
    $region28: #{tpu_custom_call.1} parent=1 // pred_region
      %78 = dma.done [#allocation3], 512
    $region29: #{tpu_custom_call.1} parent=1 // pred_fallthru
      _
    // Predicated region
    $region30: #{tpu_custom_call.1} parent=1 // pred_check
      _
    $region31: #{tpu_custom_call.1} parent=1 // pred_check_branch
      %80 = sbr.rel (0) target = $region33
    $region32: #{tpu_custom_call.1} parent=1 // pred_region
      %81 = dma.done [#allocation7], 4096
    $region33: #{tpu_custom_call.1} parent=1 // pred_fallthru
      _
    // Predicated region
    $region34: #{tpu_custom_call.1} parent=1 // pred_check
      _
    $region35: #{tpu_custom_call.1} parent=1 // pred_check_branch
      %83 = sbr.rel (0) target = $region37
    $region36: #{tpu_custom_call.1} parent=1 // pred_region
      %84 = dma.done [#allocation7], 3072
    $region37: #{tpu_custom_call.1} parent=1 // pred_fallthru
      _
    // Predicated region
    $region38: #{tpu_custom_call.1} parent=1 // pred_check
      _
    $region39: #{tpu_custom_call.1} parent=1 // pred_check_branch
      %86 = sbr.rel (0) target = $region41
    $region40: #{tpu_custom_call.1} parent=1 // pred_region
      %87 = dma.done [#allocation10], 1024
    $region41: #{tpu_custom_call.1} parent=1 // pred_fallthru
      _
    // Predicated region
    $region42: #{tpu_custom_call.1} parent=1 // pred_check
      _
    $region43: #{tpu_custom_call.1} parent=1 // pred_check_branch
      %89 = sbr.rel (0) target = $region45
    $region44: #{tpu_custom_call.1} parent=1 // pred_region
      %90 = dma.done [#allocation5], 128
    $region45: #{tpu_custom_call.1} parent=1 // pred_fallthru
      _
    %91 = sfence
    %v92 = vld [vmem:[#allocation8] sm:$0xff]
    %v93 = vld [vmem:[#allocation8 + $0x8] sm:$0xff]
    %v94 = vld [vmem:[#allocation8 + $0x10] sm:$0xff]
    %v95 = vld [vmem:[#allocation8 + $0x18] sm:$0xff]
    %v96 = vld [vmem:[#allocation8 + $0x20] sm:$0xff]
    %v97 = vld [vmem:[#allocation8 + $0x28] sm:$0xff]
    %v98 = vld [vmem:[#allocation8 + $0x30] sm:$0xff]
    %v99 = vld [vmem:[#allocation8 + $0x38] sm:$0xff]
    %s100 = scalar_lea.vmem [#allocation8], 64
    %v101 = vld [vmem:[%s100] sm:$0xff]
    %v102 = vld [vmem:[%s100 + $0x8] sm:$0xff]
    %v103 = vld [vmem:[%s100 + $0x10] sm:$0xff]
    %v104 = vld [vmem:[%s100 + $0x18] sm:$0xff]
    %v105 = vld [vmem:[%s100 + $0x20] sm:$0xff]
    %v106 = vld [vmem:[%s100 + $0x28] sm:$0xff]
    %v107 = vld [vmem:[%s100 + $0x30] sm:$0xff]
    %v108 = vld [vmem:[%s100 + $0x38] sm:$0xff]
    %s109 = scalar_lea.vmem [#allocation8], 128
    %v110 = vld [vmem:[%s109] sm:$0xff]
    %v111 = vld [vmem:[%s109 + $0x8] sm:$0xff]
    %v112 = vld [vmem:[%s109 + $0x10] sm:$0xff]
    %v113 = vld [vmem:[%s109 + $0x18] sm:$0xff]
    %v114 = vld [vmem:[%s109 + $0x20] sm:$0xff]
    %v115 = vld [vmem:[%s109 + $0x28] sm:$0xff]
    %v116 = vld [vmem:[%s109 + $0x30] sm:$0xff]
    %v117 = vld [vmem:[%s109 + $0x38] sm:$0xff]
    %v118 = vld [vmem:[#allocation9] sm:$0xff]
    %v119 = vld [vmem:[#allocation9 + $0x8] sm:$0xff]
    %v120 = vld [vmem:[#allocation9 + $0x10] sm:$0xff]
    %v121 = vld [vmem:[#allocation9 + $0x18] sm:$0xff]
    %s122 = scalar_lea.vmem [#allocation9], 32
    %v123 = vld [vmem:[%s122] sm:$0xff]
    %v124 = vld [vmem:[%s122 + $0x8] sm:$0xff]
    %v125 = vld [vmem:[%s122 + $0x10] sm:$0xff]
    %v126 = vld [vmem:[%s122 + $0x18] sm:$0xff]
    %v127 = vld [vmem:[%s4] sm:$0x1]
    %v129 = vlaneseq
    %v130 = vshrl.u32 %v129, 7
    %v131 = vsub.s32 0, %v130
    %v132 = vrot.slane %v127, %v131
    %v134 = vld [vmem:[#allocation2] sm:$0xff]
    %v135 = vld [vmem:[#allocation2 + $0x8] sm:$0xff]
    %v136 = vld [vmem:[#allocation2 + $0x10] sm:$0xff]
    %v137 = vld [vmem:[#allocation2 + $0x18] sm:$0xff]
    %vm138 = vcmask 261120
    %v140 = vsel %vm138, %v118, 0
    %v143 = vsel %vm138, %v119, 0
    %v146 = vsel %vm138, %v120, 0
    %v149 = vsel %vm138, %v121, 0
    %151 = vmatprep.subr.mxu0 0.0
    %152 = vmatpush1.msra.mxu0 0.0
    %153 = vmatprep.subr.mxu0 0.0
    %154 = vmatpush1.msra.mxu0 0.0
    %155 = vmatprep.subr.mxu0 0.0
    %156 = vmatpush1.msra.mxu0 0.0
    %157 = vmatprep.subr.mxu0 0.0
    %158 = vmatpush1.msra.mxu0 0.0
    %159 = vmatprep.subr.mxu0 0.0
    %160 = vmatpush1.msra.mxu0 0.0
    %161 = vmatprep.subr.mxu0 0.0
    %162 = vmatpush1.msra.mxu0 0.0
    %163 = vmatprep.subr.mxu0 0.0
    %164 = vmatpush1.msra.mxu0 0.0
    %165 = vmatprep.subr.mxu0 0.0
    %166 = vmatpush1.msra.mxu0 0.0
    %167 = vmatprep.subr.mxu0 0.0
    %168 = vmatpush1.msra.mxu0 0.0
    %169 = vmatprep.subr.mxu0 0.0
    %170 = vmatpush1.msra.mxu0 0.0
    %171 = vmatprep.subr.mxu0 0.0
    %172 = vmatpush1.msra.mxu0 0.0
    %173 = vmatprep.subr.mxu0 0.0
    %174 = vmatpush1.msra.mxu0 0.0
    %175 = vmatprep.subr.mxu0 0.0
    %176 = vmatpush1.msra.mxu0 %v137
    %177 = vmatprep.subr.mxu0 0.0
    %178 = vmatpush1.msra.mxu0 %v136
    %179 = vmatprep.subr.mxu0 0.0
    %180 = vmatpush1.msra.mxu0 %v135
    %181 = vmatprep.subr.mxu0 0.0
    %182 = vmatpush1.msra.mxu0 %v134
    %183 = vmatprep.subr.mxu0 0.0
    %184 = vmatpush2.msra.mxu0 0.0
    %185 = vmatprep.subr.mxu0 0.0
    %186 = vmatpush2.msra.mxu0 0.0
    %187 = vmatprep.subr.mxu0 0.0
    %188 = vmatpush2.msra.mxu0 0.0
    %189 = vmatprep.subr.mxu0 0.0
    %190 = vmatpush2.msra.mxu0 0.0
    %191 = vmatprep.subr.mxu0 0.0
    %192 = vmatpush2.msra.mxu0 0.0
    %193 = vmatprep.subr.mxu0 0.0
    %194 = vmatpush2.msra.mxu0 0.0
    %195 = vmatprep.subr.mxu0 0.0
    %196 = vmatpush2.msra.mxu0 0.0
    %197 = vmatprep.subr.mxu0 0.0
    %198 = vmatpush2.msra.mxu0 0.0
    %199 = vmatprep.subr.mxu0 0.0
    %200 = vmatpush2.msra.mxu0 0.0
    %201 = vmatprep.subr.mxu0 0.0
    %202 = vmatpush2.msra.mxu0 0.0
    %203 = vmatprep.subr.mxu0 0.0
    %204 = vmatpush2.msra.mxu0 0.0
    %205 = vmatprep.subr.mxu0 0.0
    %206 = vmatpush2.msra.mxu0 0.0
    %207 = vmatprep.subr.mxu0 0.0
    %208 = vmatpush2.msra.mxu0 0.0
    %209 = vmatprep.subr.mxu0 0.0
    %210 = vmatpush2.msra.mxu0 0.0
    %211 = vmatprep.subr.mxu0 0.0
    %212 = vmatpush2.msra.mxu0 0.0
    %213 = vmatprep.subr.mxu0 0.0
    %214 = vmatpush2.msra.mxu0 0.0
    %215 = vmatprep.mubr.f32.mxu0 0.0
    %216 = vmatmul.mubr.f32.gmra.mxu0 %v140
    %v217 = vpop.f32.mrf.mxu0
    %v218 = vadd.f32 0.0, %v217
    %v219 = vpop.f32.mrf.mxu0
    %220 = vmatprep.mubr.f32.mxu0 0.0
    %221 = vmatmul.mubr.f32.gmra.mxu0 %v143
    %v222 = vpop.f32.mrf.mxu0
    %v223 = vadd.f32 0.0, %v222
    %v224 = vpop.f32.mrf.mxu0
    %225 = vmatprep.mubr.f32.mxu0 0.0
    %226 = vmatmul.mubr.f32.gmra.mxu0 %v146
    %v227 = vpop.f32.mrf.mxu0
    %v228 = vadd.f32 0.0, %v227
    %v229 = vpop.f32.mrf.mxu0
    %230 = vmatprep.mubr.f32.mxu0 0.0
    %231 = vmatmul.mubr.f32.gmra.mxu0 %v149
    %v232 = vpop.f32.mrf.mxu0
    %v233 = vadd.f32 0.0, %v232
    %v234 = vpop.f32.mrf.mxu0
    %235 = vdwg.mxu0
    %v237 = vsel %vm138, %v123, 0
    %v240 = vsel %vm138, %v124, 0
    %v243 = vsel %vm138, %v125, 0
    %v246 = vsel %vm138, %v126, 0
    %248 = vmatprep.subr.mxu0 0.0
    %249 = vmatpush1.msra.mxu0 0.0
    %250 = vmatprep.subr.mxu0 0.0
    %251 = vmatpush1.msra.mxu0 0.0
    %252 = vmatprep.subr.mxu0 0.0
    %253 = vmatpush1.msra.mxu0 0.0
    %254 = vmatprep.subr.mxu0 0.0
    %255 = vmatpush1.msra.mxu0 0.0
    %256 = vmatprep.subr.mxu0 0.0
    %257 = vmatpush1.msra.mxu0 0.0
    %258 = vmatprep.subr.mxu0 0.0
    %259 = vmatpush1.msra.mxu0 0.0
    %260 = vmatprep.subr.mxu0 0.0
    %261 = vmatpush1.msra.mxu0 0.0
    %262 = vmatprep.subr.mxu0 0.0
    %263 = vmatpush1.msra.mxu0 0.0
    %264 = vmatprep.subr.mxu0 0.0
    %265 = vmatpush1.msra.mxu0 0.0
    %266 = vmatprep.subr.mxu0 0.0
    %267 = vmatpush1.msra.mxu0 0.0
    %268 = vmatprep.subr.mxu0 0.0
    %269 = vmatpush1.msra.mxu0 0.0
    %270 = vmatprep.subr.mxu0 0.0
    %271 = vmatpush1.msra.mxu0 0.0
    %272 = vmatprep.subr.mxu0 0.0
    %273 = vmatpush1.msra.mxu0 %v137
    %274 = vmatprep.subr.mxu0 0.0
    %275 = vmatpush1.msra.mxu0 %v136
    %276 = vmatprep.subr.mxu0 0.0
    %277 = vmatpush1.msra.mxu0 %v135
    %278 = vmatprep.subr.mxu0 0.0
    %279 = vmatpush1.msra.mxu0 %v134
    %280 = vmatprep.subr.mxu0 0.0
    %281 = vmatpush2.msra.mxu0 0.0
    %282 = vmatprep.subr.mxu0 0.0
    %283 = vmatpush2.msra.mxu0 0.0
    %284 = vmatprep.subr.mxu0 0.0
    %285 = vmatpush2.msra.mxu0 0.0
    %286 = vmatprep.subr.mxu0 0.0
    %287 = vmatpush2.msra.mxu0 0.0
    %288 = vmatprep.subr.mxu0 0.0
    %289 = vmatpush2.msra.mxu0 0.0
    %290 = vmatprep.subr.mxu0 0.0
    %291 = vmatpush2.msra.mxu0 0.0
    %292 = vmatprep.subr.mxu0 0.0
    %293 = vmatpush2.msra.mxu0 0.0
    %294 = vmatprep.subr.mxu0 0.0
    %295 = vmatpush2.msra.mxu0 0.0
    %296 = vmatprep.subr.mxu0 0.0
    %297 = vmatpush2.msra.mxu0 0.0
    %298 = vmatprep.subr.mxu0 0.0
    %299 = vmatpush2.msra.mxu0 0.0
    %300 = vmatprep.subr.mxu0 0.0
    %301 = vmatpush2.msra.mxu0 0.0
    %302 = vmatprep.subr.mxu0 0.0
    %303 = vmatpush2.msra.mxu0 0.0
    %304 = vmatprep.subr.mxu0 0.0
    %305 = vmatpush2.msra.mxu0 0.0
    %306 = vmatprep.subr.mxu0 0.0
    %307 = vmatpush2.msra.mxu0 0.0
    %308 = vmatprep.subr.mxu0 0.0
    %309 = vmatpush2.msra.mxu0 0.0
    %310 = vmatprep.subr.mxu0 0.0
    %311 = vmatpush2.msra.mxu0 0.0
    %312 = vmatprep.mubr.f32.mxu0 0.0
    %313 = vmatmul.mubr.f32.gmra.mxu0 %v237
    %v314 = vpop.f32.mrf.mxu0
    %v315 = vadd.f32 0.0, %v314
    %v316 = vpop.f32.mrf.mxu0
    %317 = vmatprep.mubr.f32.mxu0 0.0
    %318 = vmatmul.mubr.f32.gmra.mxu0 %v240
    %v319 = vpop.f32.mrf.mxu0
    %v320 = vadd.f32 0.0, %v319
    %v321 = vpop.f32.mrf.mxu0
    %322 = vmatprep.mubr.f32.mxu0 0.0
    %323 = vmatmul.mubr.f32.gmra.mxu0 %v243
    %v324 = vpop.f32.mrf.mxu0
    %v325 = vadd.f32 0.0, %v324
    %v326 = vpop.f32.mrf.mxu0
    %327 = vmatprep.mubr.f32.mxu0 0.0
    %328 = vmatmul.mubr.f32.gmra.mxu0 %v246
    %v329 = vpop.f32.mrf.mxu0
    %v330 = vadd.f32 0.0, %v329
    %v331 = vpop.f32.mrf.mxu0
    %332 = vdwg.mxu0
    %vm333 = vcmask 523264
    %v335 = vsel %vm333, %v134, 0
    %v338 = vsel %vm333, %v135, 0
    %v341 = vsel %vm333, %v136, 0
    %v344 = vsel %vm333, %v137, 0
    %346 = vmatprep.subr.mxu0 0.0
    %347 = vmatpush1.msra.mxu0 0.0
    %348 = vmatprep.subr.mxu0 0.0
    %349 = vmatpush1.msra.mxu0 0.0
    %350 = vmatprep.subr.mxu0 0.0
    %351 = vmatpush1.msra.mxu0 0.0
    %352 = vmatprep.subr.mxu0 0.0
    %353 = vmatpush1.msra.mxu0 0.0
    %354 = vmatprep.subr.mxu0 0.0
    %355 = vmatpush1.msra.mxu0 0.0
    %356 = vmatprep.subr.mxu0 0.0
    %357 = vmatpush1.msra.mxu0 0.0
    %358 = vmatprep.subr.mxu0 0.0
    %359 = vmatpush1.msra.mxu0 0.0
    %360 = vmatprep.subr.mxu0 0.0
    %361 = vmatpush1.msra.mxu0 0.0
    %362 = vmatprep.subr.mxu0 0.0
    %363 = vmatpush1.msra.mxu0 %v108
    %364 = vmatprep.subr.mxu0 0.0
    %365 = vmatpush1.msra.mxu0 %v107
    %366 = vmatprep.subr.mxu0 0.0
    %367 = vmatpush1.msra.mxu0 %v106
    %368 = vmatprep.subr.mxu0 0.0
    %369 = vmatpush1.msra.mxu0 %v105
    %370 = vmatprep.subr.mxu0 0.0
    %371 = vmatpush1.msra.mxu0 %v104
    %372 = vmatprep.subr.mxu0 0.0
    %373 = vmatpush1.msra.mxu0 %v103
    %374 = vmatprep.subr.mxu0 0.0
    %375 = vmatpush1.msra.mxu0 %v102
    %376 = vmatprep.subr.mxu0 0.0
    %377 = vmatpush1.msra.mxu0 %v101
    %378 = vmatprep.subr.mxu0 0.0
    %379 = vmatpush2.msra.mxu0 0.0
    %380 = vmatprep.subr.mxu0 0.0
    %381 = vmatpush2.msra.mxu0 0.0
    %382 = vmatprep.subr.mxu0 0.0
    %383 = vmatpush2.msra.mxu0 0.0
    %384 = vmatprep.subr.mxu0 0.0
    %385 = vmatpush2.msra.mxu0 0.0
    %386 = vmatprep.subr.mxu0 0.0
    %387 = vmatpush2.msra.mxu0 0.0
    %388 = vmatprep.subr.mxu0 0.0
    %389 = vmatpush2.msra.mxu0 0.0
    %390 = vmatprep.subr.mxu0 0.0
    %391 = vmatpush2.msra.mxu0 0.0
    %392 = vmatprep.subr.mxu0 0.0
    %393 = vmatpush2.msra.mxu0 0.0
    %394 = vmatprep.subr.mxu0 0.0
    %395 = vmatpush2.msra.mxu0 0.0
    %396 = vmatprep.subr.mxu0 0.0
    %397 = vmatpush2.msra.mxu0 0.0
    %398 = vmatprep.subr.mxu0 0.0
    %399 = vmatpush2.msra.mxu0 0.0
    %400 = vmatprep.subr.mxu0 0.0
    %401 = vmatpush2.msra.mxu0 0.0
    %402 = vmatprep.subr.mxu0 0.0
    %403 = vmatpush2.msra.mxu0 0.0
    %404 = vmatprep.subr.mxu0 0.0
    %405 = vmatpush2.msra.mxu0 0.0
    %406 = vmatprep.subr.mxu0 0.0
    %407 = vmatpush2.msra.mxu0 0.0
    %408 = vmatprep.subr.mxu0 0.0
    %409 = vmatpush2.msra.mxu0 0.0
    %410 = vmatprep.mubr.f32.mxu0 0.0
    %411 = vmatmul.mubr.f32.gmra.mxu0 %v335
    %v412 = vpop.f32.mrf.mxu0
    %v413 = vadd.f32 0.0, %v412
    %v414 = vpop.f32.mrf.mxu0
    %415 = vmatprep.mubr.f32.mxu0 0.0
    %416 = vmatmul.mubr.f32.gmra.mxu0 %v338
    %v417 = vpop.f32.mrf.mxu0
    %v418 = vadd.f32 0.0, %v417
    %v419 = vpop.f32.mrf.mxu0
    %420 = vmatprep.mubr.f32.mxu0 0.0
    %421 = vmatmul.mubr.f32.gmra.mxu0 %v341
    %v422 = vpop.f32.mrf.mxu0
    %v423 = vadd.f32 0.0, %v422
    %v424 = vpop.f32.mrf.mxu0
    %425 = vmatprep.mubr.f32.mxu0 0.0
    %426 = vmatmul.mubr.f32.gmra.mxu0 %v344
    %v427 = vpop.f32.mrf.mxu0
    %v428 = vadd.f32 0.0, %v427
    %v429 = vpop.f32.mrf.mxu0
    %430 = vdwg.mxu0
    %v432 = vsel %vm333, %v218, 0
    %v435 = vsel %vm333, %v223, 0
    %v438 = vsel %vm333, %v228, 0
    %v441 = vsel %vm333, %v233, 0
    %443 = vmatprep.subr.mxu0 0.0
    %444 = vmatpush1.msra.mxu0 0.0
    %445 = vmatprep.subr.mxu0 0.0
    %446 = vmatpush1.msra.mxu0 0.0
    %447 = vmatprep.subr.mxu0 0.0
    %448 = vmatpush1.msra.mxu0 0.0
    %449 = vmatprep.subr.mxu0 0.0
    %450 = vmatpush1.msra.mxu0 0.0
    %451 = vmatprep.subr.mxu0 0.0
    %452 = vmatpush1.msra.mxu0 0.0
    %453 = vmatprep.subr.mxu0 0.0
    %454 = vmatpush1.msra.mxu0 0.0
    %455 = vmatprep.subr.mxu0 0.0
    %456 = vmatpush1.msra.mxu0 0.0
    %457 = vmatprep.subr.mxu0 0.0
    %458 = vmatpush1.msra.mxu0 0.0
    %459 = vmatprep.subr.mxu0 0.0
    %460 = vmatpush1.msra.mxu0 %v99
    %461 = vmatprep.subr.mxu0 0.0
    %462 = vmatpush1.msra.mxu0 %v98
    %463 = vmatprep.subr.mxu0 0.0
    %464 = vmatpush1.msra.mxu0 %v97
    %465 = vmatprep.subr.mxu0 0.0
    %466 = vmatpush1.msra.mxu0 %v96
    %467 = vmatprep.subr.mxu0 0.0
    %468 = vmatpush1.msra.mxu0 %v95
    %469 = vmatprep.subr.mxu0 0.0
    %470 = vmatpush1.msra.mxu0 %v94
    %471 = vmatprep.subr.mxu0 0.0
    %472 = vmatpush1.msra.mxu0 %v93
    %473 = vmatprep.subr.mxu0 0.0
    %474 = vmatpush1.msra.mxu0 %v92
    %475 = vmatprep.subr.mxu0 0.0
    %476 = vmatpush2.msra.mxu0 0.0
    %477 = vmatprep.subr.mxu0 0.0
    %478 = vmatpush2.msra.mxu0 0.0
    %479 = vmatprep.subr.mxu0 0.0
    %480 = vmatpush2.msra.mxu0 0.0
    %481 = vmatprep.subr.mxu0 0.0
    %482 = vmatpush2.msra.mxu0 0.0
    %483 = vmatprep.subr.mxu0 0.0
    %484 = vmatpush2.msra.mxu0 0.0
    %485 = vmatprep.subr.mxu0 0.0
    %486 = vmatpush2.msra.mxu0 0.0
    %487 = vmatprep.subr.mxu0 0.0
    %488 = vmatpush2.msra.mxu0 0.0
    %489 = vmatprep.subr.mxu0 0.0
    %490 = vmatpush2.msra.mxu0 0.0
    %491 = vmatprep.subr.mxu0 0.0
    %492 = vmatpush2.msra.mxu0 0.0
    %493 = vmatprep.subr.mxu0 0.0
    %494 = vmatpush2.msra.mxu0 0.0
    %495 = vmatprep.subr.mxu0 0.0
    %496 = vmatpush2.msra.mxu0 0.0
    %497 = vmatprep.subr.mxu0 0.0
    %498 = vmatpush2.msra.mxu0 0.0
    %499 = vmatprep.subr.mxu0 0.0
    %500 = vmatpush2.msra.mxu0 0.0
    %501 = vmatprep.subr.mxu0 0.0
    %502 = vmatpush2.msra.mxu0 0.0
    %503 = vmatprep.subr.mxu0 0.0
    %504 = vmatpush2.msra.mxu0 0.0
    %505 = vmatprep.subr.mxu0 0.0
    %506 = vmatpush2.msra.mxu0 0.0
    %507 = vmatprep.mubr.f32.mxu0 0.0
    %508 = vmatmul.mubr.f32.gmra.mxu0 %v432
    %v509 = vpop.f32.mrf.mxu0
    %v510 = vadd.f32 %v413, %v509
    %v511 = vpop.f32.mrf.mxu0
    %512 = vmatprep.mubr.f32.mxu0 0.0
    %513 = vmatmul.mubr.f32.gmra.mxu0 %v435
    %v514 = vpop.f32.mrf.mxu0
    %v515 = vadd.f32 %v418, %v514
    %v516 = vpop.f32.mrf.mxu0
    %517 = vmatprep.mubr.f32.mxu0 0.0
    %518 = vmatmul.mubr.f32.gmra.mxu0 %v438
    %v519 = vpop.f32.mrf.mxu0
    %v520 = vadd.f32 %v423, %v519
    %v521 = vpop.f32.mrf.mxu0
    %522 = vmatprep.mubr.f32.mxu0 0.0
    %523 = vmatmul.mubr.f32.gmra.mxu0 %v441
    %v524 = vpop.f32.mrf.mxu0
    %v525 = vadd.f32 %v428, %v524
    %v526 = vpop.f32.mrf.mxu0
    %527 = vdwg.mxu0
    %v529 = vsel %vm333, %v315, 0
    %v532 = vsel %vm333, %v320, 0
    %v535 = vsel %vm333, %v325, 0
    %v538 = vsel %vm333, %v330, 0
    %540 = vmatprep.subr.mxu0 0.0
    %541 = vmatpush1.msra.mxu0 0.0
    %542 = vmatprep.subr.mxu0 0.0
    %543 = vmatpush1.msra.mxu0 0.0
    %544 = vmatprep.subr.mxu0 0.0
    %545 = vmatpush1.msra.mxu0 0.0
    %546 = vmatprep.subr.mxu0 0.0
    %547 = vmatpush1.msra.mxu0 0.0
    %548 = vmatprep.subr.mxu0 0.0
    %549 = vmatpush1.msra.mxu0 0.0
    %550 = vmatprep.subr.mxu0 0.0
    %551 = vmatpush1.msra.mxu0 0.0
    %552 = vmatprep.subr.mxu0 0.0
    %553 = vmatpush1.msra.mxu0 0.0
    %554 = vmatprep.subr.mxu0 0.0
    %555 = vmatpush1.msra.mxu0 0.0
    %556 = vmatprep.subr.mxu0 0.0
    %557 = vmatpush1.msra.mxu0 %v117
    %558 = vmatprep.subr.mxu0 0.0
    %559 = vmatpush1.msra.mxu0 %v116
    %560 = vmatprep.subr.mxu0 0.0
    %561 = vmatpush1.msra.mxu0 %v115
    %562 = vmatprep.subr.mxu0 0.0
    %563 = vmatpush1.msra.mxu0 %v114
    %564 = vmatprep.subr.mxu0 0.0
    %565 = vmatpush1.msra.mxu0 %v113
    %566 = vmatprep.subr.mxu0 0.0
    %567 = vmatpush1.msra.mxu0 %v112
    %568 = vmatprep.subr.mxu0 0.0
    %569 = vmatpush1.msra.mxu0 %v111
    %570 = vmatprep.subr.mxu0 0.0
    %571 = vmatpush1.msra.mxu0 %v110
    %572 = vmatprep.subr.mxu0 0.0
    %573 = vmatpush2.msra.mxu0 0.0
    %574 = vmatprep.subr.mxu0 0.0
    %575 = vmatpush2.msra.mxu0 0.0
    %576 = vmatprep.subr.mxu0 0.0
    %577 = vmatpush2.msra.mxu0 0.0
    %578 = vmatprep.subr.mxu0 0.0
    %579 = vmatpush2.msra.mxu0 0.0
    %580 = vmatprep.subr.mxu0 0.0
    %581 = vmatpush2.msra.mxu0 0.0
    %582 = vmatprep.subr.mxu0 0.0
    %583 = vmatpush2.msra.mxu0 0.0
    %584 = vmatprep.subr.mxu0 0.0
    %585 = vmatpush2.msra.mxu0 0.0
    %586 = vmatprep.subr.mxu0 0.0
    %587 = vmatpush2.msra.mxu0 0.0
    %588 = vmatprep.subr.mxu0 0.0
    %589 = vmatpush2.msra.mxu0 0.0
    %590 = vmatprep.subr.mxu0 0.0
    %591 = vmatpush2.msra.mxu0 0.0
    %592 = vmatprep.subr.mxu0 0.0
    %593 = vmatpush2.msra.mxu0 0.0
    %594 = vmatprep.subr.mxu0 0.0
    %595 = vmatpush2.msra.mxu0 0.0
    %596 = vmatprep.subr.mxu0 0.0
    %597 = vmatpush2.msra.mxu0 0.0
    %598 = vmatprep.subr.mxu0 0.0
    %599 = vmatpush2.msra.mxu0 0.0
    %600 = vmatprep.subr.mxu0 0.0
    %601 = vmatpush2.msra.mxu0 0.0
    %602 = vmatprep.subr.mxu0 0.0
    %603 = vmatpush2.msra.mxu0 0.0
    %604 = vmatprep.mubr.f32.mxu0 0.0
    %605 = vmatmul.mubr.f32.gmra.mxu0 %v529
    %v606 = vpop.f32.mrf.mxu0
    %v607 = vadd.f32 0.0, %v606
    %v608 = vpop.f32.mrf.mxu0
    %609 = vmatprep.mubr.f32.mxu0 0.0
    %610 = vmatmul.mubr.f32.gmra.mxu0 %v532
    %v611 = vpop.f32.mrf.mxu0
    %v612 = vadd.f32 0.0, %v611
    %v613 = vpop.f32.mrf.mxu0
    %614 = vmatprep.mubr.f32.mxu0 0.0
    %615 = vmatmul.mubr.f32.gmra.mxu0 %v535
    %v616 = vpop.f32.mrf.mxu0
    %v617 = vadd.f32 0.0, %v616
    %v618 = vpop.f32.mrf.mxu0
    %619 = vmatprep.mubr.f32.mxu0 0.0
    %620 = vmatmul.mubr.f32.gmra.mxu0 %v538
    %v621 = vpop.f32.mrf.mxu0
    %v622 = vadd.f32 0.0, %v621
    %v623 = vpop.f32.mrf.mxu0
    %624 = vdwg.mxu0
    %v625 = vadd.f32 %v510, %v607
    %v626 = vadd.f32 %v515, %v612
    %v627 = vadd.f32 %v520, %v617
    %v628 = vadd.f32 %v525, %v622
    %v629 = vadd.f32 %v625, %v132
    %v630 = vadd.f32 %v626, %v132
    %v631 = vadd.f32 %v627, %v132
    %v632 = vadd.f32 %v628, %v132
    %s633 = sld [smem:[#allocation11]]
    %s634 = sld [smem:[#allocation11 + $0x80]]
    %s635 = sld [smem:[#allocation11 + $0x100]]
    %s636 = sld [smem:[#allocation11 + $0x180]]
    %s637 = sld [smem:[#allocation11 + $0x200]]
    %v638 = vstv %s633
    %v639 = vmul.f32 %v638, %v134
    %v640 = vmul.f32 %v638, %v135
    %v641 = vmul.f32 %v638, %v136
    %v642 = vmul.f32 %v638, %v137
    %v643 = vstv %s634
    %v644 = vmul.f32 %v643, %v629
    %v645 = vmul.f32 %v643, %v630
    %v646 = vmul.f32 %v643, %v631
    %v647 = vmul.f32 %v643, %v632
    %v648 = vsub.f32 %v639, %v644
    %v649 = vsub.f32 %v640, %v645
    %v650 = vsub.f32 %v641, %v646
    %v651 = vsub.f32 %v642, %v647
    %v652 = vmax.f32 %v648, -1.0
    %v653 = vmax.f32 %v649, -1.0
    %v654 = vmax.f32 %v650, -1.0
    %v655 = vmax.f32 %v651, -1.0
    %v656 = vmin.f32 %v652, 1.0
    %v657 = vmin.f32 %v653, 1.0
    %v658 = vmin.f32 %v654, 1.0
    %v659 = vmin.f32 %v655, 1.0
    %v660 = vstv %s635
    %v661 = vmul.f32 %v660, %v656
    %v662 = vmul.f32 %v660, %v657
    %v663 = vmul.f32 %v660, %v658
    %v664 = vmul.f32 %v660, %v659
    %v665 = vstv %s636
    %v666 = vmul.f32 %v665, %v134
    %v667 = vmul.f32 %v665, %v135
    %v668 = vmul.f32 %v665, %v136
    %v669 = vmul.f32 %v665, %v137
    %v670 = vadd.f32 %v661, %v666
    %v671 = vadd.f32 %v662, %v667
    %v672 = vadd.f32 %v663, %v668
    %v673 = vadd.f32 %v664, %v669
    %v674 = vld [vmem:[#allocation6] sm:$0xff]
    %v675 = vld [vmem:[#allocation6 + $0x8] sm:$0xff]
    %v676 = vld [vmem:[#allocation6 + $0x10] sm:$0xff]
    %v677 = vld [vmem:[#allocation6 + $0x18] sm:$0xff]
    %v678 = vstv %s637
    %v679 = vmul.f32 %v678, %v674
    %v680 = vmul.f32 %v678, %v675
    %v681 = vmul.f32 %v678, %v676
    %v682 = vmul.f32 %v678, %v677
    %v683 = vadd.f32 %v670, %v679
    %v684 = vadd.f32 %v671, %v680
    %v685 = vadd.f32 %v672, %v681
    %v686 = vadd.f32 %v673, %v682
    %687 = vmatprep.subr.mxu0 0.0
    %688 = vmatpush1.msra.mxu0 0.0
    %689 = vmatprep.subr.mxu0 0.0
    %690 = vmatpush1.msra.mxu0 0.0
    %691 = vmatprep.subr.mxu0 0.0
    %692 = vmatpush1.msra.mxu0 0.0
    %693 = vmatprep.subr.mxu0 0.0
    %694 = vmatpush1.msra.mxu0 0.0
    %695 = vmatprep.subr.mxu0 0.0
    %696 = vmatpush1.msra.mxu0 0.0
    %697 = vmatprep.subr.mxu0 0.0
    %698 = vmatpush1.msra.mxu0 0.0
    %699 = vmatprep.subr.mxu0 0.0
    %700 = vmatpush1.msra.mxu0 0.0
    %701 = vmatprep.subr.mxu0 0.0
    %702 = vmatpush1.msra.mxu0 0.0
    %703 = vmatprep.subr.mxu0 0.0
    %704 = vmatpush1.msra.mxu0 0.0
    %705 = vmatprep.subr.mxu0 0.0
    %706 = vmatpush1.msra.mxu0 0.0
    %707 = vmatprep.subr.mxu0 0.0
    %708 = vmatpush1.msra.mxu0 0.0
    %709 = vmatprep.subr.mxu0 0.0
    %710 = vmatpush1.msra.mxu0 0.0
    %711 = vmatprep.subr.mxu0 0.0
    %712 = vmatpush1.msra.mxu0 %v686
    %713 = vmatprep.subr.mxu0 0.0
    %714 = vmatpush1.msra.mxu0 %v685
    %715 = vmatprep.subr.mxu0 0.0
    %716 = vmatpush1.msra.mxu0 %v684
    %717 = vmatprep.subr.mxu0 0.0
    %718 = vmatpush1.msra.mxu0 %v683
    %719 = vmatprep.subr.mxu0 0.0
    %720 = vmatpush2.msra.mxu0 0.0
    %721 = vmatprep.subr.mxu0 0.0
    %722 = vmatpush2.msra.mxu0 0.0
    %723 = vmatprep.subr.mxu0 0.0
    %724 = vmatpush2.msra.mxu0 0.0
    %725 = vmatprep.subr.mxu0 0.0
    %726 = vmatpush2.msra.mxu0 0.0
    %727 = vmatprep.subr.mxu0 0.0
    %728 = vmatpush2.msra.mxu0 0.0
    %729 = vmatprep.subr.mxu0 0.0
    %730 = vmatpush2.msra.mxu0 0.0
    %731 = vmatprep.subr.mxu0 0.0
    %732 = vmatpush2.msra.mxu0 0.0
    %733 = vmatprep.subr.mxu0 0.0
    %734 = vmatpush2.msra.mxu0 0.0
    %735 = vmatprep.subr.mxu0 0.0
    %736 = vmatpush2.msra.mxu0 0.0
    %737 = vmatprep.subr.mxu0 0.0
    %738 = vmatpush2.msra.mxu0 0.0
    %739 = vmatprep.subr.mxu0 0.0
    %740 = vmatpush2.msra.mxu0 0.0
    %741 = vmatprep.subr.mxu0 0.0
    %742 = vmatpush2.msra.mxu0 0.0
    %743 = vmatprep.subr.mxu0 0.0
    %744 = vmatpush2.msra.mxu0 0.0
    %745 = vmatprep.subr.mxu0 0.0
    %746 = vmatpush2.msra.mxu0 0.0
    %747 = vmatprep.subr.mxu0 0.0
    %748 = vmatpush2.msra.mxu0 0.0
    %749 = vmatprep.subr.mxu0 0.0
    %750 = vmatpush2.msra.mxu0 0.0
    %751 = vmatprep.mubr.f32.mxu0 0.0
    %752 = vmatmul.mubr.f32.gmra.mxu0 %v140
    %v753 = vpop.f32.mrf.mxu0
    %v754 = vadd.f32 0.0, %v753
    %v755 = vpop.f32.mrf.mxu0
    %756 = vmatprep.mubr.f32.mxu0 0.0
    %757 = vmatmul.mubr.f32.gmra.mxu0 %v143
    %v758 = vpop.f32.mrf.mxu0
    %v759 = vadd.f32 0.0, %v758
    %v760 = vpop.f32.mrf.mxu0
    %761 = vmatprep.mubr.f32.mxu0 0.0
    %762 = vmatmul.mubr.f32.gmra.mxu0 %v146
    %v763 = vpop.f32.mrf.mxu0
    %v764 = vadd.f32 0.0, %v763
    %v765 = vpop.f32.mrf.mxu0
    %766 = vmatprep.mubr.f32.mxu0 0.0
    %767 = vmatmul.mubr.f32.gmra.mxu0 %v149
    %v768 = vpop.f32.mrf.mxu0
    %v769 = vadd.f32 0.0, %v768
    %v770 = vpop.f32.mrf.mxu0
    %771 = vdwg.mxu0
    %772 = vmatprep.subr.mxu0 0.0
    %773 = vmatpush1.msra.mxu0 0.0
    %774 = vmatprep.subr.mxu0 0.0
    %775 = vmatpush1.msra.mxu0 0.0
    %776 = vmatprep.subr.mxu0 0.0
    %777 = vmatpush1.msra.mxu0 0.0
    %778 = vmatprep.subr.mxu0 0.0
    %779 = vmatpush1.msra.mxu0 0.0
    %780 = vmatprep.subr.mxu0 0.0
    %781 = vmatpush1.msra.mxu0 0.0
    %782 = vmatprep.subr.mxu0 0.0
    %783 = vmatpush1.msra.mxu0 0.0
    %784 = vmatprep.subr.mxu0 0.0
    %785 = vmatpush1.msra.mxu0 0.0
    %786 = vmatprep.subr.mxu0 0.0
    %787 = vmatpush1.msra.mxu0 0.0
    %788 = vmatprep.subr.mxu0 0.0
    %789 = vmatpush1.msra.mxu0 0.0
    %790 = vmatprep.subr.mxu0 0.0
    %791 = vmatpush1.msra.mxu0 0.0
    %792 = vmatprep.subr.mxu0 0.0
    %793 = vmatpush1.msra.mxu0 0.0
    %794 = vmatprep.subr.mxu0 0.0
    %795 = vmatpush1.msra.mxu0 0.0
    %796 = vmatprep.subr.mxu0 0.0
    %797 = vmatpush1.msra.mxu0 %v686
    %798 = vmatprep.subr.mxu0 0.0
    %799 = vmatpush1.msra.mxu0 %v685
    %800 = vmatprep.subr.mxu0 0.0
    %801 = vmatpush1.msra.mxu0 %v684
    %802 = vmatprep.subr.mxu0 0.0
    %803 = vmatpush1.msra.mxu0 %v683
    %804 = vmatprep.subr.mxu0 0.0
    %805 = vmatpush2.msra.mxu0 0.0
    %806 = vmatprep.subr.mxu0 0.0
    %807 = vmatpush2.msra.mxu0 0.0
    %808 = vmatprep.subr.mxu0 0.0
    %809 = vmatpush2.msra.mxu0 0.0
    %810 = vmatprep.subr.mxu0 0.0
    %811 = vmatpush2.msra.mxu0 0.0
    %812 = vmatprep.subr.mxu0 0.0
    %813 = vmatpush2.msra.mxu0 0.0
    %814 = vmatprep.subr.mxu0 0.0
    %815 = vmatpush2.msra.mxu0 0.0
    %816 = vmatprep.subr.mxu0 0.0
    %817 = vmatpush2.msra.mxu0 0.0
    %818 = vmatprep.subr.mxu0 0.0
    %819 = vmatpush2.msra.mxu0 0.0
    %820 = vmatprep.subr.mxu0 0.0
    %821 = vmatpush2.msra.mxu0 0.0
    %822 = vmatprep.subr.mxu0 0.0
    %823 = vmatpush2.msra.mxu0 0.0
    %824 = vmatprep.subr.mxu0 0.0
    %825 = vmatpush2.msra.mxu0 0.0
    %826 = vmatprep.subr.mxu0 0.0
    %827 = vmatpush2.msra.mxu0 0.0
    %828 = vmatprep.subr.mxu0 0.0
    %829 = vmatpush2.msra.mxu0 0.0
    %830 = vmatprep.subr.mxu0 0.0
    %831 = vmatpush2.msra.mxu0 0.0
    %832 = vmatprep.subr.mxu0 0.0
    %833 = vmatpush2.msra.mxu0 0.0
    %834 = vmatprep.subr.mxu0 0.0
    %835 = vmatpush2.msra.mxu0 0.0
    %836 = vmatprep.mubr.f32.mxu0 0.0
    %837 = vmatmul.mubr.f32.gmra.mxu0 %v237
    %v838 = vpop.f32.mrf.mxu0
    %v839 = vadd.f32 0.0, %v838
    %v840 = vpop.f32.mrf.mxu0
    %841 = vmatprep.mubr.f32.mxu0 0.0
    %842 = vmatmul.mubr.f32.gmra.mxu0 %v240
    %v843 = vpop.f32.mrf.mxu0
    %v844 = vadd.f32 0.0, %v843
    %v845 = vpop.f32.mrf.mxu0
    %846 = vmatprep.mubr.f32.mxu0 0.0
    %847 = vmatmul.mubr.f32.gmra.mxu0 %v243
    %v848 = vpop.f32.mrf.mxu0
    %v849 = vadd.f32 0.0, %v848
    %v850 = vpop.f32.mrf.mxu0
    %851 = vmatprep.mubr.f32.mxu0 0.0
    %852 = vmatmul.mubr.f32.gmra.mxu0 %v246
    %v853 = vpop.f32.mrf.mxu0
    %v854 = vadd.f32 0.0, %v853
    %v855 = vpop.f32.mrf.mxu0
    %856 = vdwg.mxu0
    %v858 = vsel %vm333, %v683, 0
    %v861 = vsel %vm333, %v684, 0
    %v864 = vsel %vm333, %v685, 0
    %v867 = vsel %vm333, %v686, 0
    %869 = vmatprep.subr.mxu0 0.0
    %870 = vmatpush1.msra.mxu0 0.0
    %871 = vmatprep.subr.mxu0 0.0
    %872 = vmatpush1.msra.mxu0 0.0
    %873 = vmatprep.subr.mxu0 0.0
    %874 = vmatpush1.msra.mxu0 0.0
    %875 = vmatprep.subr.mxu0 0.0
    %876 = vmatpush1.msra.mxu0 0.0
    %877 = vmatprep.subr.mxu0 0.0
    %878 = vmatpush1.msra.mxu0 0.0
    %879 = vmatprep.subr.mxu0 0.0
    %880 = vmatpush1.msra.mxu0 0.0
    %881 = vmatprep.subr.mxu0 0.0
    %882 = vmatpush1.msra.mxu0 0.0
    %883 = vmatprep.subr.mxu0 0.0
    %884 = vmatpush1.msra.mxu0 0.0
    %885 = vmatprep.subr.mxu0 0.0
    %886 = vmatpush1.msra.mxu0 %v108
    %887 = vmatprep.subr.mxu0 0.0
    %888 = vmatpush1.msra.mxu0 %v107
    %889 = vmatprep.subr.mxu0 0.0
    %890 = vmatpush1.msra.mxu0 %v106
    %891 = vmatprep.subr.mxu0 0.0
    %892 = vmatpush1.msra.mxu0 %v105
    %893 = vmatprep.subr.mxu0 0.0
    %894 = vmatpush1.msra.mxu0 %v104
    %895 = vmatprep.subr.mxu0 0.0
    %896 = vmatpush1.msra.mxu0 %v103
    %897 = vmatprep.subr.mxu0 0.0
    %898 = vmatpush1.msra.mxu0 %v102
    %899 = vmatprep.subr.mxu0 0.0
    %900 = vmatpush1.msra.mxu0 %v101
    %901 = vmatprep.subr.mxu0 0.0
    %902 = vmatpush2.msra.mxu0 0.0
    %903 = vmatprep.subr.mxu0 0.0
    %904 = vmatpush2.msra.mxu0 0.0
    %905 = vmatprep.subr.mxu0 0.0
    %906 = vmatpush2.msra.mxu0 0.0
    %907 = vmatprep.subr.mxu0 0.0
    %908 = vmatpush2.msra.mxu0 0.0
    %909 = vmatprep.subr.mxu0 0.0
    %910 = vmatpush2.msra.mxu0 0.0
    %911 = vmatprep.subr.mxu0 0.0
    %912 = vmatpush2.msra.mxu0 0.0
    %913 = vmatprep.subr.mxu0 0.0
    %914 = vmatpush2.msra.mxu0 0.0
    %915 = vmatprep.subr.mxu0 0.0
    %916 = vmatpush2.msra.mxu0 0.0
    %917 = vmatprep.subr.mxu0 0.0
    %918 = vmatpush2.msra.mxu0 0.0
    %919 = vmatprep.subr.mxu0 0.0
    %920 = vmatpush2.msra.mxu0 0.0
    %921 = vmatprep.subr.mxu0 0.0
    %922 = vmatpush2.msra.mxu0 0.0
    %923 = vmatprep.subr.mxu0 0.0
    %924 = vmatpush2.msra.mxu0 0.0
    %925 = vmatprep.subr.mxu0 0.0
    %926 = vmatpush2.msra.mxu0 0.0
    %927 = vmatprep.subr.mxu0 0.0
    %928 = vmatpush2.msra.mxu0 0.0
    %929 = vmatprep.subr.mxu0 0.0
    %930 = vmatpush2.msra.mxu0 0.0
    %931 = vmatprep.subr.mxu0 0.0
    %932 = vmatpush2.msra.mxu0 0.0
    %933 = vmatprep.mubr.f32.mxu0 0.0
    %934 = vmatmul.mubr.f32.gmra.mxu0 %v858
    %v935 = vpop.f32.mrf.mxu0
    %v936 = vadd.f32 0.0, %v935
    %v937 = vpop.f32.mrf.mxu0
    %938 = vmatprep.mubr.f32.mxu0 0.0
    %939 = vmatmul.mubr.f32.gmra.mxu0 %v861
    %v940 = vpop.f32.mrf.mxu0
    %v941 = vadd.f32 0.0, %v940
    %v942 = vpop.f32.mrf.mxu0
    %943 = vmatprep.mubr.f32.mxu0 0.0
    %944 = vmatmul.mubr.f32.gmra.mxu0 %v864
    %v945 = vpop.f32.mrf.mxu0
    %v946 = vadd.f32 0.0, %v945
    %v947 = vpop.f32.mrf.mxu0
    %948 = vmatprep.mubr.f32.mxu0 0.0
    %949 = vmatmul.mubr.f32.gmra.mxu0 %v867
    %v950 = vpop.f32.mrf.mxu0
    %v951 = vadd.f32 0.0, %v950
    %v952 = vpop.f32.mrf.mxu0
    %953 = vdwg.mxu0
    %v955 = vsel %vm333, %v754, 0
    %v958 = vsel %vm333, %v759, 0
    %v961 = vsel %vm333, %v764, 0
    %v964 = vsel %vm333, %v769, 0
    %966 = vmatprep.subr.mxu0 0.0
    %967 = vmatpush1.msra.mxu0 0.0
    %968 = vmatprep.subr.mxu0 0.0
    %969 = vmatpush1.msra.mxu0 0.0
    %970 = vmatprep.subr.mxu0 0.0
    %971 = vmatpush1.msra.mxu0 0.0
    %972 = vmatprep.subr.mxu0 0.0
    %973 = vmatpush1.msra.mxu0 0.0
    %974 = vmatprep.subr.mxu0 0.0
    %975 = vmatpush1.msra.mxu0 0.0
    %976 = vmatprep.subr.mxu0 0.0
    %977 = vmatpush1.msra.mxu0 0.0
    %978 = vmatprep.subr.mxu0 0.0
    %979 = vmatpush1.msra.mxu0 0.0
    %980 = vmatprep.subr.mxu0 0.0
    %981 = vmatpush1.msra.mxu0 0.0
    %982 = vmatprep.subr.mxu0 0.0
    %983 = vmatpush1.msra.mxu0 %v99
    %984 = vmatprep.subr.mxu0 0.0
    %985 = vmatpush1.msra.mxu0 %v98
    %986 = vmatprep.subr.mxu0 0.0
    %987 = vmatpush1.msra.mxu0 %v97
    %988 = vmatprep.subr.mxu0 0.0
    %989 = vmatpush1.msra.mxu0 %v96
    %990 = vmatprep.subr.mxu0 0.0
    %991 = vmatpush1.msra.mxu0 %v95
    %992 = vmatprep.subr.mxu0 0.0
    %993 = vmatpush1.msra.mxu0 %v94
    %994 = vmatprep.subr.mxu0 0.0
    %995 = vmatpush1.msra.mxu0 %v93
    %996 = vmatprep.subr.mxu0 0.0
    %997 = vmatpush1.msra.mxu0 %v92
    %998 = vmatprep.subr.mxu0 0.0
    %999 = vmatpush2.msra.mxu0 0.0
    %1000 = vmatprep.subr.mxu0 0.0
    %1001 = vmatpush2.msra.mxu0 0.0
    %1002 = vmatprep.subr.mxu0 0.0
    %1003 = vmatpush2.msra.mxu0 0.0
    %1004 = vmatprep.subr.mxu0 0.0
    %1005 = vmatpush2.msra.mxu0 0.0
    %1006 = vmatprep.subr.mxu0 0.0
    %1007 = vmatpush2.msra.mxu0 0.0
    %1008 = vmatprep.subr.mxu0 0.0
    %1009 = vmatpush2.msra.mxu0 0.0
    %1010 = vmatprep.subr.mxu0 0.0
    %1011 = vmatpush2.msra.mxu0 0.0
    %1012 = vmatprep.subr.mxu0 0.0
    %1013 = vmatpush2.msra.mxu0 0.0
    %1014 = vmatprep.subr.mxu0 0.0
    %1015 = vmatpush2.msra.mxu0 0.0
    %1016 = vmatprep.subr.mxu0 0.0
    %1017 = vmatpush2.msra.mxu0 0.0
    %1018 = vmatprep.subr.mxu0 0.0
    %1019 = vmatpush2.msra.mxu0 0.0
    %1020 = vmatprep.subr.mxu0 0.0
    %1021 = vmatpush2.msra.mxu0 0.0
    %1022 = vmatprep.subr.mxu0 0.0
    %1023 = vmatpush2.msra.mxu0 0.0
    %1024 = vmatprep.subr.mxu0 0.0
    %1025 = vmatpush2.msra.mxu0 0.0
    %1026 = vmatprep.subr.mxu0 0.0
    %1027 = vmatpush2.msra.mxu0 0.0
    %1028 = vmatprep.subr.mxu0 0.0
    %1029 = vmatpush2.msra.mxu0 0.0
    %1030 = vmatprep.mubr.f32.mxu0 0.0
    %1031 = vmatmul.mubr.f32.gmra.mxu0 %v955
    %v1032 = vpop.f32.mrf.mxu0
    %v1033 = vadd.f32 %v936, %v1032
    %v1034 = vpop.f32.mrf.mxu0
    %1035 = vmatprep.mubr.f32.mxu0 0.0
    %1036 = vmatmul.mubr.f32.gmra.mxu0 %v958
    %v1037 = vpop.f32.mrf.mxu0
    %v1038 = vadd.f32 %v941, %v1037
    %v1039 = vpop.f32.mrf.mxu0
    %1040 = vmatprep.mubr.f32.mxu0 0.0
    %1041 = vmatmul.mubr.f32.gmra.mxu0 %v961
    %v1042 = vpop.f32.mrf.mxu0
    %v1043 = vadd.f32 %v946, %v1042
    %v1044 = vpop.f32.mrf.mxu0
    %1045 = vmatprep.mubr.f32.mxu0 0.0
    %1046 = vmatmul.mubr.f32.gmra.mxu0 %v964
    %v1047 = vpop.f32.mrf.mxu0
    %v1048 = vadd.f32 %v951, %v1047
    %v1049 = vpop.f32.mrf.mxu0
    %1050 = vdwg.mxu0
    %v1052 = vsel %vm333, %v839, 0
    %v1055 = vsel %vm333, %v844, 0
    %v1058 = vsel %vm333, %v849, 0
    %v1061 = vsel %vm333, %v854, 0
    %1063 = vmatprep.subr.mxu0 0.0
    %1064 = vmatpush1.msra.mxu0 0.0
    %1065 = vmatprep.subr.mxu0 0.0
    %1066 = vmatpush1.msra.mxu0 0.0
    %1067 = vmatprep.subr.mxu0 0.0
    %1068 = vmatpush1.msra.mxu0 0.0
    %1069 = vmatprep.subr.mxu0 0.0
    %1070 = vmatpush1.msra.mxu0 0.0
    %1071 = vmatprep.subr.mxu0 0.0
    %1072 = vmatpush1.msra.mxu0 0.0
    %1073 = vmatprep.subr.mxu0 0.0
    %1074 = vmatpush1.msra.mxu0 0.0
    %1075 = vmatprep.subr.mxu0 0.0
    %1076 = vmatpush1.msra.mxu0 0.0
    %1077 = vmatprep.subr.mxu0 0.0
    %1078 = vmatpush1.msra.mxu0 0.0
    %1079 = vmatprep.subr.mxu0 0.0
    %1080 = vmatpush1.msra.mxu0 %v117
    %1081 = vmatprep.subr.mxu0 0.0
    %1082 = vmatpush1.msra.mxu0 %v116
    %1083 = vmatprep.subr.mxu0 0.0
    %1084 = vmatpush1.msra.mxu0 %v115
    %1085 = vmatprep.subr.mxu0 0.0
    %1086 = vmatpush1.msra.mxu0 %v114
    %1087 = vmatprep.subr.mxu0 0.0
    %1088 = vmatpush1.msra.mxu0 %v113
    %1089 = vmatprep.subr.mxu0 0.0
    %1090 = vmatpush1.msra.mxu0 %v112
    %1091 = vmatprep.subr.mxu0 0.0
    %1092 = vmatpush1.msra.mxu0 %v111
    %1093 = vmatprep.subr.mxu0 0.0
    %1094 = vmatpush1.msra.mxu0 %v110
    %1095 = vmatprep.subr.mxu0 0.0
    %1096 = vmatpush2.msra.mxu0 0.0
    %1097 = vmatprep.subr.mxu0 0.0
    %1098 = vmatpush2.msra.mxu0 0.0
    %1099 = vmatprep.subr.mxu0 0.0
    %1100 = vmatpush2.msra.mxu0 0.0
    %1101 = vmatprep.subr.mxu0 0.0
    %1102 = vmatpush2.msra.mxu0 0.0
    %1103 = vmatprep.subr.mxu0 0.0
    %1104 = vmatpush2.msra.mxu0 0.0
    %1105 = vmatprep.subr.mxu0 0.0
    %1106 = vmatpush2.msra.mxu0 0.0
    %1107 = vmatprep.subr.mxu0 0.0
    %1108 = vmatpush2.msra.mxu0 0.0
    %1109 = vmatprep.subr.mxu0 0.0
    %1110 = vmatpush2.msra.mxu0 0.0
    %1111 = vmatprep.subr.mxu0 0.0
    %1112 = vmatpush2.msra.mxu0 0.0
    %1113 = vmatprep.subr.mxu0 0.0
    %1114 = vmatpush2.msra.mxu0 0.0
    %1115 = vmatprep.subr.mxu0 0.0
    %1116 = vmatpush2.msra.mxu0 0.0
    %1117 = vmatprep.subr.mxu0 0.0
    %1118 = vmatpush2.msra.mxu0 0.0
    %1119 = vmatprep.subr.mxu0 0.0
    %1120 = vmatpush2.msra.mxu0 0.0
    %1121 = vmatprep.subr.mxu0 0.0
    %1122 = vmatpush2.msra.mxu0 0.0
    %1123 = vmatprep.subr.mxu0 0.0
    %1124 = vmatpush2.msra.mxu0 0.0
    %1125 = vmatprep.subr.mxu0 0.0
    %1126 = vmatpush2.msra.mxu0 0.0
    %1127 = vmatprep.mubr.f32.mxu0 0.0
    %1128 = vmatmul.mubr.f32.gmra.mxu0 %v1052
    %v1129 = vpop.f32.mrf.mxu0
    %v1130 = vadd.f32 0.0, %v1129
    %v1131 = vpop.f32.mrf.mxu0
    %1132 = vmatprep.mubr.f32.mxu0 0.0
    %1133 = vmatmul.mubr.f32.gmra.mxu0 %v1055
    %v1134 = vpop.f32.mrf.mxu0
    %v1135 = vadd.f32 0.0, %v1134
    %v1136 = vpop.f32.mrf.mxu0
    %1137 = vmatprep.mubr.f32.mxu0 0.0
    %1138 = vmatmul.mubr.f32.gmra.mxu0 %v1058
    %v1139 = vpop.f32.mrf.mxu0
    %v1140 = vadd.f32 0.0, %v1139
    %v1141 = vpop.f32.mrf.mxu0
    %1142 = vmatprep.mubr.f32.mxu0 0.0
    %1143 = vmatmul.mubr.f32.gmra.mxu0 %v1061
    %v1144 = vpop.f32.mrf.mxu0
    %v1145 = vadd.f32 0.0, %v1144
    %v1146 = vpop.f32.mrf.mxu0
    %1147 = vdwg.mxu0
    %v1148 = vadd.f32 %v1033, %v1130
    %v1149 = vadd.f32 %v1038, %v1135
    %v1150 = vadd.f32 %v1043, %v1140
    %v1151 = vadd.f32 %v1048, %v1145
    %v1152 = vadd.f32 %v1148, %v132
    %v1153 = vadd.f32 %v1149, %v132
    %v1154 = vadd.f32 %v1150, %v132
    %v1155 = vadd.f32 %v1151, %v132
    %s1156 = sld [smem:[#allocation11 + $0x1]]
    %s1157 = sld [smem:[#allocation11 + $0x81]]
    %s1158 = sld [smem:[#allocation11 + $0x101]]
    %s1159 = sld [smem:[#allocation11 + $0x181]]
    %s1160 = sld [smem:[#allocation11 + $0x201]]
    %v1161 = vstv %s1156
    %v1162 = vmul.f32 %v1161, %v683
    %v1163 = vmul.f32 %v1161, %v684
    %v1164 = vmul.f32 %v1161, %v685
    %v1165 = vmul.f32 %v1161, %v686
    %v1166 = vstv %s1157
    %v1167 = vmul.f32 %v1166, %v1152
    %v1168 = vmul.f32 %v1166, %v1153
    %v1169 = vmul.f32 %v1166, %v1154
    %v1170 = vmul.f32 %v1166, %v1155
    %v1171 = vsub.f32 %v1162, %v1167
    %v1172 = vsub.f32 %v1163, %v1168
    %v1173 = vsub.f32 %v1164, %v1169
    %v1174 = vsub.f32 %v1165, %v1170
    %v1175 = vmax.f32 %v1171, -1.0
    %v1176 = vmax.f32 %v1172, -1.0
    %v1177 = vmax.f32 %v1173, -1.0
    %v1178 = vmax.f32 %v1174, -1.0
    %v1179 = vmin.f32 %v1175, 1.0
    %v1180 = vmin.f32 %v1176, 1.0
    %v1181 = vmin.f32 %v1177, 1.0
    %v1182 = vmin.f32 %v1178, 1.0
    %v1183 = vstv %s1158
    %v1184 = vmul.f32 %v1183, %v1179
    %v1185 = vmul.f32 %v1183, %v1180
    %v1186 = vmul.f32 %v1183, %v1181
    %v1187 = vmul.f32 %v1183, %v1182
    %v1188 = vstv %s1159
    %v1189 = vmul.f32 %v1188, %v683
    %v1190 = vmul.f32 %v1188, %v684
    %v1191 = vmul.f32 %v1188, %v685
    %v1192 = vmul.f32 %v1188, %v686
    %v1193 = vadd.f32 %v1184, %v1189
    %v1194 = vadd.f32 %v1185, %v1190
    %v1195 = vadd.f32 %v1186, %v1191
    %v1196 = vadd.f32 %v1187, %v1192
    %s1197 = scalar_lea.vmem [#allocation6], 32
    %v1198 = vld [vmem:[%s1197] sm:$0xff]
    %v1199 = vld [vmem:[%s1197 + $0x8] sm:$0xff]
    %v1200 = vld [vmem:[%s1197 + $0x10] sm:$0xff]
    %v1201 = vld [vmem:[%s1197 + $0x18] sm:$0xff]
    %v1202 = vstv %s1160
    %v1203 = vmul.f32 %v1202, %v1198
    %v1204 = vmul.f32 %v1202, %v1199
    %v1205 = vmul.f32 %v1202, %v1200
    %v1206 = vmul.f32 %v1202, %v1201
    %v1207 = vadd.f32 %v1193, %v1203
    %v1208 = vadd.f32 %v1194, %v1204
    %v1209 = vadd.f32 %v1195, %v1205
    %v1210 = vadd.f32 %v1196, %v1206
    %1211 = vmatprep.subr.mxu0 0.0
    %1212 = vmatpush1.msra.mxu0 0.0
    %1213 = vmatprep.subr.mxu0 0.0
    %1214 = vmatpush1.msra.mxu0 0.0
    %1215 = vmatprep.subr.mxu0 0.0
    %1216 = vmatpush1.msra.mxu0 0.0
    %1217 = vmatprep.subr.mxu0 0.0
    %1218 = vmatpush1.msra.mxu0 0.0
    %1219 = vmatprep.subr.mxu0 0.0
    %1220 = vmatpush1.msra.mxu0 0.0
    %1221 = vmatprep.subr.mxu0 0.0
    %1222 = vmatpush1.msra.mxu0 0.0
    %1223 = vmatprep.subr.mxu0 0.0
    %1224 = vmatpush1.msra.mxu0 0.0
    %1225 = vmatprep.subr.mxu0 0.0
    %1226 = vmatpush1.msra.mxu0 0.0
    %1227 = vmatprep.subr.mxu0 0.0
    %1228 = vmatpush1.msra.mxu0 0.0
    %1229 = vmatprep.subr.mxu0 0.0
    %1230 = vmatpush1.msra.mxu0 0.0
    %1231 = vmatprep.subr.mxu0 0.0
    %1232 = vmatpush1.msra.mxu0 0.0
    %1233 = vmatprep.subr.mxu0 0.0
    %1234 = vmatpush1.msra.mxu0 0.0
    %1235 = vmatprep.subr.mxu0 0.0
    %1236 = vmatpush1.msra.mxu0 %v1210
    %1237 = vmatprep.subr.mxu0 0.0
    %1238 = vmatpush1.msra.mxu0 %v1209
    %1239 = vmatprep.subr.mxu0 0.0
    %1240 = vmatpush1.msra.mxu0 %v1208
    %1241 = vmatprep.subr.mxu0 0.0
    %1242 = vmatpush1.msra.mxu0 %v1207
    %1243 = vmatprep.subr.mxu0 0.0
    %1244 = vmatpush2.msra.mxu0 0.0
    %1245 = vmatprep.subr.mxu0 0.0
    %1246 = vmatpush2.msra.mxu0 0.0
    %1247 = vmatprep.subr.mxu0 0.0
    %1248 = vmatpush2.msra.mxu0 0.0
    %1249 = vmatprep.subr.mxu0 0.0
    %1250 = vmatpush2.msra.mxu0 0.0
    %1251 = vmatprep.subr.mxu0 0.0
    %1252 = vmatpush2.msra.mxu0 0.0
    %1253 = vmatprep.subr.mxu0 0.0
    %1254 = vmatpush2.msra.mxu0 0.0
    %1255 = vmatprep.subr.mxu0 0.0
    %1256 = vmatpush2.msra.mxu0 0.0
    %1257 = vmatprep.subr.mxu0 0.0
    %1258 = vmatpush2.msra.mxu0 0.0
    %1259 = vmatprep.subr.mxu0 0.0
    %1260 = vmatpush2.msra.mxu0 0.0
    %1261 = vmatprep.subr.mxu0 0.0
    %1262 = vmatpush2.msra.mxu0 0.0
    %1263 = vmatprep.subr.mxu0 0.0
    %1264 = vmatpush2.msra.mxu0 0.0
    %1265 = vmatprep.subr.mxu0 0.0
    %1266 = vmatpush2.msra.mxu0 0.0
    %1267 = vmatprep.subr.mxu0 0.0
    %1268 = vmatpush2.msra.mxu0 0.0
    %1269 = vmatprep.subr.mxu0 0.0
    %1270 = vmatpush2.msra.mxu0 0.0
    %1271 = vmatprep.subr.mxu0 0.0
    %1272 = vmatpush2.msra.mxu0 0.0
    %1273 = vmatprep.subr.mxu0 0.0
    %1274 = vmatpush2.msra.mxu0 0.0
    %1275 = vmatprep.mubr.f32.mxu0 0.0
    %1276 = vmatmul.mubr.f32.gmra.mxu0 %v140
    %v1277 = vpop.f32.mrf.mxu0
    %v1278 = vadd.f32 0.0, %v1277
    %v1279 = vpop.f32.mrf.mxu0
    %1280 = vmatprep.mubr.f32.mxu0 0.0
    %1281 = vmatmul.mubr.f32.gmra.mxu0 %v143
    %v1282 = vpop.f32.mrf.mxu0
    %v1283 = vadd.f32 0.0, %v1282
    %v1284 = vpop.f32.mrf.mxu0
    %1285 = vmatprep.mubr.f32.mxu0 0.0
    %1286 = vmatmul.mubr.f32.gmra.mxu0 %v146
    %v1287 = vpop.f32.mrf.mxu0
    %v1288 = vadd.f32 0.0, %v1287
    %v1289 = vpop.f32.mrf.mxu0
    %1290 = vmatprep.mubr.f32.mxu0 0.0
    %1291 = vmatmul.mubr.f32.gmra.mxu0 %v149
    %v1292 = vpop.f32.mrf.mxu0
    %v1293 = vadd.f32 0.0, %v1292
    %v1294 = vpop.f32.mrf.mxu0
    %1295 = vdwg.mxu0
    %1296 = vmatprep.subr.mxu0 0.0
    %1297 = vmatpush1.msra.mxu0 0.0
    %1298 = vmatprep.subr.mxu0 0.0
    %1299 = vmatpush1.msra.mxu0 0.0
    %1300 = vmatprep.subr.mxu0 0.0
    %1301 = vmatpush1.msra.mxu0 0.0
    %1302 = vmatprep.subr.mxu0 0.0
    %1303 = vmatpush1.msra.mxu0 0.0
    %1304 = vmatprep.subr.mxu0 0.0
    %1305 = vmatpush1.msra.mxu0 0.0
    %1306 = vmatprep.subr.mxu0 0.0
    %1307 = vmatpush1.msra.mxu0 0.0
    %1308 = vmatprep.subr.mxu0 0.0
    %1309 = vmatpush1.msra.mxu0 0.0
    %1310 = vmatprep.subr.mxu0 0.0
    %1311 = vmatpush1.msra.mxu0 0.0
    %1312 = vmatprep.subr.mxu0 0.0
    %1313 = vmatpush1.msra.mxu0 0.0
    %1314 = vmatprep.subr.mxu0 0.0
    %1315 = vmatpush1.msra.mxu0 0.0
    %1316 = vmatprep.subr.mxu0 0.0
    %1317 = vmatpush1.msra.mxu0 0.0
    %1318 = vmatprep.subr.mxu0 0.0
    %1319 = vmatpush1.msra.mxu0 0.0
    %1320 = vmatprep.subr.mxu0 0.0
    %1321 = vmatpush1.msra.mxu0 %v1210
    %1322 = vmatprep.subr.mxu0 0.0
    %1323 = vmatpush1.msra.mxu0 %v1209
    %1324 = vmatprep.subr.mxu0 0.0
    %1325 = vmatpush1.msra.mxu0 %v1208
    %1326 = vmatprep.subr.mxu0 0.0
    %1327 = vmatpush1.msra.mxu0 %v1207
    %1328 = vmatprep.subr.mxu0 0.0
    %1329 = vmatpush2.msra.mxu0 0.0
    %1330 = vmatprep.subr.mxu0 0.0
    %1331 = vmatpush2.msra.mxu0 0.0
    %1332 = vmatprep.subr.mxu0 0.0
    %1333 = vmatpush2.msra.mxu0 0.0
    %1334 = vmatprep.subr.mxu0 0.0
    %1335 = vmatpush2.msra.mxu0 0.0
    %1336 = vmatprep.subr.mxu0 0.0
    %1337 = vmatpush2.msra.mxu0 0.0
    %1338 = vmatprep.subr.mxu0 0.0
    %1339 = vmatpush2.msra.mxu0 0.0
    %1340 = vmatprep.subr.mxu0 0.0
    %1341 = vmatpush2.msra.mxu0 0.0
    %1342 = vmatprep.subr.mxu0 0.0
    %1343 = vmatpush2.msra.mxu0 0.0
    %1344 = vmatprep.subr.mxu0 0.0
    %1345 = vmatpush2.msra.mxu0 0.0
    %1346 = vmatprep.subr.mxu0 0.0
    %1347 = vmatpush2.msra.mxu0 0.0
    %1348 = vmatprep.subr.mxu0 0.0
    %1349 = vmatpush2.msra.mxu0 0.0
    %1350 = vmatprep.subr.mxu0 0.0
    %1351 = vmatpush2.msra.mxu0 0.0
    %1352 = vmatprep.subr.mxu0 0.0
    %1353 = vmatpush2.msra.mxu0 0.0
    %1354 = vmatprep.subr.mxu0 0.0
    %1355 = vmatpush2.msra.mxu0 0.0
    %1356 = vmatprep.subr.mxu0 0.0
    %1357 = vmatpush2.msra.mxu0 0.0
    %1358 = vmatprep.subr.mxu0 0.0
    %1359 = vmatpush2.msra.mxu0 0.0
    %1360 = vmatprep.mubr.f32.mxu0 0.0
    %1361 = vmatmul.mubr.f32.gmra.mxu0 %v237
    %v1362 = vpop.f32.mrf.mxu0
    %v1363 = vadd.f32 0.0, %v1362
    %v1364 = vpop.f32.mrf.mxu0
    %1365 = vmatprep.mubr.f32.mxu0 0.0
    %1366 = vmatmul.mubr.f32.gmra.mxu0 %v240
    %v1367 = vpop.f32.mrf.mxu0
    %v1368 = vadd.f32 0.0, %v1367
    %v1369 = vpop.f32.mrf.mxu0
    %1370 = vmatprep.mubr.f32.mxu0 0.0
    %1371 = vmatmul.mubr.f32.gmra.mxu0 %v243
    %v1372 = vpop.f32.mrf.mxu0
    %v1373 = vadd.f32 0.0, %v1372
    %v1374 = vpop.f32.mrf.mxu0
    %1375 = vmatprep.mubr.f32.mxu0 0.0
    %1376 = vmatmul.mubr.f32.gmra.mxu0 %v246
    %v1377 = vpop.f32.mrf.mxu0
    %v1378 = vadd.f32 0.0, %v1377
    %v1379 = vpop.f32.mrf.mxu0
    %1380 = vdwg.mxu0
    %v1382 = vsel %vm333, %v1207, 0
    %v1385 = vsel %vm333, %v1208, 0
    %v1388 = vsel %vm333, %v1209, 0
    %v1391 = vsel %vm333, %v1210, 0
    %1393 = vmatprep.subr.mxu0 0.0
    %1394 = vmatpush1.msra.mxu0 0.0
    %1395 = vmatprep.subr.mxu0 0.0
    %1396 = vmatpush1.msra.mxu0 0.0
    %1397 = vmatprep.subr.mxu0 0.0
    %1398 = vmatpush1.msra.mxu0 0.0
    %1399 = vmatprep.subr.mxu0 0.0
    %1400 = vmatpush1.msra.mxu0 0.0
    %1401 = vmatprep.subr.mxu0 0.0
    %1402 = vmatpush1.msra.mxu0 0.0
    %1403 = vmatprep.subr.mxu0 0.0
    %1404 = vmatpush1.msra.mxu0 0.0
    %1405 = vmatprep.subr.mxu0 0.0
    %1406 = vmatpush1.msra.mxu0 0.0
    %1407 = vmatprep.subr.mxu0 0.0
    %1408 = vmatpush1.msra.mxu0 0.0
    %1409 = vmatprep.subr.mxu0 0.0
    %1410 = vmatpush1.msra.mxu0 %v108
    %1411 = vmatprep.subr.mxu0 0.0
    %1412 = vmatpush1.msra.mxu0 %v107
    %1413 = vmatprep.subr.mxu0 0.0
    %1414 = vmatpush1.msra.mxu0 %v106
    %1415 = vmatprep.subr.mxu0 0.0
    %1416 = vmatpush1.msra.mxu0 %v105
    %1417 = vmatprep.subr.mxu0 0.0
    %1418 = vmatpush1.msra.mxu0 %v104
    %1419 = vmatprep.subr.mxu0 0.0
    %1420 = vmatpush1.msra.mxu0 %v103
    %1421 = vmatprep.subr.mxu0 0.0
    %1422 = vmatpush1.msra.mxu0 %v102
    %1423 = vmatprep.subr.mxu0 0.0
    %1424 = vmatpush1.msra.mxu0 %v101
    %1425 = vmatprep.subr.mxu0 0.0
    %1426 = vmatpush2.msra.mxu0 0.0
    %1427 = vmatprep.subr.mxu0 0.0
    %1428 = vmatpush2.msra.mxu0 0.0
    %1429 = vmatprep.subr.mxu0 0.0
    %1430 = vmatpush2.msra.mxu0 0.0
    %1431 = vmatprep.subr.mxu0 0.0
    %1432 = vmatpush2.msra.mxu0 0.0
    %1433 = vmatprep.subr.mxu0 0.0
    %1434 = vmatpush2.msra.mxu0 0.0
    %1435 = vmatprep.subr.mxu0 0.0
    %1436 = vmatpush2.msra.mxu0 0.0
    %1437 = vmatprep.subr.mxu0 0.0
    %1438 = vmatpush2.msra.mxu0 0.0
    %1439 = vmatprep.subr.mxu0 0.0
    %1440 = vmatpush2.msra.mxu0 0.0
    %1441 = vmatprep.subr.mxu0 0.0
    %1442 = vmatpush2.msra.mxu0 0.0
    %1443 = vmatprep.subr.mxu0 0.0
    %1444 = vmatpush2.msra.mxu0 0.0
    %1445 = vmatprep.subr.mxu0 0.0
    %1446 = vmatpush2.msra.mxu0 0.0
    %1447 = vmatprep.subr.mxu0 0.0
    %1448 = vmatpush2.msra.mxu0 0.0
    %1449 = vmatprep.subr.mxu0 0.0
    %1450 = vmatpush2.msra.mxu0 0.0
    %1451 = vmatprep.subr.mxu0 0.0
    %1452 = vmatpush2.msra.mxu0 0.0
    %1453 = vmatprep.subr.mxu0 0.0
    %1454 = vmatpush2.msra.mxu0 0.0
    %1455 = vmatprep.subr.mxu0 0.0
    %1456 = vmatpush2.msra.mxu0 0.0
    %1457 = vmatprep.mubr.f32.mxu0 0.0
    %1458 = vmatmul.mubr.f32.gmra.mxu0 %v1382
    %v1459 = vpop.f32.mrf.mxu0
    %v1460 = vadd.f32 0.0, %v1459
    %v1461 = vpop.f32.mrf.mxu0
    %1462 = vmatprep.mubr.f32.mxu0 0.0
    %1463 = vmatmul.mubr.f32.gmra.mxu0 %v1385
    %v1464 = vpop.f32.mrf.mxu0
    %v1465 = vadd.f32 0.0, %v1464
    %v1466 = vpop.f32.mrf.mxu0
    %1467 = vmatprep.mubr.f32.mxu0 0.0
    %1468 = vmatmul.mubr.f32.gmra.mxu0 %v1388
    %v1469 = vpop.f32.mrf.mxu0
    %v1470 = vadd.f32 0.0, %v1469
    %v1471 = vpop.f32.mrf.mxu0
    %1472 = vmatprep.mubr.f32.mxu0 0.0
    %1473 = vmatmul.mubr.f32.gmra.mxu0 %v1391
    %v1474 = vpop.f32.mrf.mxu0
    %v1475 = vadd.f32 0.0, %v1474
    %v1476 = vpop.f32.mrf.mxu0
    %1477 = vdwg.mxu0
    %v1479 = vsel %vm333, %v1278, 0
    %v1482 = vsel %vm333, %v1283, 0
    %v1485 = vsel %vm333, %v1288, 0
    %v1488 = vsel %vm333, %v1293, 0
    %1490 = vmatprep.subr.mxu0 0.0
    %1491 = vmatpush1.msra.mxu0 0.0
    %1492 = vmatprep.subr.mxu0 0.0
    %1493 = vmatpush1.msra.mxu0 0.0
    %1494 = vmatprep.subr.mxu0 0.0
    %1495 = vmatpush1.msra.mxu0 0.0
    %1496 = vmatprep.subr.mxu0 0.0
    %1497 = vmatpush1.msra.mxu0 0.0
    %1498 = vmatprep.subr.mxu0 0.0
    %1499 = vmatpush1.msra.mxu0 0.0
    %1500 = vmatprep.subr.mxu0 0.0
    %1501 = vmatpush1.msra.mxu0 0.0
    %1502 = vmatprep.subr.mxu0 0.0
    %1503 = vmatpush1.msra.mxu0 0.0
    %1504 = vmatprep.subr.mxu0 0.0
    %1505 = vmatpush1.msra.mxu0 0.0
    %1506 = vmatprep.subr.mxu0 0.0
    %1507 = vmatpush1.msra.mxu0 %v99
    %1508 = vmatprep.subr.mxu0 0.0
    %1509 = vmatpush1.msra.mxu0 %v98
    %1510 = vmatprep.subr.mxu0 0.0
    %1511 = vmatpush1.msra.mxu0 %v97
    %1512 = vmatprep.subr.mxu0 0.0
    %1513 = vmatpush1.msra.mxu0 %v96
    %1514 = vmatprep.subr.mxu0 0.0
    %1515 = vmatpush1.msra.mxu0 %v95
    %1516 = vmatprep.subr.mxu0 0.0
    %1517 = vmatpush1.msra.mxu0 %v94
    %1518 = vmatprep.subr.mxu0 0.0
    %1519 = vmatpush1.msra.mxu0 %v93
    %1520 = vmatprep.subr.mxu0 0.0
    %1521 = vmatpush1.msra.mxu0 %v92
    %1522 = vmatprep.subr.mxu0 0.0
    %1523 = vmatpush2.msra.mxu0 0.0
    %1524 = vmatprep.subr.mxu0 0.0
    %1525 = vmatpush2.msra.mxu0 0.0
    %1526 = vmatprep.subr.mxu0 0.0
    %1527 = vmatpush2.msra.mxu0 0.0
    %1528 = vmatprep.subr.mxu0 0.0
    %1529 = vmatpush2.msra.mxu0 0.0
    %1530 = vmatprep.subr.mxu0 0.0
    %1531 = vmatpush2.msra.mxu0 0.0
    %1532 = vmatprep.subr.mxu0 0.0
    %1533 = vmatpush2.msra.mxu0 0.0
    %1534 = vmatprep.subr.mxu0 0.0
    %1535 = vmatpush2.msra.mxu0 0.0
    %1536 = vmatprep.subr.mxu0 0.0
    %1537 = vmatpush2.msra.mxu0 0.0
    %1538 = vmatprep.subr.mxu0 0.0
    %1539 = vmatpush2.msra.mxu0 0.0
    %1540 = vmatprep.subr.mxu0 0.0
    %1541 = vmatpush2.msra.mxu0 0.0
    %1542 = vmatprep.subr.mxu0 0.0
    %1543 = vmatpush2.msra.mxu0 0.0
    %1544 = vmatprep.subr.mxu0 0.0
    %1545 = vmatpush2.msra.mxu0 0.0
    %1546 = vmatprep.subr.mxu0 0.0
    %1547 = vmatpush2.msra.mxu0 0.0
    %1548 = vmatprep.subr.mxu0 0.0
    %1549 = vmatpush2.msra.mxu0 0.0
    %1550 = vmatprep.subr.mxu0 0.0
    %1551 = vmatpush2.msra.mxu0 0.0
    %1552 = vmatprep.subr.mxu0 0.0
    %1553 = vmatpush2.msra.mxu0 0.0
    %1554 = vmatprep.mubr.f32.mxu0 0.0
    %1555 = vmatmul.mubr.f32.gmra.mxu0 %v1479
    %v1556 = vpop.f32.mrf.mxu0
    %v1557 = vadd.f32 %v1460, %v1556
    %v1558 = vpop.f32.mrf.mxu0
    %1559 = vmatprep.mubr.f32.mxu0 0.0
    %1560 = vmatmul.mubr.f32.gmra.mxu0 %v1482
    %v1561 = vpop.f32.mrf.mxu0
    %v1562 = vadd.f32 %v1465, %v1561
    %v1563 = vpop.f32.mrf.mxu0
    %1564 = vmatprep.mubr.f32.mxu0 0.0
    %1565 = vmatmul.mubr.f32.gmra.mxu0 %v1485
    %v1566 = vpop.f32.mrf.mxu0
    %v1567 = vadd.f32 %v1470, %v1566
    %v1568 = vpop.f32.mrf.mxu0
    %1569 = vmatprep.mubr.f32.mxu0 0.0
    %1570 = vmatmul.mubr.f32.gmra.mxu0 %v1488
    %v1571 = vpop.f32.mrf.mxu0
    %v1572 = vadd.f32 %v1475, %v1571
    %v1573 = vpop.f32.mrf.mxu0
    %1574 = vdwg.mxu0
    %v1576 = vsel %vm333, %v1363, 0
    %v1579 = vsel %vm333, %v1368, 0
    %v1582 = vsel %vm333, %v1373, 0
    %v1585 = vsel %vm333, %v1378, 0
    %1587 = vmatprep.subr.mxu0 0.0
    %1588 = vmatpush1.msra.mxu0 0.0
    %1589 = vmatprep.subr.mxu0 0.0
    %1590 = vmatpush1.msra.mxu0 0.0
    %1591 = vmatprep.subr.mxu0 0.0
    %1592 = vmatpush1.msra.mxu0 0.0
    %1593 = vmatprep.subr.mxu0 0.0
    %1594 = vmatpush1.msra.mxu0 0.0
    %1595 = vmatprep.subr.mxu0 0.0
    %1596 = vmatpush1.msra.mxu0 0.0
    %1597 = vmatprep.subr.mxu0 0.0
    %1598 = vmatpush1.msra.mxu0 0.0
    %1599 = vmatprep.subr.mxu0 0.0
    %1600 = vmatpush1.msra.mxu0 0.0
    %1601 = vmatprep.subr.mxu0 0.0
    %1602 = vmatpush1.msra.mxu0 0.0
    %1603 = vmatprep.subr.mxu0 0.0
    %1604 = vmatpush1.msra.mxu0 %v117
    %1605 = vmatprep.subr.mxu0 0.0
    %1606 = vmatpush1.msra.mxu0 %v116
    %1607 = vmatprep.subr.mxu0 0.0
    %1608 = vmatpush1.msra.mxu0 %v115
    %1609 = vmatprep.subr.mxu0 0.0
    %1610 = vmatpush1.msra.mxu0 %v114
    %1611 = vmatprep.subr.mxu0 0.0
    %1612 = vmatpush1.msra.mxu0 %v113
    %1613 = vmatprep.subr.mxu0 0.0
    %1614 = vmatpush1.msra.mxu0 %v112
    %1615 = vmatprep.subr.mxu0 0.0
    %1616 = vmatpush1.msra.mxu0 %v111
    %1617 = vmatprep.subr.mxu0 0.0
    %1618 = vmatpush1.msra.mxu0 %v110
    %1619 = vmatprep.subr.mxu0 0.0
    %1620 = vmatpush2.msra.mxu0 0.0
    %1621 = vmatprep.subr.mxu0 0.0
    %1622 = vmatpush2.msra.mxu0 0.0
    %1623 = vmatprep.subr.mxu0 0.0
    %1624 = vmatpush2.msra.mxu0 0.0
    %1625 = vmatprep.subr.mxu0 0.0
    %1626 = vmatpush2.msra.mxu0 0.0
    %1627 = vmatprep.subr.mxu0 0.0
    %1628 = vmatpush2.msra.mxu0 0.0
    %1629 = vmatprep.subr.mxu0 0.0
    %1630 = vmatpush2.msra.mxu0 0.0
    %1631 = vmatprep.subr.mxu0 0.0
    %1632 = vmatpush2.msra.mxu0 0.0
    %1633 = vmatprep.subr.mxu0 0.0
    %1634 = vmatpush2.msra.mxu0 0.0
    %1635 = vmatprep.subr.mxu0 0.0
    %1636 = vmatpush2.msra.mxu0 0.0
    %1637 = vmatprep.subr.mxu0 0.0
    %1638 = vmatpush2.msra.mxu0 0.0
    %1639 = vmatprep.subr.mxu0 0.0
    %1640 = vmatpush2.msra.mxu0 0.0
    %1641 = vmatprep.subr.mxu0 0.0
    %1642 = vmatpush2.msra.mxu0 0.0
    %1643 = vmatprep.subr.mxu0 0.0
    %1644 = vmatpush2.msra.mxu0 0.0
    %1645 = vmatprep.subr.mxu0 0.0
    %1646 = vmatpush2.msra.mxu0 0.0
    %1647 = vmatprep.subr.mxu0 0.0
    %1648 = vmatpush2.msra.mxu0 0.0
    %1649 = vmatprep.subr.mxu0 0.0
    %1650 = vmatpush2.msra.mxu0 0.0
    %1651 = vmatprep.mubr.f32.mxu0 0.0
    %1652 = vmatmul.mubr.f32.gmra.mxu0 %v1576
    %v1653 = vpop.f32.mrf.mxu0
    %v1654 = vadd.f32 0.0, %v1653
    %v1655 = vpop.f32.mrf.mxu0
    %1656 = vmatprep.mubr.f32.mxu0 0.0
    %1657 = vmatmul.mubr.f32.gmra.mxu0 %v1579
    %v1658 = vpop.f32.mrf.mxu0
    %v1659 = vadd.f32 0.0, %v1658
    %v1660 = vpop.f32.mrf.mxu0
    %1661 = vmatprep.mubr.f32.mxu0 0.0
    %1662 = vmatmul.mubr.f32.gmra.mxu0 %v1582
    %v1663 = vpop.f32.mrf.mxu0
    %v1664 = vadd.f32 0.0, %v1663
    %v1665 = vpop.f32.mrf.mxu0
    %1666 = vmatprep.mubr.f32.mxu0 0.0
    %1667 = vmatmul.mubr.f32.gmra.mxu0 %v1585
    %v1668 = vpop.f32.mrf.mxu0
    %v1669 = vadd.f32 0.0, %v1668
    %v1670 = vpop.f32.mrf.mxu0
    %1671 = vdwg.mxu0
    %v1672 = vadd.f32 %v1557, %v1654
    %v1673 = vadd.f32 %v1562, %v1659
    %v1674 = vadd.f32 %v1567, %v1664
    %v1675 = vadd.f32 %v1572, %v1669
    %v1676 = vadd.f32 %v1672, %v132
    %v1677 = vadd.f32 %v1673, %v132
    %v1678 = vadd.f32 %v1674, %v132
    %v1679 = vadd.f32 %v1675, %v132
    %s1680 = sld [smem:[#allocation11 + $0x2]]
    %s1681 = sld [smem:[#allocation11 + $0x82]]
    %s1682 = sld [smem:[#allocation11 + $0x102]]
    %s1683 = sld [smem:[#allocation11 + $0x182]]
    %s1684 = sld [smem:[#allocation11 + $0x202]]
    %v1685 = vstv %s1680
    %v1686 = vmul.f32 %v1685, %v1207
    %v1687 = vmul.f32 %v1685, %v1208
    %v1688 = vmul.f32 %v1685, %v1209
    %v1689 = vmul.f32 %v1685, %v1210
    %v1690 = vstv %s1681
    %v1691 = vmul.f32 %v1690, %v1676
    %v1692 = vmul.f32 %v1690, %v1677
    %v1693 = vmul.f32 %v1690, %v1678
    %v1694 = vmul.f32 %v1690, %v1679
    %v1695 = vsub.f32 %v1686, %v1691
    %v1696 = vsub.f32 %v1687, %v1692
    %v1697 = vsub.f32 %v1688, %v1693
    %v1698 = vsub.f32 %v1689, %v1694
    %v1699 = vmax.f32 %v1695, -1.0
    %v1700 = vmax.f32 %v1696, -1.0
    %v1701 = vmax.f32 %v1697, -1.0
    %v1702 = vmax.f32 %v1698, -1.0
    %v1703 = vmin.f32 %v1699, 1.0
    %v1704 = vmin.f32 %v1700, 1.0
    %v1705 = vmin.f32 %v1701, 1.0
    %v1706 = vmin.f32 %v1702, 1.0
    %v1707 = vstv %s1682
    %v1708 = vmul.f32 %v1707, %v1703
    %v1709 = vmul.f32 %v1707, %v1704
    %v1710 = vmul.f32 %v1707, %v1705
    %v1711 = vmul.f32 %v1707, %v1706
    %v1712 = vstv %s1683
    %v1713 = vmul.f32 %v1712, %v1207
    %v1714 = vmul.f32 %v1712, %v1208
    %v1715 = vmul.f32 %v1712, %v1209
    %v1716 = vmul.f32 %v1712, %v1210
    %v1717 = vadd.f32 %v1708, %v1713
    %v1718 = vadd.f32 %v1709, %v1714
    %v1719 = vadd.f32 %v1710, %v1715
    %v1720 = vadd.f32 %v1711, %v1716
    %s1721 = scalar_lea.vmem [#allocation6], 64
    %v1722 = vld [vmem:[%s1721] sm:$0xff]
    %v1723 = vld [vmem:[%s1721 + $0x8] sm:$0xff]
    %v1724 = vld [vmem:[%s1721 + $0x10] sm:$0xff]
    %v1725 = vld [vmem:[%s1721 + $0x18] sm:$0xff]
    %v1726 = vstv %s1684
    %v1727 = vmul.f32 %v1726, %v1722
    %v1728 = vmul.f32 %v1726, %v1723
    %v1729 = vmul.f32 %v1726, %v1724
    %v1730 = vmul.f32 %v1726, %v1725
    %v1731 = vadd.f32 %v1717, %v1727
    %v1732 = vadd.f32 %v1718, %v1728
    %v1733 = vadd.f32 %v1719, %v1729
    %v1734 = vadd.f32 %v1720, %v1730
    %1735 = vmatprep.subr.mxu0 0.0
    %1736 = vmatpush1.msra.mxu0 0.0
    %1737 = vmatprep.subr.mxu0 0.0
    %1738 = vmatpush1.msra.mxu0 0.0
    %1739 = vmatprep.subr.mxu0 0.0
    %1740 = vmatpush1.msra.mxu0 0.0
    %1741 = vmatprep.subr.mxu0 0.0
    %1742 = vmatpush1.msra.mxu0 0.0
    %1743 = vmatprep.subr.mxu0 0.0
    %1744 = vmatpush1.msra.mxu0 0.0
    %1745 = vmatprep.subr.mxu0 0.0
    %1746 = vmatpush1.msra.mxu0 0.0
    %1747 = vmatprep.subr.mxu0 0.0
    %1748 = vmatpush1.msra.mxu0 0.0
    %1749 = vmatprep.subr.mxu0 0.0
    %1750 = vmatpush1.msra.mxu0 0.0
    %1751 = vmatprep.subr.mxu0 0.0
    %1752 = vmatpush1.msra.mxu0 0.0
    %1753 = vmatprep.subr.mxu0 0.0
    %1754 = vmatpush1.msra.mxu0 0.0
    %1755 = vmatprep.subr.mxu0 0.0
    %1756 = vmatpush1.msra.mxu0 0.0
    %1757 = vmatprep.subr.mxu0 0.0
    %1758 = vmatpush1.msra.mxu0 0.0
    %1759 = vmatprep.subr.mxu0 0.0
    %1760 = vmatpush1.msra.mxu0 %v1734
    %1761 = vmatprep.subr.mxu0 0.0
    %1762 = vmatpush1.msra.mxu0 %v1733
    %1763 = vmatprep.subr.mxu0 0.0
    %1764 = vmatpush1.msra.mxu0 %v1732
    %1765 = vmatprep.subr.mxu0 0.0
    %1766 = vmatpush1.msra.mxu0 %v1731
    %1767 = vmatprep.subr.mxu0 0.0
    %1768 = vmatpush2.msra.mxu0 0.0
    %1769 = vmatprep.subr.mxu0 0.0
    %1770 = vmatpush2.msra.mxu0 0.0
    %1771 = vmatprep.subr.mxu0 0.0
    %1772 = vmatpush2.msra.mxu0 0.0
    %1773 = vmatprep.subr.mxu0 0.0
    %1774 = vmatpush2.msra.mxu0 0.0
    %1775 = vmatprep.subr.mxu0 0.0
    %1776 = vmatpush2.msra.mxu0 0.0
    %1777 = vmatprep.subr.mxu0 0.0
    %1778 = vmatpush2.msra.mxu0 0.0
    %1779 = vmatprep.subr.mxu0 0.0
    %1780 = vmatpush2.msra.mxu0 0.0
    %1781 = vmatprep.subr.mxu0 0.0
    %1782 = vmatpush2.msra.mxu0 0.0
    %1783 = vmatprep.subr.mxu0 0.0
    %1784 = vmatpush2.msra.mxu0 0.0
    %1785 = vmatprep.subr.mxu0 0.0
    %1786 = vmatpush2.msra.mxu0 0.0
    %1787 = vmatprep.subr.mxu0 0.0
    %1788 = vmatpush2.msra.mxu0 0.0
    %1789 = vmatprep.subr.mxu0 0.0
    %1790 = vmatpush2.msra.mxu0 0.0
    %1791 = vmatprep.subr.mxu0 0.0
    %1792 = vmatpush2.msra.mxu0 0.0
    %1793 = vmatprep.subr.mxu0 0.0
    %1794 = vmatpush2.msra.mxu0 0.0
    %1795 = vmatprep.subr.mxu0 0.0
    %1796 = vmatpush2.msra.mxu0 0.0
    %1797 = vmatprep.subr.mxu0 0.0
    %1798 = vmatpush2.msra.mxu0 0.0
    %1799 = vmatprep.mubr.f32.mxu0 0.0
    %1800 = vmatmul.mubr.f32.gmra.mxu0 %v140
    %v1801 = vpop.f32.mrf.mxu0
    %v1802 = vadd.f32 0.0, %v1801
    %v1803 = vpop.f32.mrf.mxu0
    %1804 = vmatprep.mubr.f32.mxu0 0.0
    %1805 = vmatmul.mubr.f32.gmra.mxu0 %v143
    %v1806 = vpop.f32.mrf.mxu0
    %v1807 = vadd.f32 0.0, %v1806
    %v1808 = vpop.f32.mrf.mxu0
    %1809 = vmatprep.mubr.f32.mxu0 0.0
    %1810 = vmatmul.mubr.f32.gmra.mxu0 %v146
    %v1811 = vpop.f32.mrf.mxu0
    %v1812 = vadd.f32 0.0, %v1811
    %v1813 = vpop.f32.mrf.mxu0
    %1814 = vmatprep.mubr.f32.mxu0 0.0
    %1815 = vmatmul.mubr.f32.gmra.mxu0 %v149
    %v1816 = vpop.f32.mrf.mxu0
    %v1817 = vadd.f32 0.0, %v1816
    %v1818 = vpop.f32.mrf.mxu0
    %1819 = vdwg.mxu0
    %1820 = vmatprep.subr.mxu0 0.0
    %1821 = vmatpush1.msra.mxu0 0.0
    %1822 = vmatprep.subr.mxu0 0.0
    %1823 = vmatpush1.msra.mxu0 0.0
    %1824 = vmatprep.subr.mxu0 0.0
    %1825 = vmatpush1.msra.mxu0 0.0
    %1826 = vmatprep.subr.mxu0 0.0
    %1827 = vmatpush1.msra.mxu0 0.0
    %1828 = vmatprep.subr.mxu0 0.0
    %1829 = vmatpush1.msra.mxu0 0.0
    %1830 = vmatprep.subr.mxu0 0.0
    %1831 = vmatpush1.msra.mxu0 0.0
    %1832 = vmatprep.subr.mxu0 0.0
    %1833 = vmatpush1.msra.mxu0 0.0
    %1834 = vmatprep.subr.mxu0 0.0
    %1835 = vmatpush1.msra.mxu0 0.0
    %1836 = vmatprep.subr.mxu0 0.0
    %1837 = vmatpush1.msra.mxu0 0.0
    %1838 = vmatprep.subr.mxu0 0.0
    %1839 = vmatpush1.msra.mxu0 0.0
    %1840 = vmatprep.subr.mxu0 0.0
    %1841 = vmatpush1.msra.mxu0 0.0
    %1842 = vmatprep.subr.mxu0 0.0
    %1843 = vmatpush1.msra.mxu0 0.0
    %1844 = vmatprep.subr.mxu0 0.0
    %1845 = vmatpush1.msra.mxu0 %v1734
    %1846 = vmatprep.subr.mxu0 0.0
    %1847 = vmatpush1.msra.mxu0 %v1733
    %1848 = vmatprep.subr.mxu0 0.0
    %1849 = vmatpush1.msra.mxu0 %v1732
    %1850 = vmatprep.subr.mxu0 0.0
    %1851 = vmatpush1.msra.mxu0 %v1731
    %1852 = vmatprep.subr.mxu0 0.0
    %1853 = vmatpush2.msra.mxu0 0.0
    %1854 = vmatprep.subr.mxu0 0.0
    %1855 = vmatpush2.msra.mxu0 0.0
    %1856 = vmatprep.subr.mxu0 0.0
    %1857 = vmatpush2.msra.mxu0 0.0
    %1858 = vmatprep.subr.mxu0 0.0
    %1859 = vmatpush2.msra.mxu0 0.0
    %1860 = vmatprep.subr.mxu0 0.0
    %1861 = vmatpush2.msra.mxu0 0.0
    %1862 = vmatprep.subr.mxu0 0.0
    %1863 = vmatpush2.msra.mxu0 0.0
    %1864 = vmatprep.subr.mxu0 0.0
    %1865 = vmatpush2.msra.mxu0 0.0
    %1866 = vmatprep.subr.mxu0 0.0
    %1867 = vmatpush2.msra.mxu0 0.0
    %1868 = vmatprep.subr.mxu0 0.0
    %1869 = vmatpush2.msra.mxu0 0.0
    %1870 = vmatprep.subr.mxu0 0.0
    %1871 = vmatpush2.msra.mxu0 0.0
    %1872 = vmatprep.subr.mxu0 0.0
    %1873 = vmatpush2.msra.mxu0 0.0
    %1874 = vmatprep.subr.mxu0 0.0
    %1875 = vmatpush2.msra.mxu0 0.0
    %1876 = vmatprep.subr.mxu0 0.0
    %1877 = vmatpush2.msra.mxu0 0.0
    %1878 = vmatprep.subr.mxu0 0.0
    %1879 = vmatpush2.msra.mxu0 0.0
    %1880 = vmatprep.subr.mxu0 0.0
    %1881 = vmatpush2.msra.mxu0 0.0
    %1882 = vmatprep.subr.mxu0 0.0
    %1883 = vmatpush2.msra.mxu0 0.0
    %1884 = vmatprep.mubr.f32.mxu0 0.0
    %1885 = vmatmul.mubr.f32.gmra.mxu0 %v237
    %v1886 = vpop.f32.mrf.mxu0
    %v1887 = vadd.f32 0.0, %v1886
    %v1888 = vpop.f32.mrf.mxu0
    %1889 = vmatprep.mubr.f32.mxu0 0.0
    %1890 = vmatmul.mubr.f32.gmra.mxu0 %v240
    %v1891 = vpop.f32.mrf.mxu0
    %v1892 = vadd.f32 0.0, %v1891
    %v1893 = vpop.f32.mrf.mxu0
    %1894 = vmatprep.mubr.f32.mxu0 0.0
    %1895 = vmatmul.mubr.f32.gmra.mxu0 %v243
    %v1896 = vpop.f32.mrf.mxu0
    %v1897 = vadd.f32 0.0, %v1896
    %v1898 = vpop.f32.mrf.mxu0
    %1899 = vmatprep.mubr.f32.mxu0 0.0
    %1900 = vmatmul.mubr.f32.gmra.mxu0 %v246
    %v1901 = vpop.f32.mrf.mxu0
    %v1902 = vadd.f32 0.0, %v1901
    %v1903 = vpop.f32.mrf.mxu0
    %1904 = vdwg.mxu0
    %v1906 = vsel %vm333, %v1731, 0
    %v1909 = vsel %vm333, %v1732, 0
    %v1912 = vsel %vm333, %v1733, 0
    %v1915 = vsel %vm333, %v1734, 0
    %1917 = vmatprep.subr.mxu0 0.0
    %1918 = vmatpush1.msra.mxu0 0.0
    %1919 = vmatprep.subr.mxu0 0.0
    %1920 = vmatpush1.msra.mxu0 0.0
    %1921 = vmatprep.subr.mxu0 0.0
    %1922 = vmatpush1.msra.mxu0 0.0
    %1923 = vmatprep.subr.mxu0 0.0
    %1924 = vmatpush1.msra.mxu0 0.0
    %1925 = vmatprep.subr.mxu0 0.0
    %1926 = vmatpush1.msra.mxu0 0.0
    %1927 = vmatprep.subr.mxu0 0.0
    %1928 = vmatpush1.msra.mxu0 0.0
    %1929 = vmatprep.subr.mxu0 0.0
    %1930 = vmatpush1.msra.mxu0 0.0
    %1931 = vmatprep.subr.mxu0 0.0
    %1932 = vmatpush1.msra.mxu0 0.0
    %1933 = vmatprep.subr.mxu0 0.0
    %1934 = vmatpush1.msra.mxu0 %v108
    %1935 = vmatprep.subr.mxu0 0.0
    %1936 = vmatpush1.msra.mxu0 %v107
    %1937 = vmatprep.subr.mxu0 0.0
    %1938 = vmatpush1.msra.mxu0 %v106
    %1939 = vmatprep.subr.mxu0 0.0
    %1940 = vmatpush1.msra.mxu0 %v105
    %1941 = vmatprep.subr.mxu0 0.0
    %1942 = vmatpush1.msra.mxu0 %v104
    %1943 = vmatprep.subr.mxu0 0.0
    %1944 = vmatpush1.msra.mxu0 %v103
    %1945 = vmatprep.subr.mxu0 0.0
    %1946 = vmatpush1.msra.mxu0 %v102
    %1947 = vmatprep.subr.mxu0 0.0
    %1948 = vmatpush1.msra.mxu0 %v101
    %1949 = vmatprep.subr.mxu0 0.0
    %1950 = vmatpush2.msra.mxu0 0.0
    %1951 = vmatprep.subr.mxu0 0.0
    %1952 = vmatpush2.msra.mxu0 0.0
    %1953 = vmatprep.subr.mxu0 0.0
    %1954 = vmatpush2.msra.mxu0 0.0
    %1955 = vmatprep.subr.mxu0 0.0
    %1956 = vmatpush2.msra.mxu0 0.0
    %1957 = vmatprep.subr.mxu0 0.0
    %1958 = vmatpush2.msra.mxu0 0.0
    %1959 = vmatprep.subr.mxu0 0.0
    %1960 = vmatpush2.msra.mxu0 0.0
    %1961 = vmatprep.subr.mxu0 0.0
    %1962 = vmatpush2.msra.mxu0 0.0
    %1963 = vmatprep.subr.mxu0 0.0
    %1964 = vmatpush2.msra.mxu0 0.0
    %1965 = vmatprep.subr.mxu0 0.0
    %1966 = vmatpush2.msra.mxu0 0.0
    %1967 = vmatprep.subr.mxu0 0.0
    %1968 = vmatpush2.msra.mxu0 0.0
    %1969 = vmatprep.subr.mxu0 0.0
    %1970 = vmatpush2.msra.mxu0 0.0
    %1971 = vmatprep.subr.mxu0 0.0
    %1972 = vmatpush2.msra.mxu0 0.0
    %1973 = vmatprep.subr.mxu0 0.0
    %1974 = vmatpush2.msra.mxu0 0.0
    %1975 = vmatprep.subr.mxu0 0.0
    %1976 = vmatpush2.msra.mxu0 0.0
    %1977 = vmatprep.subr.mxu0 0.0
    %1978 = vmatpush2.msra.mxu0 0.0
    %1979 = vmatprep.subr.mxu0 0.0
    %1980 = vmatpush2.msra.mxu0 0.0
    %1981 = vmatprep.mubr.f32.mxu0 0.0
    %1982 = vmatmul.mubr.f32.gmra.mxu0 %v1906
    %v1983 = vpop.f32.mrf.mxu0
    %v1984 = vadd.f32 0.0, %v1983
    %v1985 = vpop.f32.mrf.mxu0
    %1986 = vmatprep.mubr.f32.mxu0 0.0
    %1987 = vmatmul.mubr.f32.gmra.mxu0 %v1909
    %v1988 = vpop.f32.mrf.mxu0
    %v1989 = vadd.f32 0.0, %v1988
    %v1990 = vpop.f32.mrf.mxu0
    %1991 = vmatprep.mubr.f32.mxu0 0.0
    %1992 = vmatmul.mubr.f32.gmra.mxu0 %v1912
    %v1993 = vpop.f32.mrf.mxu0
    %v1994 = vadd.f32 0.0, %v1993
    %v1995 = vpop.f32.mrf.mxu0
    %1996 = vmatprep.mubr.f32.mxu0 0.0
    %1997 = vmatmul.mubr.f32.gmra.mxu0 %v1915
    %v1998 = vpop.f32.mrf.mxu0
    %v1999 = vadd.f32 0.0, %v1998
    %v2000 = vpop.f32.mrf.mxu0
    %2001 = vdwg.mxu0
    %v2003 = vsel %vm333, %v1802, 0
    %v2006 = vsel %vm333, %v1807, 0
    %v2009 = vsel %vm333, %v1812, 0
    %v2012 = vsel %vm333, %v1817, 0
    %2014 = vmatprep.subr.mxu0 0.0
    %2015 = vmatpush1.msra.mxu0 0.0
    %2016 = vmatprep.subr.mxu0 0.0
    %2017 = vmatpush1.msra.mxu0 0.0
    %2018 = vmatprep.subr.mxu0 0.0
    %2019 = vmatpush1.msra.mxu0 0.0
    %2020 = vmatprep.subr.mxu0 0.0
    %2021 = vmatpush1.msra.mxu0 0.0
    %2022 = vmatprep.subr.mxu0 0.0
    %2023 = vmatpush1.msra.mxu0 0.0
    %2024 = vmatprep.subr.mxu0 0.0
    %2025 = vmatpush1.msra.mxu0 0.0
    %2026 = vmatprep.subr.mxu0 0.0
    %2027 = vmatpush1.msra.mxu0 0.0
    %2028 = vmatprep.subr.mxu0 0.0
    %2029 = vmatpush1.msra.mxu0 0.0
    %2030 = vmatprep.subr.mxu0 0.0
    %2031 = vmatpush1.msra.mxu0 %v99
    %2032 = vmatprep.subr.mxu0 0.0
    %2033 = vmatpush1.msra.mxu0 %v98
    %2034 = vmatprep.subr.mxu0 0.0
    %2035 = vmatpush1.msra.mxu0 %v97
    %2036 = vmatprep.subr.mxu0 0.0
    %2037 = vmatpush1.msra.mxu0 %v96
    %2038 = vmatprep.subr.mxu0 0.0
    %2039 = vmatpush1.msra.mxu0 %v95
    %2040 = vmatprep.subr.mxu0 0.0
    %2041 = vmatpush1.msra.mxu0 %v94
    %2042 = vmatprep.subr.mxu0 0.0
    %2043 = vmatpush1.msra.mxu0 %v93
    %2044 = vmatprep.subr.mxu0 0.0
    %2045 = vmatpush1.msra.mxu0 %v92
    %2046 = vmatprep.subr.mxu0 0.0
    %2047 = vmatpush2.msra.mxu0 0.0
    %2048 = vmatprep.subr.mxu0 0.0
    %2049 = vmatpush2.msra.mxu0 0.0
    %2050 = vmatprep.subr.mxu0 0.0
    %2051 = vmatpush2.msra.mxu0 0.0
    %2052 = vmatprep.subr.mxu0 0.0
    %2053 = vmatpush2.msra.mxu0 0.0
    %2054 = vmatprep.subr.mxu0 0.0
    %2055 = vmatpush2.msra.mxu0 0.0
    %2056 = vmatprep.subr.mxu0 0.0
    %2057 = vmatpush2.msra.mxu0 0.0
    %2058 = vmatprep.subr.mxu0 0.0
    %2059 = vmatpush2.msra.mxu0 0.0
    %2060 = vmatprep.subr.mxu0 0.0
    %2061 = vmatpush2.msra.mxu0 0.0
    %2062 = vmatprep.subr.mxu0 0.0
    %2063 = vmatpush2.msra.mxu0 0.0
    %2064 = vmatprep.subr.mxu0 0.0
    %2065 = vmatpush2.msra.mxu0 0.0
    %2066 = vmatprep.subr.mxu0 0.0
    %2067 = vmatpush2.msra.mxu0 0.0
    %2068 = vmatprep.subr.mxu0 0.0
    %2069 = vmatpush2.msra.mxu0 0.0
    %2070 = vmatprep.subr.mxu0 0.0
    %2071 = vmatpush2.msra.mxu0 0.0
    %2072 = vmatprep.subr.mxu0 0.0
    %2073 = vmatpush2.msra.mxu0 0.0
    %2074 = vmatprep.subr.mxu0 0.0
    %2075 = vmatpush2.msra.mxu0 0.0
    %2076 = vmatprep.subr.mxu0 0.0
    %2077 = vmatpush2.msra.mxu0 0.0
    %2078 = vmatprep.mubr.f32.mxu0 0.0
    %2079 = vmatmul.mubr.f32.gmra.mxu0 %v2003
    %v2080 = vpop.f32.mrf.mxu0
    %v2081 = vadd.f32 %v1984, %v2080
    %v2082 = vpop.f32.mrf.mxu0
    %2083 = vmatprep.mubr.f32.mxu0 0.0
    %2084 = vmatmul.mubr.f32.gmra.mxu0 %v2006
    %v2085 = vpop.f32.mrf.mxu0
    %v2086 = vadd.f32 %v1989, %v2085
    %v2087 = vpop.f32.mrf.mxu0
    %2088 = vmatprep.mubr.f32.mxu0 0.0
    %2089 = vmatmul.mubr.f32.gmra.mxu0 %v2009
    %v2090 = vpop.f32.mrf.mxu0
    %v2091 = vadd.f32 %v1994, %v2090
    %v2092 = vpop.f32.mrf.mxu0
    %2093 = vmatprep.mubr.f32.mxu0 0.0
    %2094 = vmatmul.mubr.f32.gmra.mxu0 %v2012
    %v2095 = vpop.f32.mrf.mxu0
    %v2096 = vadd.f32 %v1999, %v2095
    %v2097 = vpop.f32.mrf.mxu0
    %2098 = vdwg.mxu0
    %v2100 = vsel %vm333, %v1887, 0
    %v2103 = vsel %vm333, %v1892, 0
    %v2106 = vsel %vm333, %v1897, 0
    %v2109 = vsel %vm333, %v1902, 0
    %2111 = vmatprep.subr.mxu0 0.0
    %2112 = vmatpush1.msra.mxu0 0.0
    %2113 = vmatprep.subr.mxu0 0.0
    %2114 = vmatpush1.msra.mxu0 0.0
    %2115 = vmatprep.subr.mxu0 0.0
    %2116 = vmatpush1.msra.mxu0 0.0
    %2117 = vmatprep.subr.mxu0 0.0
    %2118 = vmatpush1.msra.mxu0 0.0
    %2119 = vmatprep.subr.mxu0 0.0
    %2120 = vmatpush1.msra.mxu0 0.0
    %2121 = vmatprep.subr.mxu0 0.0
    %2122 = vmatpush1.msra.mxu0 0.0
    %2123 = vmatprep.subr.mxu0 0.0
    %2124 = vmatpush1.msra.mxu0 0.0
    %2125 = vmatprep.subr.mxu0 0.0
    %2126 = vmatpush1.msra.mxu0 0.0
    %2127 = vmatprep.subr.mxu0 0.0
    %2128 = vmatpush1.msra.mxu0 %v117
    %2129 = vmatprep.subr.mxu0 0.0
    %2130 = vmatpush1.msra.mxu0 %v116
    %2131 = vmatprep.subr.mxu0 0.0
    %2132 = vmatpush1.msra.mxu0 %v115
    %2133 = vmatprep.subr.mxu0 0.0
    %2134 = vmatpush1.msra.mxu0 %v114
    %2135 = vmatprep.subr.mxu0 0.0
    %2136 = vmatpush1.msra.mxu0 %v113
    %2137 = vmatprep.subr.mxu0 0.0
    %2138 = vmatpush1.msra.mxu0 %v112
    %2139 = vmatprep.subr.mxu0 0.0
    %2140 = vmatpush1.msra.mxu0 %v111
    %2141 = vmatprep.subr.mxu0 0.0
    %2142 = vmatpush1.msra.mxu0 %v110
    %2143 = vmatprep.subr.mxu0 0.0
    %2144 = vmatpush2.msra.mxu0 0.0
    %2145 = vmatprep.subr.mxu0 0.0
    %2146 = vmatpush2.msra.mxu0 0.0
    %2147 = vmatprep.subr.mxu0 0.0
    %2148 = vmatpush2.msra.mxu0 0.0
    %2149 = vmatprep.subr.mxu0 0.0
    %2150 = vmatpush2.msra.mxu0 0.0
    %2151 = vmatprep.subr.mxu0 0.0
    %2152 = vmatpush2.msra.mxu0 0.0
    %2153 = vmatprep.subr.mxu0 0.0
    %2154 = vmatpush2.msra.mxu0 0.0
    %2155 = vmatprep.subr.mxu0 0.0
    %2156 = vmatpush2.msra.mxu0 0.0
    %2157 = vmatprep.subr.mxu0 0.0
    %2158 = vmatpush2.msra.mxu0 0.0
    %2159 = vmatprep.subr.mxu0 0.0
    %2160 = vmatpush2.msra.mxu0 0.0
    %2161 = vmatprep.subr.mxu0 0.0
    %2162 = vmatpush2.msra.mxu0 0.0
    %2163 = vmatprep.subr.mxu0 0.0
    %2164 = vmatpush2.msra.mxu0 0.0
    %2165 = vmatprep.subr.mxu0 0.0
    %2166 = vmatpush2.msra.mxu0 0.0
    %2167 = vmatprep.subr.mxu0 0.0
    %2168 = vmatpush2.msra.mxu0 0.0
    %2169 = vmatprep.subr.mxu0 0.0
    %2170 = vmatpush2.msra.mxu0 0.0
    %2171 = vmatprep.subr.mxu0 0.0
    %2172 = vmatpush2.msra.mxu0 0.0
    %2173 = vmatprep.subr.mxu0 0.0
    %2174 = vmatpush2.msra.mxu0 0.0
    %2175 = vmatprep.mubr.f32.mxu0 0.0
    %2176 = vmatmul.mubr.f32.gmra.mxu0 %v2100
    %v2177 = vpop.f32.mrf.mxu0
    %v2178 = vadd.f32 0.0, %v2177
    %v2179 = vpop.f32.mrf.mxu0
    %2180 = vmatprep.mubr.f32.mxu0 0.0
    %2181 = vmatmul.mubr.f32.gmra.mxu0 %v2103
    %v2182 = vpop.f32.mrf.mxu0
    %v2183 = vadd.f32 0.0, %v2182
    %v2184 = vpop.f32.mrf.mxu0
    %2185 = vmatprep.mubr.f32.mxu0 0.0
    %2186 = vmatmul.mubr.f32.gmra.mxu0 %v2106
    %v2187 = vpop.f32.mrf.mxu0
    %v2188 = vadd.f32 0.0, %v2187
    %v2189 = vpop.f32.mrf.mxu0
    %2190 = vmatprep.mubr.f32.mxu0 0.0
    %2191 = vmatmul.mubr.f32.gmra.mxu0 %v2109
    %v2192 = vpop.f32.mrf.mxu0
    %v2193 = vadd.f32 0.0, %v2192
    %v2194 = vpop.f32.mrf.mxu0
    %2195 = vdwg.mxu0
    %v2196 = vadd.f32 %v2081, %v2178
    %v2197 = vadd.f32 %v2086, %v2183
    %v2198 = vadd.f32 %v2091, %v2188
    %v2199 = vadd.f32 %v2096, %v2193
    %v2200 = vadd.f32 %v2196, %v132
    %v2201 = vadd.f32 %v2197, %v132
    %v2202 = vadd.f32 %v2198, %v132
    %v2203 = vadd.f32 %v2199, %v132
    %s2204 = sld [smem:[#allocation11 + $0x3]]
    %s2205 = sld [smem:[#allocation11 + $0x83]]
    %s2206 = sld [smem:[#allocation11 + $0x103]]
    %s2207 = sld [smem:[#allocation11 + $0x183]]
    %s2208 = sld [smem:[#allocation11 + $0x203]]
    %v2209 = vstv %s2204
    %v2210 = vmul.f32 %v2209, %v1731
    %v2211 = vmul.f32 %v2209, %v1732
    %v2212 = vmul.f32 %v2209, %v1733
    %v2213 = vmul.f32 %v2209, %v1734
    %v2214 = vstv %s2205
    %v2215 = vmul.f32 %v2214, %v2200
    %v2216 = vmul.f32 %v2214, %v2201
    %v2217 = vmul.f32 %v2214, %v2202
    %v2218 = vmul.f32 %v2214, %v2203
    %v2219 = vsub.f32 %v2210, %v2215
    %v2220 = vsub.f32 %v2211, %v2216
    %v2221 = vsub.f32 %v2212, %v2217
    %v2222 = vsub.f32 %v2213, %v2218
    %v2223 = vmax.f32 %v2219, -1.0
    %v2224 = vmax.f32 %v2220, -1.0
    %v2225 = vmax.f32 %v2221, -1.0
    %v2226 = vmax.f32 %v2222, -1.0
    %v2227 = vmin.f32 %v2223, 1.0
    %v2228 = vmin.f32 %v2224, 1.0
    %v2229 = vmin.f32 %v2225, 1.0
    %v2230 = vmin.f32 %v2226, 1.0
    %v2231 = vstv %s2206
    %v2232 = vmul.f32 %v2231, %v2227
    %v2233 = vmul.f32 %v2231, %v2228
    %v2234 = vmul.f32 %v2231, %v2229
    %v2235 = vmul.f32 %v2231, %v2230
    %v2236 = vstv %s2207
    %v2237 = vmul.f32 %v2236, %v1731
    %v2238 = vmul.f32 %v2236, %v1732
    %v2239 = vmul.f32 %v2236, %v1733
    %v2240 = vmul.f32 %v2236, %v1734
    %v2241 = vadd.f32 %v2232, %v2237
    %v2242 = vadd.f32 %v2233, %v2238
    %v2243 = vadd.f32 %v2234, %v2239
    %v2244 = vadd.f32 %v2235, %v2240
    %s2245 = scalar_lea.vmem [#allocation6], 96
    %v2246 = vld [vmem:[%s2245] sm:$0xff]
    %v2247 = vld [vmem:[%s2245 + $0x8] sm:$0xff]
    %v2248 = vld [vmem:[%s2245 + $0x10] sm:$0xff]
    %v2249 = vld [vmem:[%s2245 + $0x18] sm:$0xff]
    %v2250 = vstv %s2208
    %v2251 = vmul.f32 %v2250, %v2246
    %v2252 = vmul.f32 %v2250, %v2247
    %v2253 = vmul.f32 %v2250, %v2248
    %v2254 = vmul.f32 %v2250, %v2249
    %v2255 = vadd.f32 %v2241, %v2251
    %v2256 = vadd.f32 %v2242, %v2252
    %v2257 = vadd.f32 %v2243, %v2253
    %v2258 = vadd.f32 %v2244, %v2254
    %2259 = vmatprep.subr.mxu0 0.0
    %2260 = vmatpush1.msra.mxu0 0.0
    %2261 = vmatprep.subr.mxu0 0.0
    %2262 = vmatpush1.msra.mxu0 0.0
    %2263 = vmatprep.subr.mxu0 0.0
    %2264 = vmatpush1.msra.mxu0 0.0
    %2265 = vmatprep.subr.mxu0 0.0
    %2266 = vmatpush1.msra.mxu0 0.0
    %2267 = vmatprep.subr.mxu0 0.0
    %2268 = vmatpush1.msra.mxu0 0.0
    %2269 = vmatprep.subr.mxu0 0.0
    %2270 = vmatpush1.msra.mxu0 0.0
    %2271 = vmatprep.subr.mxu0 0.0
    %2272 = vmatpush1.msra.mxu0 0.0
    %2273 = vmatprep.subr.mxu0 0.0
    %2274 = vmatpush1.msra.mxu0 0.0
    %2275 = vmatprep.subr.mxu0 0.0
    %2276 = vmatpush1.msra.mxu0 0.0
    %2277 = vmatprep.subr.mxu0 0.0
    %2278 = vmatpush1.msra.mxu0 0.0
    %2279 = vmatprep.subr.mxu0 0.0
    %2280 = vmatpush1.msra.mxu0 0.0
    %2281 = vmatprep.subr.mxu0 0.0
    %2282 = vmatpush1.msra.mxu0 0.0
    %2283 = vmatprep.subr.mxu0 0.0
    %2284 = vmatpush1.msra.mxu0 %v2258
    %2285 = vmatprep.subr.mxu0 0.0
    %2286 = vmatpush1.msra.mxu0 %v2257
    %2287 = vmatprep.subr.mxu0 0.0
    %2288 = vmatpush1.msra.mxu0 %v2256
    %2289 = vmatprep.subr.mxu0 0.0
    %2290 = vmatpush1.msra.mxu0 %v2255
    %2291 = vmatprep.subr.mxu0 0.0
    %2292 = vmatpush2.msra.mxu0 0.0
    %2293 = vmatprep.subr.mxu0 0.0
    %2294 = vmatpush2.msra.mxu0 0.0
    %2295 = vmatprep.subr.mxu0 0.0
    %2296 = vmatpush2.msra.mxu0 0.0
    %2297 = vmatprep.subr.mxu0 0.0
    %2298 = vmatpush2.msra.mxu0 0.0
    %2299 = vmatprep.subr.mxu0 0.0
    %2300 = vmatpush2.msra.mxu0 0.0
    %2301 = vmatprep.subr.mxu0 0.0
    %2302 = vmatpush2.msra.mxu0 0.0
    %2303 = vmatprep.subr.mxu0 0.0
    %2304 = vmatpush2.msra.mxu0 0.0
    %2305 = vmatprep.subr.mxu0 0.0
    %2306 = vmatpush2.msra.mxu0 0.0
    %2307 = vmatprep.subr.mxu0 0.0
    %2308 = vmatpush2.msra.mxu0 0.0
    %2309 = vmatprep.subr.mxu0 0.0
    %2310 = vmatpush2.msra.mxu0 0.0
    %2311 = vmatprep.subr.mxu0 0.0
    %2312 = vmatpush2.msra.mxu0 0.0
    %2313 = vmatprep.subr.mxu0 0.0
    %2314 = vmatpush2.msra.mxu0 0.0
    %2315 = vmatprep.subr.mxu0 0.0
    %2316 = vmatpush2.msra.mxu0 0.0
    %2317 = vmatprep.subr.mxu0 0.0
    %2318 = vmatpush2.msra.mxu0 0.0
    %2319 = vmatprep.subr.mxu0 0.0
    %2320 = vmatpush2.msra.mxu0 0.0
    %2321 = vmatprep.subr.mxu0 0.0
    %2322 = vmatpush2.msra.mxu0 0.0
    %2323 = vmatprep.mubr.f32.mxu0 0.0
    %2324 = vmatmul.mubr.f32.gmra.mxu0 %v140
    %v2325 = vpop.f32.mrf.mxu0
    %v2326 = vadd.f32 0.0, %v2325
    %v2327 = vpop.f32.mrf.mxu0
    %2328 = vmatprep.mubr.f32.mxu0 0.0
    %2329 = vmatmul.mubr.f32.gmra.mxu0 %v143
    %v2330 = vpop.f32.mrf.mxu0
    %v2331 = vadd.f32 0.0, %v2330
    %v2332 = vpop.f32.mrf.mxu0
    %2333 = vmatprep.mubr.f32.mxu0 0.0
    %2334 = vmatmul.mubr.f32.gmra.mxu0 %v146
    %v2335 = vpop.f32.mrf.mxu0
    %v2336 = vadd.f32 0.0, %v2335
    %v2337 = vpop.f32.mrf.mxu0
    %2338 = vmatprep.mubr.f32.mxu0 0.0
    %2339 = vmatmul.mubr.f32.gmra.mxu0 %v149
    %v2340 = vpop.f32.mrf.mxu0
    %v2341 = vadd.f32 0.0, %v2340
    %v2342 = vpop.f32.mrf.mxu0
    %2343 = vdwg.mxu0
    %2344 = vmatprep.subr.mxu0 0.0
    %2345 = vmatpush1.msra.mxu0 0.0
    %2346 = vmatprep.subr.mxu0 0.0
    %2347 = vmatpush1.msra.mxu0 0.0
    %2348 = vmatprep.subr.mxu0 0.0
    %2349 = vmatpush1.msra.mxu0 0.0
    %2350 = vmatprep.subr.mxu0 0.0
    %2351 = vmatpush1.msra.mxu0 0.0
    %2352 = vmatprep.subr.mxu0 0.0
    %2353 = vmatpush1.msra.mxu0 0.0
    %2354 = vmatprep.subr.mxu0 0.0
    %2355 = vmatpush1.msra.mxu0 0.0
    %2356 = vmatprep.subr.mxu0 0.0
    %2357 = vmatpush1.msra.mxu0 0.0
    %2358 = vmatprep.subr.mxu0 0.0
    %2359 = vmatpush1.msra.mxu0 0.0
    %2360 = vmatprep.subr.mxu0 0.0
    %2361 = vmatpush1.msra.mxu0 0.0
    %2362 = vmatprep.subr.mxu0 0.0
    %2363 = vmatpush1.msra.mxu0 0.0
    %2364 = vmatprep.subr.mxu0 0.0
    %2365 = vmatpush1.msra.mxu0 0.0
    %2366 = vmatprep.subr.mxu0 0.0
    %2367 = vmatpush1.msra.mxu0 0.0
    %2368 = vmatprep.subr.mxu0 0.0
    %2369 = vmatpush1.msra.mxu0 %v2258
    %2370 = vmatprep.subr.mxu0 0.0
    %2371 = vmatpush1.msra.mxu0 %v2257
    %2372 = vmatprep.subr.mxu0 0.0
    %2373 = vmatpush1.msra.mxu0 %v2256
    %2374 = vmatprep.subr.mxu0 0.0
    %2375 = vmatpush1.msra.mxu0 %v2255
    %2376 = vmatprep.subr.mxu0 0.0
    %2377 = vmatpush2.msra.mxu0 0.0
    %2378 = vmatprep.subr.mxu0 0.0
    %2379 = vmatpush2.msra.mxu0 0.0
    %2380 = vmatprep.subr.mxu0 0.0
    %2381 = vmatpush2.msra.mxu0 0.0
    %2382 = vmatprep.subr.mxu0 0.0
    %2383 = vmatpush2.msra.mxu0 0.0
    %2384 = vmatprep.subr.mxu0 0.0
    %2385 = vmatpush2.msra.mxu0 0.0
    %2386 = vmatprep.subr.mxu0 0.0
    %2387 = vmatpush2.msra.mxu0 0.0
    %2388 = vmatprep.subr.mxu0 0.0
    %2389 = vmatpush2.msra.mxu0 0.0
    %2390 = vmatprep.subr.mxu0 0.0
    %2391 = vmatpush2.msra.mxu0 0.0
    %2392 = vmatprep.subr.mxu0 0.0
    %2393 = vmatpush2.msra.mxu0 0.0
    %2394 = vmatprep.subr.mxu0 0.0
    %2395 = vmatpush2.msra.mxu0 0.0
    %2396 = vmatprep.subr.mxu0 0.0
    %2397 = vmatpush2.msra.mxu0 0.0
    %2398 = vmatprep.subr.mxu0 0.0
    %2399 = vmatpush2.msra.mxu0 0.0
    %2400 = vmatprep.subr.mxu0 0.0
    %2401 = vmatpush2.msra.mxu0 0.0
    %2402 = vmatprep.subr.mxu0 0.0
    %2403 = vmatpush2.msra.mxu0 0.0
    %2404 = vmatprep.subr.mxu0 0.0
    %2405 = vmatpush2.msra.mxu0 0.0
    %2406 = vmatprep.subr.mxu0 0.0
    %2407 = vmatpush2.msra.mxu0 0.0
    %2408 = vmatprep.mubr.f32.mxu0 0.0
    %2409 = vmatmul.mubr.f32.gmra.mxu0 %v237
    %v2410 = vpop.f32.mrf.mxu0
    %v2411 = vadd.f32 0.0, %v2410
    %v2412 = vpop.f32.mrf.mxu0
    %2413 = vmatprep.mubr.f32.mxu0 0.0
    %2414 = vmatmul.mubr.f32.gmra.mxu0 %v240
    %v2415 = vpop.f32.mrf.mxu0
    %v2416 = vadd.f32 0.0, %v2415
    %v2417 = vpop.f32.mrf.mxu0
    %2418 = vmatprep.mubr.f32.mxu0 0.0
    %2419 = vmatmul.mubr.f32.gmra.mxu0 %v243
    %v2420 = vpop.f32.mrf.mxu0
    %v2421 = vadd.f32 0.0, %v2420
    %v2422 = vpop.f32.mrf.mxu0
    %2423 = vmatprep.mubr.f32.mxu0 0.0
    %2424 = vmatmul.mubr.f32.gmra.mxu0 %v246
    %v2425 = vpop.f32.mrf.mxu0
    %v2426 = vadd.f32 0.0, %v2425
    %v2427 = vpop.f32.mrf.mxu0
    %2428 = vdwg.mxu0
    %v2430 = vsel %vm333, %v2255, 0
    %v2433 = vsel %vm333, %v2256, 0
    %v2436 = vsel %vm333, %v2257, 0
    %v2439 = vsel %vm333, %v2258, 0
    %2441 = vmatprep.subr.mxu0 0.0
    %2442 = vmatpush1.msra.mxu0 0.0
    %2443 = vmatprep.subr.mxu0 0.0
    %2444 = vmatpush1.msra.mxu0 0.0
    %2445 = vmatprep.subr.mxu0 0.0
    %2446 = vmatpush1.msra.mxu0 0.0
    %2447 = vmatprep.subr.mxu0 0.0
    %2448 = vmatpush1.msra.mxu0 0.0
    %2449 = vmatprep.subr.mxu0 0.0
    %2450 = vmatpush1.msra.mxu0 0.0
    %2451 = vmatprep.subr.mxu0 0.0
    %2452 = vmatpush1.msra.mxu0 0.0
    %2453 = vmatprep.subr.mxu0 0.0
    %2454 = vmatpush1.msra.mxu0 0.0
    %2455 = vmatprep.subr.mxu0 0.0
    %2456 = vmatpush1.msra.mxu0 0.0
    %2457 = vmatprep.subr.mxu0 0.0
    %2458 = vmatpush1.msra.mxu0 %v108
    %2459 = vmatprep.subr.mxu0 0.0
    %2460 = vmatpush1.msra.mxu0 %v107
    %2461 = vmatprep.subr.mxu0 0.0
    %2462 = vmatpush1.msra.mxu0 %v106
    %2463 = vmatprep.subr.mxu0 0.0
    %2464 = vmatpush1.msra.mxu0 %v105
    %2465 = vmatprep.subr.mxu0 0.0
    %2466 = vmatpush1.msra.mxu0 %v104
    %2467 = vmatprep.subr.mxu0 0.0
    %2468 = vmatpush1.msra.mxu0 %v103
    %2469 = vmatprep.subr.mxu0 0.0
    %2470 = vmatpush1.msra.mxu0 %v102
    %2471 = vmatprep.subr.mxu0 0.0
    %2472 = vmatpush1.msra.mxu0 %v101
    %2473 = vmatprep.subr.mxu0 0.0
    %2474 = vmatpush2.msra.mxu0 0.0
    %2475 = vmatprep.subr.mxu0 0.0
    %2476 = vmatpush2.msra.mxu0 0.0
    %2477 = vmatprep.subr.mxu0 0.0
    %2478 = vmatpush2.msra.mxu0 0.0
    %2479 = vmatprep.subr.mxu0 0.0
    %2480 = vmatpush2.msra.mxu0 0.0
    %2481 = vmatprep.subr.mxu0 0.0
    %2482 = vmatpush2.msra.mxu0 0.0
    %2483 = vmatprep.subr.mxu0 0.0
    %2484 = vmatpush2.msra.mxu0 0.0
    %2485 = vmatprep.subr.mxu0 0.0
    %2486 = vmatpush2.msra.mxu0 0.0
    %2487 = vmatprep.subr.mxu0 0.0
    %2488 = vmatpush2.msra.mxu0 0.0
    %2489 = vmatprep.subr.mxu0 0.0
    %2490 = vmatpush2.msra.mxu0 0.0
    %2491 = vmatprep.subr.mxu0 0.0
    %2492 = vmatpush2.msra.mxu0 0.0
    %2493 = vmatprep.subr.mxu0 0.0
    %2494 = vmatpush2.msra.mxu0 0.0
    %2495 = vmatprep.subr.mxu0 0.0
    %2496 = vmatpush2.msra.mxu0 0.0
    %2497 = vmatprep.subr.mxu0 0.0
    %2498 = vmatpush2.msra.mxu0 0.0
    %2499 = vmatprep.subr.mxu0 0.0
    %2500 = vmatpush2.msra.mxu0 0.0
    %2501 = vmatprep.subr.mxu0 0.0
    %2502 = vmatpush2.msra.mxu0 0.0
    %2503 = vmatprep.subr.mxu0 0.0
    %2504 = vmatpush2.msra.mxu0 0.0
    %2505 = vmatprep.mubr.f32.mxu0 0.0
    %2506 = vmatmul.mubr.f32.gmra.mxu0 %v2430
    %v2507 = vpop.f32.mrf.mxu0
    %v2508 = vadd.f32 0.0, %v2507
    %v2509 = vpop.f32.mrf.mxu0
    %2510 = vmatprep.mubr.f32.mxu0 0.0
    %2511 = vmatmul.mubr.f32.gmra.mxu0 %v2433
    %v2512 = vpop.f32.mrf.mxu0
    %v2513 = vadd.f32 0.0, %v2512
    %v2514 = vpop.f32.mrf.mxu0
    %2515 = vmatprep.mubr.f32.mxu0 0.0
    %2516 = vmatmul.mubr.f32.gmra.mxu0 %v2436
    %v2517 = vpop.f32.mrf.mxu0
    %v2518 = vadd.f32 0.0, %v2517
    %v2519 = vpop.f32.mrf.mxu0
    %2520 = vmatprep.mubr.f32.mxu0 0.0
    %2521 = vmatmul.mubr.f32.gmra.mxu0 %v2439
    %v2522 = vpop.f32.mrf.mxu0
    %v2523 = vadd.f32 0.0, %v2522
    %v2524 = vpop.f32.mrf.mxu0
    %2525 = vdwg.mxu0
    %v2527 = vsel %vm333, %v2326, 0
    %v2530 = vsel %vm333, %v2331, 0
    %v2533 = vsel %vm333, %v2336, 0
    %v2536 = vsel %vm333, %v2341, 0
    %2538 = vmatprep.subr.mxu0 0.0
    %2539 = vmatpush1.msra.mxu0 0.0
    %2540 = vmatprep.subr.mxu0 0.0
    %2541 = vmatpush1.msra.mxu0 0.0
    %2542 = vmatprep.subr.mxu0 0.0
    %2543 = vmatpush1.msra.mxu0 0.0
    %2544 = vmatprep.subr.mxu0 0.0
    %2545 = vmatpush1.msra.mxu0 0.0
    %2546 = vmatprep.subr.mxu0 0.0
    %2547 = vmatpush1.msra.mxu0 0.0
    %2548 = vmatprep.subr.mxu0 0.0
    %2549 = vmatpush1.msra.mxu0 0.0
    %2550 = vmatprep.subr.mxu0 0.0
    %2551 = vmatpush1.msra.mxu0 0.0
    %2552 = vmatprep.subr.mxu0 0.0
    %2553 = vmatpush1.msra.mxu0 0.0
    %2554 = vmatprep.subr.mxu0 0.0
    %2555 = vmatpush1.msra.mxu0 %v99
    %2556 = vmatprep.subr.mxu0 0.0
    %2557 = vmatpush1.msra.mxu0 %v98
    %2558 = vmatprep.subr.mxu0 0.0
    %2559 = vmatpush1.msra.mxu0 %v97
    %2560 = vmatprep.subr.mxu0 0.0
    %2561 = vmatpush1.msra.mxu0 %v96
    %2562 = vmatprep.subr.mxu0 0.0
    %2563 = vmatpush1.msra.mxu0 %v95
    %2564 = vmatprep.subr.mxu0 0.0
    %2565 = vmatpush1.msra.mxu0 %v94
    %2566 = vmatprep.subr.mxu0 0.0
    %2567 = vmatpush1.msra.mxu0 %v93
    %2568 = vmatprep.subr.mxu0 0.0
    %2569 = vmatpush1.msra.mxu0 %v92
    %2570 = vmatprep.subr.mxu0 0.0
    %2571 = vmatpush2.msra.mxu0 0.0
    %2572 = vmatprep.subr.mxu0 0.0
    %2573 = vmatpush2.msra.mxu0 0.0
    %2574 = vmatprep.subr.mxu0 0.0
    %2575 = vmatpush2.msra.mxu0 0.0
    %2576 = vmatprep.subr.mxu0 0.0
    %2577 = vmatpush2.msra.mxu0 0.0
    %2578 = vmatprep.subr.mxu0 0.0
    %2579 = vmatpush2.msra.mxu0 0.0
    %2580 = vmatprep.subr.mxu0 0.0
    %2581 = vmatpush2.msra.mxu0 0.0
    %2582 = vmatprep.subr.mxu0 0.0
    %2583 = vmatpush2.msra.mxu0 0.0
    %2584 = vmatprep.subr.mxu0 0.0
    %2585 = vmatpush2.msra.mxu0 0.0
    %2586 = vmatprep.subr.mxu0 0.0
    %2587 = vmatpush2.msra.mxu0 0.0
    %2588 = vmatprep.subr.mxu0 0.0
    %2589 = vmatpush2.msra.mxu0 0.0
    %2590 = vmatprep.subr.mxu0 0.0
    %2591 = vmatpush2.msra.mxu0 0.0
    %2592 = vmatprep.subr.mxu0 0.0
    %2593 = vmatpush2.msra.mxu0 0.0
    %2594 = vmatprep.subr.mxu0 0.0
    %2595 = vmatpush2.msra.mxu0 0.0
    %2596 = vmatprep.subr.mxu0 0.0
    %2597 = vmatpush2.msra.mxu0 0.0
    %2598 = vmatprep.subr.mxu0 0.0
    %2599 = vmatpush2.msra.mxu0 0.0
    %2600 = vmatprep.subr.mxu0 0.0
    %2601 = vmatpush2.msra.mxu0 0.0
    %2602 = vmatprep.mubr.f32.mxu0 0.0
    %2603 = vmatmul.mubr.f32.gmra.mxu0 %v2527
    %v2604 = vpop.f32.mrf.mxu0
    %v2605 = vadd.f32 %v2508, %v2604
    %v2606 = vpop.f32.mrf.mxu0
    %2607 = vmatprep.mubr.f32.mxu0 0.0
    %2608 = vmatmul.mubr.f32.gmra.mxu0 %v2530
    %v2609 = vpop.f32.mrf.mxu0
    %v2610 = vadd.f32 %v2513, %v2609
    %v2611 = vpop.f32.mrf.mxu0
    %2612 = vmatprep.mubr.f32.mxu0 0.0
    %2613 = vmatmul.mubr.f32.gmra.mxu0 %v2533
    %v2614 = vpop.f32.mrf.mxu0
    %v2615 = vadd.f32 %v2518, %v2614
    %v2616 = vpop.f32.mrf.mxu0
    %2617 = vmatprep.mubr.f32.mxu0 0.0
    %2618 = vmatmul.mubr.f32.gmra.mxu0 %v2536
    %v2619 = vpop.f32.mrf.mxu0
    %v2620 = vadd.f32 %v2523, %v2619
    %v2621 = vpop.f32.mrf.mxu0
    %2622 = vdwg.mxu0
    %v2624 = vsel %vm333, %v2411, 0
    %v2627 = vsel %vm333, %v2416, 0
    %v2630 = vsel %vm333, %v2421, 0
    %v2633 = vsel %vm333, %v2426, 0
    %2635 = vmatprep.subr.mxu0 0.0
    %2636 = vmatpush1.msra.mxu0 0.0
    %2637 = vmatprep.subr.mxu0 0.0
    %2638 = vmatpush1.msra.mxu0 0.0
    %2639 = vmatprep.subr.mxu0 0.0
    %2640 = vmatpush1.msra.mxu0 0.0
    %2641 = vmatprep.subr.mxu0 0.0
    %2642 = vmatpush1.msra.mxu0 0.0
    %2643 = vmatprep.subr.mxu0 0.0
    %2644 = vmatpush1.msra.mxu0 0.0
    %2645 = vmatprep.subr.mxu0 0.0
    %2646 = vmatpush1.msra.mxu0 0.0
    %2647 = vmatprep.subr.mxu0 0.0
    %2648 = vmatpush1.msra.mxu0 0.0
    %2649 = vmatprep.subr.mxu0 0.0
    %2650 = vmatpush1.msra.mxu0 0.0
    %2651 = vmatprep.subr.mxu0 0.0
    %2652 = vmatpush1.msra.mxu0 %v117
    %2653 = vmatprep.subr.mxu0 0.0
    %2654 = vmatpush1.msra.mxu0 %v116
    %2655 = vmatprep.subr.mxu0 0.0
    %2656 = vmatpush1.msra.mxu0 %v115
    %2657 = vmatprep.subr.mxu0 0.0
    %2658 = vmatpush1.msra.mxu0 %v114
    %2659 = vmatprep.subr.mxu0 0.0
    %2660 = vmatpush1.msra.mxu0 %v113
    %2661 = vmatprep.subr.mxu0 0.0
    %2662 = vmatpush1.msra.mxu0 %v112
    %2663 = vmatprep.subr.mxu0 0.0
    %2664 = vmatpush1.msra.mxu0 %v111
    %2665 = vmatprep.subr.mxu0 0.0
    %2666 = vmatpush1.msra.mxu0 %v110
    %2667 = vmatprep.subr.mxu0 0.0
    %2668 = vmatpush2.msra.mxu0 0.0
    %2669 = vmatprep.subr.mxu0 0.0
    %2670 = vmatpush2.msra.mxu0 0.0
    %2671 = vmatprep.subr.mxu0 0.0
    %2672 = vmatpush2.msra.mxu0 0.0
    %2673 = vmatprep.subr.mxu0 0.0
    %2674 = vmatpush2.msra.mxu0 0.0
    %2675 = vmatprep.subr.mxu0 0.0
    %2676 = vmatpush2.msra.mxu0 0.0
    %2677 = vmatprep.subr.mxu0 0.0
    %2678 = vmatpush2.msra.mxu0 0.0
    %2679 = vmatprep.subr.mxu0 0.0
    %2680 = vmatpush2.msra.mxu0 0.0
    %2681 = vmatprep.subr.mxu0 0.0
    %2682 = vmatpush2.msra.mxu0 0.0
    %2683 = vmatprep.subr.mxu0 0.0
    %2684 = vmatpush2.msra.mxu0 0.0
    %2685 = vmatprep.subr.mxu0 0.0
    %2686 = vmatpush2.msra.mxu0 0.0
    %2687 = vmatprep.subr.mxu0 0.0
    %2688 = vmatpush2.msra.mxu0 0.0
    %2689 = vmatprep.subr.mxu0 0.0
    %2690 = vmatpush2.msra.mxu0 0.0
    %2691 = vmatprep.subr.mxu0 0.0
    %2692 = vmatpush2.msra.mxu0 0.0
    %2693 = vmatprep.subr.mxu0 0.0
    %2694 = vmatpush2.msra.mxu0 0.0
    %2695 = vmatprep.subr.mxu0 0.0
    %2696 = vmatpush2.msra.mxu0 0.0
    %2697 = vmatprep.subr.mxu0 0.0
    %2698 = vmatpush2.msra.mxu0 0.0
    %2699 = vmatprep.mubr.f32.mxu0 0.0
    %2700 = vmatmul.mubr.f32.gmra.mxu0 %v2624
    %v2701 = vpop.f32.mrf.mxu0
    %v2702 = vadd.f32 0.0, %v2701
    %v2703 = vpop.f32.mrf.mxu0
    %2704 = vmatprep.mubr.f32.mxu0 0.0
    %2705 = vmatmul.mubr.f32.gmra.mxu0 %v2627
    %v2706 = vpop.f32.mrf.mxu0
    %v2707 = vadd.f32 0.0, %v2706
    %v2708 = vpop.f32.mrf.mxu0
    %2709 = vmatprep.mubr.f32.mxu0 0.0
    %2710 = vmatmul.mubr.f32.gmra.mxu0 %v2630
    %v2711 = vpop.f32.mrf.mxu0
    %v2712 = vadd.f32 0.0, %v2711
    %v2713 = vpop.f32.mrf.mxu0
    %2714 = vmatprep.mubr.f32.mxu0 0.0
    %2715 = vmatmul.mubr.f32.gmra.mxu0 %v2633
    %v2716 = vpop.f32.mrf.mxu0
    %v2717 = vadd.f32 0.0, %v2716
    %v2718 = vpop.f32.mrf.mxu0
    %2719 = vdwg.mxu0
    %v2720 = vadd.f32 %v2605, %v2702
    %v2721 = vadd.f32 %v2610, %v2707
    %v2722 = vadd.f32 %v2615, %v2712
    %v2723 = vadd.f32 %v2620, %v2717
    %v2724 = vadd.f32 %v2720, %v132
    %v2725 = vadd.f32 %v2721, %v132
    %v2726 = vadd.f32 %v2722, %v132
    %v2727 = vadd.f32 %v2723, %v132
    %s2728 = sld [smem:[#allocation11 + $0x4]]
    %s2729 = sld [smem:[#allocation11 + $0x84]]
    %s2730 = sld [smem:[#allocation11 + $0x104]]
    %s2731 = sld [smem:[#allocation11 + $0x184]]
    %s2732 = sld [smem:[#allocation11 + $0x204]]
    %v2733 = vstv %s2728
    %v2734 = vmul.f32 %v2733, %v2255
    %v2735 = vmul.f32 %v2733, %v2256
    %v2736 = vmul.f32 %v2733, %v2257
    %v2737 = vmul.f32 %v2733, %v2258
    %v2738 = vstv %s2729
    %v2739 = vmul.f32 %v2738, %v2724
    %v2740 = vmul.f32 %v2738, %v2725
    %v2741 = vmul.f32 %v2738, %v2726
    %v2742 = vmul.f32 %v2738, %v2727
    %v2743 = vsub.f32 %v2734, %v2739
    %v2744 = vsub.f32 %v2735, %v2740
    %v2745 = vsub.f32 %v2736, %v2741
    %v2746 = vsub.f32 %v2737, %v2742
    %v2747 = vmax.f32 %v2743, -1.0
    %v2748 = vmax.f32 %v2744, -1.0
    %v2749 = vmax.f32 %v2745, -1.0
    %v2750 = vmax.f32 %v2746, -1.0
    %v2751 = vmin.f32 %v2747, 1.0
    %v2752 = vmin.f32 %v2748, 1.0
    %v2753 = vmin.f32 %v2749, 1.0
    %v2754 = vmin.f32 %v2750, 1.0
    %v2755 = vstv %s2730
    %v2756 = vmul.f32 %v2755, %v2751
    %v2757 = vmul.f32 %v2755, %v2752
    %v2758 = vmul.f32 %v2755, %v2753
    %v2759 = vmul.f32 %v2755, %v2754
    %v2760 = vstv %s2731
    %v2761 = vmul.f32 %v2760, %v2255
    %v2762 = vmul.f32 %v2760, %v2256
    %v2763 = vmul.f32 %v2760, %v2257
    %v2764 = vmul.f32 %v2760, %v2258
    %v2765 = vadd.f32 %v2756, %v2761
    %v2766 = vadd.f32 %v2757, %v2762
    %v2767 = vadd.f32 %v2758, %v2763
    %v2768 = vadd.f32 %v2759, %v2764
    %s2769 = scalar_lea.vmem [#allocation6], 128
    %v2770 = vld [vmem:[%s2769] sm:$0xff]
    %v2771 = vld [vmem:[%s2769 + $0x8] sm:$0xff]
    %v2772 = vld [vmem:[%s2769 + $0x10] sm:$0xff]
    %v2773 = vld [vmem:[%s2769 + $0x18] sm:$0xff]
    %v2774 = vstv %s2732
    %v2775 = vmul.f32 %v2774, %v2770
    %v2776 = vmul.f32 %v2774, %v2771
    %v2777 = vmul.f32 %v2774, %v2772
    %v2778 = vmul.f32 %v2774, %v2773
    %v2779 = vadd.f32 %v2765, %v2775
    %v2780 = vadd.f32 %v2766, %v2776
    %v2781 = vadd.f32 %v2767, %v2777
    %v2782 = vadd.f32 %v2768, %v2778
    %2783 = vmatprep.subr.mxu0 0.0
    %2784 = vmatpush1.msra.mxu0 0.0
    %2785 = vmatprep.subr.mxu0 0.0
    %2786 = vmatpush1.msra.mxu0 0.0
    %2787 = vmatprep.subr.mxu0 0.0
    %2788 = vmatpush1.msra.mxu0 0.0
    %2789 = vmatprep.subr.mxu0 0.0
    %2790 = vmatpush1.msra.mxu0 0.0
    %2791 = vmatprep.subr.mxu0 0.0
    %2792 = vmatpush1.msra.mxu0 0.0
    %2793 = vmatprep.subr.mxu0 0.0
    %2794 = vmatpush1.msra.mxu0 0.0
    %2795 = vmatprep.subr.mxu0 0.0
    %2796 = vmatpush1.msra.mxu0 0.0
    %2797 = vmatprep.subr.mxu0 0.0
    %2798 = vmatpush1.msra.mxu0 0.0
    %2799 = vmatprep.subr.mxu0 0.0
    %2800 = vmatpush1.msra.mxu0 0.0
    %2801 = vmatprep.subr.mxu0 0.0
    %2802 = vmatpush1.msra.mxu0 0.0
    %2803 = vmatprep.subr.mxu0 0.0
    %2804 = vmatpush1.msra.mxu0 0.0
    %2805 = vmatprep.subr.mxu0 0.0
    %2806 = vmatpush1.msra.mxu0 0.0
    %2807 = vmatprep.subr.mxu0 0.0
    %2808 = vmatpush1.msra.mxu0 %v2782
    %2809 = vmatprep.subr.mxu0 0.0
    %2810 = vmatpush1.msra.mxu0 %v2781
    %2811 = vmatprep.subr.mxu0 0.0
    %2812 = vmatpush1.msra.mxu0 %v2780
    %2813 = vmatprep.subr.mxu0 0.0
    %2814 = vmatpush1.msra.mxu0 %v2779
    %2815 = vmatprep.subr.mxu0 0.0
    %2816 = vmatpush2.msra.mxu0 0.0
    %2817 = vmatprep.subr.mxu0 0.0
    %2818 = vmatpush2.msra.mxu0 0.0
    %2819 = vmatprep.subr.mxu0 0.0
    %2820 = vmatpush2.msra.mxu0 0.0
    %2821 = vmatprep.subr.mxu0 0.0
    %2822 = vmatpush2.msra.mxu0 0.0
    %2823 = vmatprep.subr.mxu0 0.0
    %2824 = vmatpush2.msra.mxu0 0.0
    %2825 = vmatprep.subr.mxu0 0.0
    %2826 = vmatpush2.msra.mxu0 0.0
    %2827 = vmatprep.subr.mxu0 0.0
    %2828 = vmatpush2.msra.mxu0 0.0
    %2829 = vmatprep.subr.mxu0 0.0
    %2830 = vmatpush2.msra.mxu0 0.0
    %2831 = vmatprep.subr.mxu0 0.0
    %2832 = vmatpush2.msra.mxu0 0.0
    %2833 = vmatprep.subr.mxu0 0.0
    %2834 = vmatpush2.msra.mxu0 0.0
    %2835 = vmatprep.subr.mxu0 0.0
    %2836 = vmatpush2.msra.mxu0 0.0
    %2837 = vmatprep.subr.mxu0 0.0
    %2838 = vmatpush2.msra.mxu0 0.0
    %2839 = vmatprep.subr.mxu0 0.0
    %2840 = vmatpush2.msra.mxu0 0.0
    %2841 = vmatprep.subr.mxu0 0.0
    %2842 = vmatpush2.msra.mxu0 0.0
    %2843 = vmatprep.subr.mxu0 0.0
    %2844 = vmatpush2.msra.mxu0 0.0
    %2845 = vmatprep.subr.mxu0 0.0
    %2846 = vmatpush2.msra.mxu0 0.0
    %2847 = vmatprep.mubr.f32.mxu0 0.0
    %2848 = vmatmul.mubr.f32.gmra.mxu0 %v140
    %v2849 = vpop.f32.mrf.mxu0
    %v2850 = vadd.f32 0.0, %v2849
    %v2851 = vpop.f32.mrf.mxu0
    %2852 = vmatprep.mubr.f32.mxu0 0.0
    %2853 = vmatmul.mubr.f32.gmra.mxu0 %v143
    %v2854 = vpop.f32.mrf.mxu0
    %v2855 = vadd.f32 0.0, %v2854
    %v2856 = vpop.f32.mrf.mxu0
    %2857 = vmatprep.mubr.f32.mxu0 0.0
    %2858 = vmatmul.mubr.f32.gmra.mxu0 %v146
    %v2859 = vpop.f32.mrf.mxu0
    %v2860 = vadd.f32 0.0, %v2859
    %v2861 = vpop.f32.mrf.mxu0
    %2862 = vmatprep.mubr.f32.mxu0 0.0
    %2863 = vmatmul.mubr.f32.gmra.mxu0 %v149
    %v2864 = vpop.f32.mrf.mxu0
    %v2865 = vadd.f32 0.0, %v2864
    %v2866 = vpop.f32.mrf.mxu0
    %2867 = vdwg.mxu0
    %2868 = vmatprep.subr.mxu0 0.0
    %2869 = vmatpush1.msra.mxu0 0.0
    %2870 = vmatprep.subr.mxu0 0.0
    %2871 = vmatpush1.msra.mxu0 0.0
    %2872 = vmatprep.subr.mxu0 0.0
    %2873 = vmatpush1.msra.mxu0 0.0
    %2874 = vmatprep.subr.mxu0 0.0
    %2875 = vmatpush1.msra.mxu0 0.0
    %2876 = vmatprep.subr.mxu0 0.0
    %2877 = vmatpush1.msra.mxu0 0.0
    %2878 = vmatprep.subr.mxu0 0.0
    %2879 = vmatpush1.msra.mxu0 0.0
    %2880 = vmatprep.subr.mxu0 0.0
    %2881 = vmatpush1.msra.mxu0 0.0
    %2882 = vmatprep.subr.mxu0 0.0
    %2883 = vmatpush1.msra.mxu0 0.0
    %2884 = vmatprep.subr.mxu0 0.0
    %2885 = vmatpush1.msra.mxu0 0.0
    %2886 = vmatprep.subr.mxu0 0.0
    %2887 = vmatpush1.msra.mxu0 0.0
    %2888 = vmatprep.subr.mxu0 0.0
    %2889 = vmatpush1.msra.mxu0 0.0
    %2890 = vmatprep.subr.mxu0 0.0
    %2891 = vmatpush1.msra.mxu0 0.0
    %2892 = vmatprep.subr.mxu0 0.0
    %2893 = vmatpush1.msra.mxu0 %v2782
    %2894 = vmatprep.subr.mxu0 0.0
    %2895 = vmatpush1.msra.mxu0 %v2781
    %2896 = vmatprep.subr.mxu0 0.0
    %2897 = vmatpush1.msra.mxu0 %v2780
    %2898 = vmatprep.subr.mxu0 0.0
    %2899 = vmatpush1.msra.mxu0 %v2779
    %2900 = vmatprep.subr.mxu0 0.0
    %2901 = vmatpush2.msra.mxu0 0.0
    %2902 = vmatprep.subr.mxu0 0.0
    %2903 = vmatpush2.msra.mxu0 0.0
    %2904 = vmatprep.subr.mxu0 0.0
    %2905 = vmatpush2.msra.mxu0 0.0
    %2906 = vmatprep.subr.mxu0 0.0
    %2907 = vmatpush2.msra.mxu0 0.0
    %2908 = vmatprep.subr.mxu0 0.0
    %2909 = vmatpush2.msra.mxu0 0.0
    %2910 = vmatprep.subr.mxu0 0.0
    %2911 = vmatpush2.msra.mxu0 0.0
    %2912 = vmatprep.subr.mxu0 0.0
    %2913 = vmatpush2.msra.mxu0 0.0
    %2914 = vmatprep.subr.mxu0 0.0
    %2915 = vmatpush2.msra.mxu0 0.0
    %2916 = vmatprep.subr.mxu0 0.0
    %2917 = vmatpush2.msra.mxu0 0.0
    %2918 = vmatprep.subr.mxu0 0.0
    %2919 = vmatpush2.msra.mxu0 0.0
    %2920 = vmatprep.subr.mxu0 0.0
    %2921 = vmatpush2.msra.mxu0 0.0
    %2922 = vmatprep.subr.mxu0 0.0
    %2923 = vmatpush2.msra.mxu0 0.0
    %2924 = vmatprep.subr.mxu0 0.0
    %2925 = vmatpush2.msra.mxu0 0.0
    %2926 = vmatprep.subr.mxu0 0.0
    %2927 = vmatpush2.msra.mxu0 0.0
    %2928 = vmatprep.subr.mxu0 0.0
    %2929 = vmatpush2.msra.mxu0 0.0
    %2930 = vmatprep.subr.mxu0 0.0
    %2931 = vmatpush2.msra.mxu0 0.0
    %2932 = vmatprep.mubr.f32.mxu0 0.0
    %2933 = vmatmul.mubr.f32.gmra.mxu0 %v237
    %v2934 = vpop.f32.mrf.mxu0
    %v2935 = vadd.f32 0.0, %v2934
    %v2936 = vpop.f32.mrf.mxu0
    %2937 = vmatprep.mubr.f32.mxu0 0.0
    %2938 = vmatmul.mubr.f32.gmra.mxu0 %v240
    %v2939 = vpop.f32.mrf.mxu0
    %v2940 = vadd.f32 0.0, %v2939
    %v2941 = vpop.f32.mrf.mxu0
    %2942 = vmatprep.mubr.f32.mxu0 0.0
    %2943 = vmatmul.mubr.f32.gmra.mxu0 %v243
    %v2944 = vpop.f32.mrf.mxu0
    %v2945 = vadd.f32 0.0, %v2944
    %v2946 = vpop.f32.mrf.mxu0
    %2947 = vmatprep.mubr.f32.mxu0 0.0
    %2948 = vmatmul.mubr.f32.gmra.mxu0 %v246
    %v2949 = vpop.f32.mrf.mxu0
    %v2950 = vadd.f32 0.0, %v2949
    %v2951 = vpop.f32.mrf.mxu0
    %2952 = vdwg.mxu0
    %v2954 = vsel %vm333, %v2779, 0
    %v2957 = vsel %vm333, %v2780, 0
    %v2960 = vsel %vm333, %v2781, 0
    %v2963 = vsel %vm333, %v2782, 0
    %2965 = vmatprep.subr.mxu0 0.0
    %2966 = vmatpush1.msra.mxu0 0.0
    %2967 = vmatprep.subr.mxu0 0.0
    %2968 = vmatpush1.msra.mxu0 0.0
    %2969 = vmatprep.subr.mxu0 0.0
    %2970 = vmatpush1.msra.mxu0 0.0
    %2971 = vmatprep.subr.mxu0 0.0
    %2972 = vmatpush1.msra.mxu0 0.0
    %2973 = vmatprep.subr.mxu0 0.0
    %2974 = vmatpush1.msra.mxu0 0.0
    %2975 = vmatprep.subr.mxu0 0.0
    %2976 = vmatpush1.msra.mxu0 0.0
    %2977 = vmatprep.subr.mxu0 0.0
    %2978 = vmatpush1.msra.mxu0 0.0
    %2979 = vmatprep.subr.mxu0 0.0
    %2980 = vmatpush1.msra.mxu0 0.0
    %2981 = vmatprep.subr.mxu0 0.0
    %2982 = vmatpush1.msra.mxu0 %v108
    %2983 = vmatprep.subr.mxu0 0.0
    %2984 = vmatpush1.msra.mxu0 %v107
    %2985 = vmatprep.subr.mxu0 0.0
    %2986 = vmatpush1.msra.mxu0 %v106
    %2987 = vmatprep.subr.mxu0 0.0
    %2988 = vmatpush1.msra.mxu0 %v105
    %2989 = vmatprep.subr.mxu0 0.0
    %2990 = vmatpush1.msra.mxu0 %v104
    %2991 = vmatprep.subr.mxu0 0.0
    %2992 = vmatpush1.msra.mxu0 %v103
    %2993 = vmatprep.subr.mxu0 0.0
    %2994 = vmatpush1.msra.mxu0 %v102
    %2995 = vmatprep.subr.mxu0 0.0
    %2996 = vmatpush1.msra.mxu0 %v101
    %2997 = vmatprep.subr.mxu0 0.0
    %2998 = vmatpush2.msra.mxu0 0.0
    %2999 = vmatprep.subr.mxu0 0.0
    %3000 = vmatpush2.msra.mxu0 0.0
    %3001 = vmatprep.subr.mxu0 0.0
    %3002 = vmatpush2.msra.mxu0 0.0
    %3003 = vmatprep.subr.mxu0 0.0
    %3004 = vmatpush2.msra.mxu0 0.0
    %3005 = vmatprep.subr.mxu0 0.0
    %3006 = vmatpush2.msra.mxu0 0.0
    %3007 = vmatprep.subr.mxu0 0.0
    %3008 = vmatpush2.msra.mxu0 0.0
    %3009 = vmatprep.subr.mxu0 0.0
    %3010 = vmatpush2.msra.mxu0 0.0
    %3011 = vmatprep.subr.mxu0 0.0
    %3012 = vmatpush2.msra.mxu0 0.0
    %3013 = vmatprep.subr.mxu0 0.0
    %3014 = vmatpush2.msra.mxu0 0.0
    %3015 = vmatprep.subr.mxu0 0.0
    %3016 = vmatpush2.msra.mxu0 0.0
    %3017 = vmatprep.subr.mxu0 0.0
    %3018 = vmatpush2.msra.mxu0 0.0
    %3019 = vmatprep.subr.mxu0 0.0
    %3020 = vmatpush2.msra.mxu0 0.0
    %3021 = vmatprep.subr.mxu0 0.0
    %3022 = vmatpush2.msra.mxu0 0.0
    %3023 = vmatprep.subr.mxu0 0.0
    %3024 = vmatpush2.msra.mxu0 0.0
    %3025 = vmatprep.subr.mxu0 0.0
    %3026 = vmatpush2.msra.mxu0 0.0
    %3027 = vmatprep.subr.mxu0 0.0
    %3028 = vmatpush2.msra.mxu0 0.0
    %3029 = vmatprep.mubr.f32.mxu0 0.0
    %3030 = vmatmul.mubr.f32.gmra.mxu0 %v2954
    %v3031 = vpop.f32.mrf.mxu0
    %v3032 = vadd.f32 0.0, %v3031
    %v3033 = vpop.f32.mrf.mxu0
    %3034 = vmatprep.mubr.f32.mxu0 0.0
    %3035 = vmatmul.mubr.f32.gmra.mxu0 %v2957
    %v3036 = vpop.f32.mrf.mxu0
    %v3037 = vadd.f32 0.0, %v3036
    %v3038 = vpop.f32.mrf.mxu0
    %3039 = vmatprep.mubr.f32.mxu0 0.0
    %3040 = vmatmul.mubr.f32.gmra.mxu0 %v2960
    %v3041 = vpop.f32.mrf.mxu0
    %v3042 = vadd.f32 0.0, %v3041
    %v3043 = vpop.f32.mrf.mxu0
    %3044 = vmatprep.mubr.f32.mxu0 0.0
    %3045 = vmatmul.mubr.f32.gmra.mxu0 %v2963
    %v3046 = vpop.f32.mrf.mxu0
    %v3047 = vadd.f32 0.0, %v3046
    %v3048 = vpop.f32.mrf.mxu0
    %3049 = vdwg.mxu0
    %v3051 = vsel %vm333, %v2850, 0
    %v3054 = vsel %vm333, %v2855, 0
    %v3057 = vsel %vm333, %v2860, 0
    %v3060 = vsel %vm333, %v2865, 0
    %3062 = vmatprep.subr.mxu0 0.0
    %3063 = vmatpush1.msra.mxu0 0.0
    %3064 = vmatprep.subr.mxu0 0.0
    %3065 = vmatpush1.msra.mxu0 0.0
    %3066 = vmatprep.subr.mxu0 0.0
    %3067 = vmatpush1.msra.mxu0 0.0
    %3068 = vmatprep.subr.mxu0 0.0
    %3069 = vmatpush1.msra.mxu0 0.0
    %3070 = vmatprep.subr.mxu0 0.0
    %3071 = vmatpush1.msra.mxu0 0.0
    %3072 = vmatprep.subr.mxu0 0.0
    %3073 = vmatpush1.msra.mxu0 0.0
    %3074 = vmatprep.subr.mxu0 0.0
    %3075 = vmatpush1.msra.mxu0 0.0
    %3076 = vmatprep.subr.mxu0 0.0
    %3077 = vmatpush1.msra.mxu0 0.0
    %3078 = vmatprep.subr.mxu0 0.0
    %3079 = vmatpush1.msra.mxu0 %v99
    %3080 = vmatprep.subr.mxu0 0.0
    %3081 = vmatpush1.msra.mxu0 %v98
    %3082 = vmatprep.subr.mxu0 0.0
    %3083 = vmatpush1.msra.mxu0 %v97
    %3084 = vmatprep.subr.mxu0 0.0
    %3085 = vmatpush1.msra.mxu0 %v96
    %3086 = vmatprep.subr.mxu0 0.0
    %3087 = vmatpush1.msra.mxu0 %v95
    %3088 = vmatprep.subr.mxu0 0.0
    %3089 = vmatpush1.msra.mxu0 %v94
    %3090 = vmatprep.subr.mxu0 0.0
    %3091 = vmatpush1.msra.mxu0 %v93
    %3092 = vmatprep.subr.mxu0 0.0
    %3093 = vmatpush1.msra.mxu0 %v92
    %3094 = vmatprep.subr.mxu0 0.0
    %3095 = vmatpush2.msra.mxu0 0.0
    %3096 = vmatprep.subr.mxu0 0.0
    %3097 = vmatpush2.msra.mxu0 0.0
    %3098 = vmatprep.subr.mxu0 0.0
    %3099 = vmatpush2.msra.mxu0 0.0
    %3100 = vmatprep.subr.mxu0 0.0
    %3101 = vmatpush2.msra.mxu0 0.0
    %3102 = vmatprep.subr.mxu0 0.0
    %3103 = vmatpush2.msra.mxu0 0.0
    %3104 = vmatprep.subr.mxu0 0.0
    %3105 = vmatpush2.msra.mxu0 0.0
    %3106 = vmatprep.subr.mxu0 0.0
    %3107 = vmatpush2.msra.mxu0 0.0
    %3108 = vmatprep.subr.mxu0 0.0
    %3109 = vmatpush2.msra.mxu0 0.0
    %3110 = vmatprep.subr.mxu0 0.0
    %3111 = vmatpush2.msra.mxu0 0.0
    %3112 = vmatprep.subr.mxu0 0.0
    %3113 = vmatpush2.msra.mxu0 0.0
    %3114 = vmatprep.subr.mxu0 0.0
    %3115 = vmatpush2.msra.mxu0 0.0
    %3116 = vmatprep.subr.mxu0 0.0
    %3117 = vmatpush2.msra.mxu0 0.0
    %3118 = vmatprep.subr.mxu0 0.0
    %3119 = vmatpush2.msra.mxu0 0.0
    %3120 = vmatprep.subr.mxu0 0.0
    %3121 = vmatpush2.msra.mxu0 0.0
    %3122 = vmatprep.subr.mxu0 0.0
    %3123 = vmatpush2.msra.mxu0 0.0
    %3124 = vmatprep.subr.mxu0 0.0
    %3125 = vmatpush2.msra.mxu0 0.0
    %3126 = vmatprep.mubr.f32.mxu0 0.0
    %3127 = vmatmul.mubr.f32.gmra.mxu0 %v3051
    %v3128 = vpop.f32.mrf.mxu0
    %v3129 = vadd.f32 %v3032, %v3128
    %v3130 = vpop.f32.mrf.mxu0
    %3131 = vmatprep.mubr.f32.mxu0 0.0
    %3132 = vmatmul.mubr.f32.gmra.mxu0 %v3054
    %v3133 = vpop.f32.mrf.mxu0
    %v3134 = vadd.f32 %v3037, %v3133
    %v3135 = vpop.f32.mrf.mxu0
    %3136 = vmatprep.mubr.f32.mxu0 0.0
    %3137 = vmatmul.mubr.f32.gmra.mxu0 %v3057
    %v3138 = vpop.f32.mrf.mxu0
    %v3139 = vadd.f32 %v3042, %v3138
    %v3140 = vpop.f32.mrf.mxu0
    %3141 = vmatprep.mubr.f32.mxu0 0.0
    %3142 = vmatmul.mubr.f32.gmra.mxu0 %v3060
    %v3143 = vpop.f32.mrf.mxu0
    %v3144 = vadd.f32 %v3047, %v3143
    %v3145 = vpop.f32.mrf.mxu0
    %3146 = vdwg.mxu0
    %v3148 = vsel %vm333, %v2935, 0
    %v3151 = vsel %vm333, %v2940, 0
    %v3154 = vsel %vm333, %v2945, 0
    %v3157 = vsel %vm333, %v2950, 0
    %3159 = vmatprep.subr.mxu0 0.0
    %3160 = vmatpush1.msra.mxu0 0.0
    %3161 = vmatprep.subr.mxu0 0.0
    %3162 = vmatpush1.msra.mxu0 0.0
    %3163 = vmatprep.subr.mxu0 0.0
    %3164 = vmatpush1.msra.mxu0 0.0
    %3165 = vmatprep.subr.mxu0 0.0
    %3166 = vmatpush1.msra.mxu0 0.0
    %3167 = vmatprep.subr.mxu0 0.0
    %3168 = vmatpush1.msra.mxu0 0.0
    %3169 = vmatprep.subr.mxu0 0.0
    %3170 = vmatpush1.msra.mxu0 0.0
    %3171 = vmatprep.subr.mxu0 0.0
    %3172 = vmatpush1.msra.mxu0 0.0
    %3173 = vmatprep.subr.mxu0 0.0
    %3174 = vmatpush1.msra.mxu0 0.0
    %3175 = vmatprep.subr.mxu0 0.0
    %3176 = vmatpush1.msra.mxu0 %v117
    %3177 = vmatprep.subr.mxu0 0.0
    %3178 = vmatpush1.msra.mxu0 %v116
    %3179 = vmatprep.subr.mxu0 0.0
    %3180 = vmatpush1.msra.mxu0 %v115
    %3181 = vmatprep.subr.mxu0 0.0
    %3182 = vmatpush1.msra.mxu0 %v114
    %3183 = vmatprep.subr.mxu0 0.0
    %3184 = vmatpush1.msra.mxu0 %v113
    %3185 = vmatprep.subr.mxu0 0.0
    %3186 = vmatpush1.msra.mxu0 %v112
    %3187 = vmatprep.subr.mxu0 0.0
    %3188 = vmatpush1.msra.mxu0 %v111
    %3189 = vmatprep.subr.mxu0 0.0
    %3190 = vmatpush1.msra.mxu0 %v110
    %3191 = vmatprep.subr.mxu0 0.0
    %3192 = vmatpush2.msra.mxu0 0.0
    %3193 = vmatprep.subr.mxu0 0.0
    %3194 = vmatpush2.msra.mxu0 0.0
    %3195 = vmatprep.subr.mxu0 0.0
    %3196 = vmatpush2.msra.mxu0 0.0
    %3197 = vmatprep.subr.mxu0 0.0
    %3198 = vmatpush2.msra.mxu0 0.0
    %3199 = vmatprep.subr.mxu0 0.0
    %3200 = vmatpush2.msra.mxu0 0.0
    %3201 = vmatprep.subr.mxu0 0.0
    %3202 = vmatpush2.msra.mxu0 0.0
    %3203 = vmatprep.subr.mxu0 0.0
    %3204 = vmatpush2.msra.mxu0 0.0
    %3205 = vmatprep.subr.mxu0 0.0
    %3206 = vmatpush2.msra.mxu0 0.0
    %3207 = vmatprep.subr.mxu0 0.0
    %3208 = vmatpush2.msra.mxu0 0.0
    %3209 = vmatprep.subr.mxu0 0.0
    %3210 = vmatpush2.msra.mxu0 0.0
    %3211 = vmatprep.subr.mxu0 0.0
    %3212 = vmatpush2.msra.mxu0 0.0
    %3213 = vmatprep.subr.mxu0 0.0
    %3214 = vmatpush2.msra.mxu0 0.0
    %3215 = vmatprep.subr.mxu0 0.0
    %3216 = vmatpush2.msra.mxu0 0.0
    %3217 = vmatprep.subr.mxu0 0.0
    %3218 = vmatpush2.msra.mxu0 0.0
    %3219 = vmatprep.subr.mxu0 0.0
    %3220 = vmatpush2.msra.mxu0 0.0
    %3221 = vmatprep.subr.mxu0 0.0
    %3222 = vmatpush2.msra.mxu0 0.0
    %3223 = vmatprep.mubr.f32.mxu0 0.0
    %3224 = vmatmul.mubr.f32.gmra.mxu0 %v3148
    %v3225 = vpop.f32.mrf.mxu0
    %v3226 = vadd.f32 0.0, %v3225
    %v3227 = vpop.f32.mrf.mxu0
    %3228 = vmatprep.mubr.f32.mxu0 0.0
    %3229 = vmatmul.mubr.f32.gmra.mxu0 %v3151
    %v3230 = vpop.f32.mrf.mxu0
    %v3231 = vadd.f32 0.0, %v3230
    %v3232 = vpop.f32.mrf.mxu0
    %3233 = vmatprep.mubr.f32.mxu0 0.0
    %3234 = vmatmul.mubr.f32.gmra.mxu0 %v3154
    %v3235 = vpop.f32.mrf.mxu0
    %v3236 = vadd.f32 0.0, %v3235
    %v3237 = vpop.f32.mrf.mxu0
    %3238 = vmatprep.mubr.f32.mxu0 0.0
    %3239 = vmatmul.mubr.f32.gmra.mxu0 %v3157
    %v3240 = vpop.f32.mrf.mxu0
    %v3241 = vadd.f32 0.0, %v3240
    %v3242 = vpop.f32.mrf.mxu0
    %3243 = vdwg.mxu0
    %v3244 = vadd.f32 %v3129, %v3226
    %v3245 = vadd.f32 %v3134, %v3231
    %v3246 = vadd.f32 %v3139, %v3236
    %v3247 = vadd.f32 %v3144, %v3241
    %v3248 = vadd.f32 %v3244, %v132
    %v3249 = vadd.f32 %v3245, %v132
    %v3250 = vadd.f32 %v3246, %v132
    %v3251 = vadd.f32 %v3247, %v132
    %s3252 = sld [smem:[#allocation11 + $0x5]]
    %s3253 = sld [smem:[#allocation11 + $0x85]]
    %s3254 = sld [smem:[#allocation11 + $0x105]]
    %s3255 = sld [smem:[#allocation11 + $0x185]]
    %s3256 = sld [smem:[#allocation11 + $0x205]]
    %v3257 = vstv %s3252
    %v3258 = vmul.f32 %v3257, %v2779
    %v3259 = vmul.f32 %v3257, %v2780
    %v3260 = vmul.f32 %v3257, %v2781
    %v3261 = vmul.f32 %v3257, %v2782
    %v3262 = vstv %s3253
    %v3263 = vmul.f32 %v3262, %v3248
    %v3264 = vmul.f32 %v3262, %v3249
    %v3265 = vmul.f32 %v3262, %v3250
    %v3266 = vmul.f32 %v3262, %v3251
    %v3267 = vsub.f32 %v3258, %v3263
    %v3268 = vsub.f32 %v3259, %v3264
    %v3269 = vsub.f32 %v3260, %v3265
    %v3270 = vsub.f32 %v3261, %v3266
    %v3271 = vmax.f32 %v3267, -1.0
    %v3272 = vmax.f32 %v3268, -1.0
    %v3273 = vmax.f32 %v3269, -1.0
    %v3274 = vmax.f32 %v3270, -1.0
    %v3275 = vmin.f32 %v3271, 1.0
    %v3276 = vmin.f32 %v3272, 1.0
    %v3277 = vmin.f32 %v3273, 1.0
    %v3278 = vmin.f32 %v3274, 1.0
    %v3279 = vstv %s3254
    %v3280 = vmul.f32 %v3279, %v3275
    %v3281 = vmul.f32 %v3279, %v3276
    %v3282 = vmul.f32 %v3279, %v3277
    %v3283 = vmul.f32 %v3279, %v3278
    %v3284 = vstv %s3255
    %v3285 = vmul.f32 %v3284, %v2779
    %v3286 = vmul.f32 %v3284, %v2780
    %v3287 = vmul.f32 %v3284, %v2781
    %v3288 = vmul.f32 %v3284, %v2782
    %v3289 = vadd.f32 %v3280, %v3285
    %v3290 = vadd.f32 %v3281, %v3286
    %v3291 = vadd.f32 %v3282, %v3287
    %v3292 = vadd.f32 %v3283, %v3288
    %s3293 = scalar_lea.vmem [#allocation6], 160
    %v3294 = vld [vmem:[%s3293] sm:$0xff]
    %v3295 = vld [vmem:[%s3293 + $0x8] sm:$0xff]
    %v3296 = vld [vmem:[%s3293 + $0x10] sm:$0xff]
    %v3297 = vld [vmem:[%s3293 + $0x18] sm:$0xff]
    %v3298 = vstv %s3256
    %v3299 = vmul.f32 %v3298, %v3294
    %v3300 = vmul.f32 %v3298, %v3295
    %v3301 = vmul.f32 %v3298, %v3296
    %v3302 = vmul.f32 %v3298, %v3297
    %v3303 = vadd.f32 %v3289, %v3299
    %v3304 = vadd.f32 %v3290, %v3300
    %v3305 = vadd.f32 %v3291, %v3301
    %v3306 = vadd.f32 %v3292, %v3302
    %3307 = vmatprep.subr.mxu0 0.0
    %3308 = vmatpush1.msra.mxu0 0.0
    %3309 = vmatprep.subr.mxu0 0.0
    %3310 = vmatpush1.msra.mxu0 0.0
    %3311 = vmatprep.subr.mxu0 0.0
    %3312 = vmatpush1.msra.mxu0 0.0
    %3313 = vmatprep.subr.mxu0 0.0
    %3314 = vmatpush1.msra.mxu0 0.0
    %3315 = vmatprep.subr.mxu0 0.0
    %3316 = vmatpush1.msra.mxu0 0.0
    %3317 = vmatprep.subr.mxu0 0.0
    %3318 = vmatpush1.msra.mxu0 0.0
    %3319 = vmatprep.subr.mxu0 0.0
    %3320 = vmatpush1.msra.mxu0 0.0
    %3321 = vmatprep.subr.mxu0 0.0
    %3322 = vmatpush1.msra.mxu0 0.0
    %3323 = vmatprep.subr.mxu0 0.0
    %3324 = vmatpush1.msra.mxu0 0.0
    %3325 = vmatprep.subr.mxu0 0.0
    %3326 = vmatpush1.msra.mxu0 0.0
    %3327 = vmatprep.subr.mxu0 0.0
    %3328 = vmatpush1.msra.mxu0 0.0
    %3329 = vmatprep.subr.mxu0 0.0
    %3330 = vmatpush1.msra.mxu0 0.0
    %3331 = vmatprep.subr.mxu0 0.0
    %3332 = vmatpush1.msra.mxu0 %v3306
    %3333 = vmatprep.subr.mxu0 0.0
    %3334 = vmatpush1.msra.mxu0 %v3305
    %3335 = vmatprep.subr.mxu0 0.0
    %3336 = vmatpush1.msra.mxu0 %v3304
    %3337 = vmatprep.subr.mxu0 0.0
    %3338 = vmatpush1.msra.mxu0 %v3303
    %3339 = vmatprep.subr.mxu0 0.0
    %3340 = vmatpush2.msra.mxu0 0.0
    %3341 = vmatprep.subr.mxu0 0.0
    %3342 = vmatpush2.msra.mxu0 0.0
    %3343 = vmatprep.subr.mxu0 0.0
    %3344 = vmatpush2.msra.mxu0 0.0
    %3345 = vmatprep.subr.mxu0 0.0
    %3346 = vmatpush2.msra.mxu0 0.0
    %3347 = vmatprep.subr.mxu0 0.0
    %3348 = vmatpush2.msra.mxu0 0.0
    %3349 = vmatprep.subr.mxu0 0.0
    %3350 = vmatpush2.msra.mxu0 0.0
    %3351 = vmatprep.subr.mxu0 0.0
    %3352 = vmatpush2.msra.mxu0 0.0
    %3353 = vmatprep.subr.mxu0 0.0
    %3354 = vmatpush2.msra.mxu0 0.0
    %3355 = vmatprep.subr.mxu0 0.0
    %3356 = vmatpush2.msra.mxu0 0.0
    %3357 = vmatprep.subr.mxu0 0.0
    %3358 = vmatpush2.msra.mxu0 0.0
    %3359 = vmatprep.subr.mxu0 0.0
    %3360 = vmatpush2.msra.mxu0 0.0
    %3361 = vmatprep.subr.mxu0 0.0
    %3362 = vmatpush2.msra.mxu0 0.0
    %3363 = vmatprep.subr.mxu0 0.0
    %3364 = vmatpush2.msra.mxu0 0.0
    %3365 = vmatprep.subr.mxu0 0.0
    %3366 = vmatpush2.msra.mxu0 0.0
    %3367 = vmatprep.subr.mxu0 0.0
    %3368 = vmatpush2.msra.mxu0 0.0
    %3369 = vmatprep.subr.mxu0 0.0
    %3370 = vmatpush2.msra.mxu0 0.0
    %3371 = vmatprep.mubr.f32.mxu0 0.0
    %3372 = vmatmul.mubr.f32.gmra.mxu0 %v140
    %v3373 = vpop.f32.mrf.mxu0
    %v3374 = vadd.f32 0.0, %v3373
    %v3375 = vpop.f32.mrf.mxu0
    %3376 = vmatprep.mubr.f32.mxu0 0.0
    %3377 = vmatmul.mubr.f32.gmra.mxu0 %v143
    %v3378 = vpop.f32.mrf.mxu0
    %v3379 = vadd.f32 0.0, %v3378
    %v3380 = vpop.f32.mrf.mxu0
    %3381 = vmatprep.mubr.f32.mxu0 0.0
    %3382 = vmatmul.mubr.f32.gmra.mxu0 %v146
    %v3383 = vpop.f32.mrf.mxu0
    %v3384 = vadd.f32 0.0, %v3383
    %v3385 = vpop.f32.mrf.mxu0
    %3386 = vmatprep.mubr.f32.mxu0 0.0
    %3387 = vmatmul.mubr.f32.gmra.mxu0 %v149
    %v3388 = vpop.f32.mrf.mxu0
    %v3389 = vadd.f32 0.0, %v3388
    %v3390 = vpop.f32.mrf.mxu0
    %3391 = vdwg.mxu0
    %3392 = vmatprep.subr.mxu0 0.0
    %3393 = vmatpush1.msra.mxu0 0.0
    %3394 = vmatprep.subr.mxu0 0.0
    %3395 = vmatpush1.msra.mxu0 0.0
    %3396 = vmatprep.subr.mxu0 0.0
    %3397 = vmatpush1.msra.mxu0 0.0
    %3398 = vmatprep.subr.mxu0 0.0
    %3399 = vmatpush1.msra.mxu0 0.0
    %3400 = vmatprep.subr.mxu0 0.0
    %3401 = vmatpush1.msra.mxu0 0.0
    %3402 = vmatprep.subr.mxu0 0.0
    %3403 = vmatpush1.msra.mxu0 0.0
    %3404 = vmatprep.subr.mxu0 0.0
    %3405 = vmatpush1.msra.mxu0 0.0
    %3406 = vmatprep.subr.mxu0 0.0
    %3407 = vmatpush1.msra.mxu0 0.0
    %3408 = vmatprep.subr.mxu0 0.0
    %3409 = vmatpush1.msra.mxu0 0.0
    %3410 = vmatprep.subr.mxu0 0.0
    %3411 = vmatpush1.msra.mxu0 0.0
    %3412 = vmatprep.subr.mxu0 0.0
    %3413 = vmatpush1.msra.mxu0 0.0
    %3414 = vmatprep.subr.mxu0 0.0
    %3415 = vmatpush1.msra.mxu0 0.0
    %3416 = vmatprep.subr.mxu0 0.0
    %3417 = vmatpush1.msra.mxu0 %v3306
    %3418 = vmatprep.subr.mxu0 0.0
    %3419 = vmatpush1.msra.mxu0 %v3305
    %3420 = vmatprep.subr.mxu0 0.0
    %3421 = vmatpush1.msra.mxu0 %v3304
    %3422 = vmatprep.subr.mxu0 0.0
    %3423 = vmatpush1.msra.mxu0 %v3303
    %3424 = vmatprep.subr.mxu0 0.0
    %3425 = vmatpush2.msra.mxu0 0.0
    %3426 = vmatprep.subr.mxu0 0.0
    %3427 = vmatpush2.msra.mxu0 0.0
    %3428 = vmatprep.subr.mxu0 0.0
    %3429 = vmatpush2.msra.mxu0 0.0
    %3430 = vmatprep.subr.mxu0 0.0
    %3431 = vmatpush2.msra.mxu0 0.0
    %3432 = vmatprep.subr.mxu0 0.0
    %3433 = vmatpush2.msra.mxu0 0.0
    %3434 = vmatprep.subr.mxu0 0.0
    %3435 = vmatpush2.msra.mxu0 0.0
    %3436 = vmatprep.subr.mxu0 0.0
    %3437 = vmatpush2.msra.mxu0 0.0
    %3438 = vmatprep.subr.mxu0 0.0
    %3439 = vmatpush2.msra.mxu0 0.0
    %3440 = vmatprep.subr.mxu0 0.0
    %3441 = vmatpush2.msra.mxu0 0.0
    %3442 = vmatprep.subr.mxu0 0.0
    %3443 = vmatpush2.msra.mxu0 0.0
    %3444 = vmatprep.subr.mxu0 0.0
    %3445 = vmatpush2.msra.mxu0 0.0
    %3446 = vmatprep.subr.mxu0 0.0
    %3447 = vmatpush2.msra.mxu0 0.0
    %3448 = vmatprep.subr.mxu0 0.0
    %3449 = vmatpush2.msra.mxu0 0.0
    %3450 = vmatprep.subr.mxu0 0.0
    %3451 = vmatpush2.msra.mxu0 0.0
    %3452 = vmatprep.subr.mxu0 0.0
    %3453 = vmatpush2.msra.mxu0 0.0
    %3454 = vmatprep.subr.mxu0 0.0
    %3455 = vmatpush2.msra.mxu0 0.0
    %3456 = vmatprep.mubr.f32.mxu0 0.0
    %3457 = vmatmul.mubr.f32.gmra.mxu0 %v237
    %v3458 = vpop.f32.mrf.mxu0
    %v3459 = vadd.f32 0.0, %v3458
    %v3460 = vpop.f32.mrf.mxu0
    %3461 = vmatprep.mubr.f32.mxu0 0.0
    %3462 = vmatmul.mubr.f32.gmra.mxu0 %v240
    %v3463 = vpop.f32.mrf.mxu0
    %v3464 = vadd.f32 0.0, %v3463
    %v3465 = vpop.f32.mrf.mxu0
    %3466 = vmatprep.mubr.f32.mxu0 0.0
    %3467 = vmatmul.mubr.f32.gmra.mxu0 %v243
    %v3468 = vpop.f32.mrf.mxu0
    %v3469 = vadd.f32 0.0, %v3468
    %v3470 = vpop.f32.mrf.mxu0
    %3471 = vmatprep.mubr.f32.mxu0 0.0
    %3472 = vmatmul.mubr.f32.gmra.mxu0 %v246
    %v3473 = vpop.f32.mrf.mxu0
    %v3474 = vadd.f32 0.0, %v3473
    %v3475 = vpop.f32.mrf.mxu0
    %3476 = vdwg.mxu0
    %v3478 = vsel %vm333, %v3303, 0
    %v3481 = vsel %vm333, %v3304, 0
    %v3484 = vsel %vm333, %v3305, 0
    %v3487 = vsel %vm333, %v3306, 0
    %3489 = vmatprep.subr.mxu0 0.0
    %3490 = vmatpush1.msra.mxu0 0.0
    %3491 = vmatprep.subr.mxu0 0.0
    %3492 = vmatpush1.msra.mxu0 0.0
    %3493 = vmatprep.subr.mxu0 0.0
    %3494 = vmatpush1.msra.mxu0 0.0
    %3495 = vmatprep.subr.mxu0 0.0
    %3496 = vmatpush1.msra.mxu0 0.0
    %3497 = vmatprep.subr.mxu0 0.0
    %3498 = vmatpush1.msra.mxu0 0.0
    %3499 = vmatprep.subr.mxu0 0.0
    %3500 = vmatpush1.msra.mxu0 0.0
    %3501 = vmatprep.subr.mxu0 0.0
    %3502 = vmatpush1.msra.mxu0 0.0
    %3503 = vmatprep.subr.mxu0 0.0
    %3504 = vmatpush1.msra.mxu0 0.0
    %3505 = vmatprep.subr.mxu0 0.0
    %3506 = vmatpush1.msra.mxu0 %v108
    %3507 = vmatprep.subr.mxu0 0.0
    %3508 = vmatpush1.msra.mxu0 %v107
    %3509 = vmatprep.subr.mxu0 0.0
    %3510 = vmatpush1.msra.mxu0 %v106
    %3511 = vmatprep.subr.mxu0 0.0
    %3512 = vmatpush1.msra.mxu0 %v105
    %3513 = vmatprep.subr.mxu0 0.0
    %3514 = vmatpush1.msra.mxu0 %v104
    %3515 = vmatprep.subr.mxu0 0.0
    %3516 = vmatpush1.msra.mxu0 %v103
    %3517 = vmatprep.subr.mxu0 0.0
    %3518 = vmatpush1.msra.mxu0 %v102
    %3519 = vmatprep.subr.mxu0 0.0
    %3520 = vmatpush1.msra.mxu0 %v101
    %3521 = vmatprep.subr.mxu0 0.0
    %3522 = vmatpush2.msra.mxu0 0.0
    %3523 = vmatprep.subr.mxu0 0.0
    %3524 = vmatpush2.msra.mxu0 0.0
    %3525 = vmatprep.subr.mxu0 0.0
    %3526 = vmatpush2.msra.mxu0 0.0
    %3527 = vmatprep.subr.mxu0 0.0
    %3528 = vmatpush2.msra.mxu0 0.0
    %3529 = vmatprep.subr.mxu0 0.0
    %3530 = vmatpush2.msra.mxu0 0.0
    %3531 = vmatprep.subr.mxu0 0.0
    %3532 = vmatpush2.msra.mxu0 0.0
    %3533 = vmatprep.subr.mxu0 0.0
    %3534 = vmatpush2.msra.mxu0 0.0
    %3535 = vmatprep.subr.mxu0 0.0
    %3536 = vmatpush2.msra.mxu0 0.0
    %3537 = vmatprep.subr.mxu0 0.0
    %3538 = vmatpush2.msra.mxu0 0.0
    %3539 = vmatprep.subr.mxu0 0.0
    %3540 = vmatpush2.msra.mxu0 0.0
    %3541 = vmatprep.subr.mxu0 0.0
    %3542 = vmatpush2.msra.mxu0 0.0
    %3543 = vmatprep.subr.mxu0 0.0
    %3544 = vmatpush2.msra.mxu0 0.0
    %3545 = vmatprep.subr.mxu0 0.0
    %3546 = vmatpush2.msra.mxu0 0.0
    %3547 = vmatprep.subr.mxu0 0.0
    %3548 = vmatpush2.msra.mxu0 0.0
    %3549 = vmatprep.subr.mxu0 0.0
    %3550 = vmatpush2.msra.mxu0 0.0
    %3551 = vmatprep.subr.mxu0 0.0
    %3552 = vmatpush2.msra.mxu0 0.0
    %3553 = vmatprep.mubr.f32.mxu0 0.0
    %3554 = vmatmul.mubr.f32.gmra.mxu0 %v3478
    %v3555 = vpop.f32.mrf.mxu0
    %v3556 = vadd.f32 0.0, %v3555
    %v3557 = vpop.f32.mrf.mxu0
    %3558 = vmatprep.mubr.f32.mxu0 0.0
    %3559 = vmatmul.mubr.f32.gmra.mxu0 %v3481
    %v3560 = vpop.f32.mrf.mxu0
    %v3561 = vadd.f32 0.0, %v3560
    %v3562 = vpop.f32.mrf.mxu0
    %3563 = vmatprep.mubr.f32.mxu0 0.0
    %3564 = vmatmul.mubr.f32.gmra.mxu0 %v3484
    %v3565 = vpop.f32.mrf.mxu0
    %v3566 = vadd.f32 0.0, %v3565
    %v3567 = vpop.f32.mrf.mxu0
    %3568 = vmatprep.mubr.f32.mxu0 0.0
    %3569 = vmatmul.mubr.f32.gmra.mxu0 %v3487
    %v3570 = vpop.f32.mrf.mxu0
    %v3571 = vadd.f32 0.0, %v3570
    %v3572 = vpop.f32.mrf.mxu0
    %3573 = vdwg.mxu0
    %v3575 = vsel %vm333, %v3374, 0
    %v3578 = vsel %vm333, %v3379, 0
    %v3581 = vsel %vm333, %v3384, 0
    %v3584 = vsel %vm333, %v3389, 0
    %3586 = vmatprep.subr.mxu0 0.0
    %3587 = vmatpush1.msra.mxu0 0.0
    %3588 = vmatprep.subr.mxu0 0.0
    %3589 = vmatpush1.msra.mxu0 0.0
    %3590 = vmatprep.subr.mxu0 0.0
    %3591 = vmatpush1.msra.mxu0 0.0
    %3592 = vmatprep.subr.mxu0 0.0
    %3593 = vmatpush1.msra.mxu0 0.0
    %3594 = vmatprep.subr.mxu0 0.0
    %3595 = vmatpush1.msra.mxu0 0.0
    %3596 = vmatprep.subr.mxu0 0.0
    %3597 = vmatpush1.msra.mxu0 0.0
    %3598 = vmatprep.subr.mxu0 0.0
    %3599 = vmatpush1.msra.mxu0 0.0
    %3600 = vmatprep.subr.mxu0 0.0
    %3601 = vmatpush1.msra.mxu0 0.0
    %3602 = vmatprep.subr.mxu0 0.0
    %3603 = vmatpush1.msra.mxu0 %v99
    %3604 = vmatprep.subr.mxu0 0.0
    %3605 = vmatpush1.msra.mxu0 %v98
    %3606 = vmatprep.subr.mxu0 0.0
    %3607 = vmatpush1.msra.mxu0 %v97
    %3608 = vmatprep.subr.mxu0 0.0
    %3609 = vmatpush1.msra.mxu0 %v96
    %3610 = vmatprep.subr.mxu0 0.0
    %3611 = vmatpush1.msra.mxu0 %v95
    %3612 = vmatprep.subr.mxu0 0.0
    %3613 = vmatpush1.msra.mxu0 %v94
    %3614 = vmatprep.subr.mxu0 0.0
    %3615 = vmatpush1.msra.mxu0 %v93
    %3616 = vmatprep.subr.mxu0 0.0
    %3617 = vmatpush1.msra.mxu0 %v92
    %3618 = vmatprep.subr.mxu0 0.0
    %3619 = vmatpush2.msra.mxu0 0.0
    %3620 = vmatprep.subr.mxu0 0.0
    %3621 = vmatpush2.msra.mxu0 0.0
    %3622 = vmatprep.subr.mxu0 0.0
    %3623 = vmatpush2.msra.mxu0 0.0
    %3624 = vmatprep.subr.mxu0 0.0
    %3625 = vmatpush2.msra.mxu0 0.0
    %3626 = vmatprep.subr.mxu0 0.0
    %3627 = vmatpush2.msra.mxu0 0.0
    %3628 = vmatprep.subr.mxu0 0.0
    %3629 = vmatpush2.msra.mxu0 0.0
    %3630 = vmatprep.subr.mxu0 0.0
    %3631 = vmatpush2.msra.mxu0 0.0
    %3632 = vmatprep.subr.mxu0 0.0
    %3633 = vmatpush2.msra.mxu0 0.0
    %3634 = vmatprep.subr.mxu0 0.0
    %3635 = vmatpush2.msra.mxu0 0.0
    %3636 = vmatprep.subr.mxu0 0.0
    %3637 = vmatpush2.msra.mxu0 0.0
    %3638 = vmatprep.subr.mxu0 0.0
    %3639 = vmatpush2.msra.mxu0 0.0
    %3640 = vmatprep.subr.mxu0 0.0
    %3641 = vmatpush2.msra.mxu0 0.0
    %3642 = vmatprep.subr.mxu0 0.0
    %3643 = vmatpush2.msra.mxu0 0.0
    %3644 = vmatprep.subr.mxu0 0.0
    %3645 = vmatpush2.msra.mxu0 0.0
    %3646 = vmatprep.subr.mxu0 0.0
    %3647 = vmatpush2.msra.mxu0 0.0
    %3648 = vmatprep.subr.mxu0 0.0
    %3649 = vmatpush2.msra.mxu0 0.0
    %3650 = vmatprep.mubr.f32.mxu0 0.0
    %3651 = vmatmul.mubr.f32.gmra.mxu0 %v3575
    %v3652 = vpop.f32.mrf.mxu0
    %v3653 = vadd.f32 %v3556, %v3652
    %v3654 = vpop.f32.mrf.mxu0
    %3655 = vmatprep.mubr.f32.mxu0 0.0
    %3656 = vmatmul.mubr.f32.gmra.mxu0 %v3578
    %v3657 = vpop.f32.mrf.mxu0
    %v3658 = vadd.f32 %v3561, %v3657
    %v3659 = vpop.f32.mrf.mxu0
    %3660 = vmatprep.mubr.f32.mxu0 0.0
    %3661 = vmatmul.mubr.f32.gmra.mxu0 %v3581
    %v3662 = vpop.f32.mrf.mxu0
    %v3663 = vadd.f32 %v3566, %v3662
    %v3664 = vpop.f32.mrf.mxu0
    %3665 = vmatprep.mubr.f32.mxu0 0.0
    %3666 = vmatmul.mubr.f32.gmra.mxu0 %v3584
    %v3667 = vpop.f32.mrf.mxu0
    %v3668 = vadd.f32 %v3571, %v3667
    %v3669 = vpop.f32.mrf.mxu0
    %3670 = vdwg.mxu0
    %v3672 = vsel %vm333, %v3459, 0
    %v3675 = vsel %vm333, %v3464, 0
    %v3678 = vsel %vm333, %v3469, 0
    %v3681 = vsel %vm333, %v3474, 0
    %3683 = vmatprep.subr.mxu0 0.0
    %3684 = vmatpush1.msra.mxu0 0.0
    %3685 = vmatprep.subr.mxu0 0.0
    %3686 = vmatpush1.msra.mxu0 0.0
    %3687 = vmatprep.subr.mxu0 0.0
    %3688 = vmatpush1.msra.mxu0 0.0
    %3689 = vmatprep.subr.mxu0 0.0
    %3690 = vmatpush1.msra.mxu0 0.0
    %3691 = vmatprep.subr.mxu0 0.0
    %3692 = vmatpush1.msra.mxu0 0.0
    %3693 = vmatprep.subr.mxu0 0.0
    %3694 = vmatpush1.msra.mxu0 0.0
    %3695 = vmatprep.subr.mxu0 0.0
    %3696 = vmatpush1.msra.mxu0 0.0
    %3697 = vmatprep.subr.mxu0 0.0
    %3698 = vmatpush1.msra.mxu0 0.0
    %3699 = vmatprep.subr.mxu0 0.0
    %3700 = vmatpush1.msra.mxu0 %v117
    %3701 = vmatprep.subr.mxu0 0.0
    %3702 = vmatpush1.msra.mxu0 %v116
    %3703 = vmatprep.subr.mxu0 0.0
    %3704 = vmatpush1.msra.mxu0 %v115
    %3705 = vmatprep.subr.mxu0 0.0
    %3706 = vmatpush1.msra.mxu0 %v114
    %3707 = vmatprep.subr.mxu0 0.0
    %3708 = vmatpush1.msra.mxu0 %v113
    %3709 = vmatprep.subr.mxu0 0.0
    %3710 = vmatpush1.msra.mxu0 %v112
    %3711 = vmatprep.subr.mxu0 0.0
    %3712 = vmatpush1.msra.mxu0 %v111
    %3713 = vmatprep.subr.mxu0 0.0
    %3714 = vmatpush1.msra.mxu0 %v110
    %3715 = vmatprep.subr.mxu0 0.0
    %3716 = vmatpush2.msra.mxu0 0.0
    %3717 = vmatprep.subr.mxu0 0.0
    %3718 = vmatpush2.msra.mxu0 0.0
    %3719 = vmatprep.subr.mxu0 0.0
    %3720 = vmatpush2.msra.mxu0 0.0
    %3721 = vmatprep.subr.mxu0 0.0
    %3722 = vmatpush2.msra.mxu0 0.0
    %3723 = vmatprep.subr.mxu0 0.0
    %3724 = vmatpush2.msra.mxu0 0.0
    %3725 = vmatprep.subr.mxu0 0.0
    %3726 = vmatpush2.msra.mxu0 0.0
    %3727 = vmatprep.subr.mxu0 0.0
    %3728 = vmatpush2.msra.mxu0 0.0
    %3729 = vmatprep.subr.mxu0 0.0
    %3730 = vmatpush2.msra.mxu0 0.0
    %3731 = vmatprep.subr.mxu0 0.0
    %3732 = vmatpush2.msra.mxu0 0.0
    %3733 = vmatprep.subr.mxu0 0.0
    %3734 = vmatpush2.msra.mxu0 0.0
    %3735 = vmatprep.subr.mxu0 0.0
    %3736 = vmatpush2.msra.mxu0 0.0
    %3737 = vmatprep.subr.mxu0 0.0
    %3738 = vmatpush2.msra.mxu0 0.0
    %3739 = vmatprep.subr.mxu0 0.0
    %3740 = vmatpush2.msra.mxu0 0.0
    %3741 = vmatprep.subr.mxu0 0.0
    %3742 = vmatpush2.msra.mxu0 0.0
    %3743 = vmatprep.subr.mxu0 0.0
    %3744 = vmatpush2.msra.mxu0 0.0
    %3745 = vmatprep.subr.mxu0 0.0
    %3746 = vmatpush2.msra.mxu0 0.0
    %3747 = vmatprep.mubr.f32.mxu0 0.0
    %3748 = vmatmul.mubr.f32.gmra.mxu0 %v3672
    %v3749 = vpop.f32.mrf.mxu0
    %v3750 = vadd.f32 0.0, %v3749
    %v3751 = vpop.f32.mrf.mxu0
    %3752 = vmatprep.mubr.f32.mxu0 0.0
    %3753 = vmatmul.mubr.f32.gmra.mxu0 %v3675
    %v3754 = vpop.f32.mrf.mxu0
    %v3755 = vadd.f32 0.0, %v3754
    %v3756 = vpop.f32.mrf.mxu0
    %3757 = vmatprep.mubr.f32.mxu0 0.0
    %3758 = vmatmul.mubr.f32.gmra.mxu0 %v3678
    %v3759 = vpop.f32.mrf.mxu0
    %v3760 = vadd.f32 0.0, %v3759
    %v3761 = vpop.f32.mrf.mxu0
    %3762 = vmatprep.mubr.f32.mxu0 0.0
    %3763 = vmatmul.mubr.f32.gmra.mxu0 %v3681
    %v3764 = vpop.f32.mrf.mxu0
    %v3765 = vadd.f32 0.0, %v3764
    %v3766 = vpop.f32.mrf.mxu0
    %3767 = vdwg.mxu0
    %v3768 = vadd.f32 %v3653, %v3750
    %v3769 = vadd.f32 %v3658, %v3755
    %v3770 = vadd.f32 %v3663, %v3760
    %v3771 = vadd.f32 %v3668, %v3765
    %v3772 = vadd.f32 %v3768, %v132
    %v3773 = vadd.f32 %v3769, %v132
    %v3774 = vadd.f32 %v3770, %v132
    %v3775 = vadd.f32 %v3771, %v132
    %s3776 = sld [smem:[#allocation11 + $0x6]]
    %s3777 = sld [smem:[#allocation11 + $0x86]]
    %s3778 = sld [smem:[#allocation11 + $0x106]]
    %s3779 = sld [smem:[#allocation11 + $0x186]]
    %s3780 = sld [smem:[#allocation11 + $0x206]]
    %v3781 = vstv %s3776
    %v3782 = vmul.f32 %v3781, %v3303
    %v3783 = vmul.f32 %v3781, %v3304
    %v3784 = vmul.f32 %v3781, %v3305
    %v3785 = vmul.f32 %v3781, %v3306
    %v3786 = vstv %s3777
    %v3787 = vmul.f32 %v3786, %v3772
    %v3788 = vmul.f32 %v3786, %v3773
    %v3789 = vmul.f32 %v3786, %v3774
    %v3790 = vmul.f32 %v3786, %v3775
    %v3791 = vsub.f32 %v3782, %v3787
    %v3792 = vsub.f32 %v3783, %v3788
    %v3793 = vsub.f32 %v3784, %v3789
    %v3794 = vsub.f32 %v3785, %v3790
    %v3795 = vmax.f32 %v3791, -1.0
    %v3796 = vmax.f32 %v3792, -1.0
    %v3797 = vmax.f32 %v3793, -1.0
    %v3798 = vmax.f32 %v3794, -1.0
    %v3799 = vmin.f32 %v3795, 1.0
    %v3800 = vmin.f32 %v3796, 1.0
    %v3801 = vmin.f32 %v3797, 1.0
    %v3802 = vmin.f32 %v3798, 1.0
    %v3803 = vstv %s3778
    %v3804 = vmul.f32 %v3803, %v3799
    %v3805 = vmul.f32 %v3803, %v3800
    %v3806 = vmul.f32 %v3803, %v3801
    %v3807 = vmul.f32 %v3803, %v3802
    %v3808 = vstv %s3779
    %v3809 = vmul.f32 %v3808, %v3303
    %v3810 = vmul.f32 %v3808, %v3304
    %v3811 = vmul.f32 %v3808, %v3305
    %v3812 = vmul.f32 %v3808, %v3306
    %v3813 = vadd.f32 %v3804, %v3809
    %v3814 = vadd.f32 %v3805, %v3810
    %v3815 = vadd.f32 %v3806, %v3811
    %v3816 = vadd.f32 %v3807, %v3812
    %s3817 = scalar_lea.vmem [#allocation6], 192
    %v3818 = vld [vmem:[%s3817] sm:$0xff]
    %v3819 = vld [vmem:[%s3817 + $0x8] sm:$0xff]
    %v3820 = vld [vmem:[%s3817 + $0x10] sm:$0xff]
    %v3821 = vld [vmem:[%s3817 + $0x18] sm:$0xff]
    %v3822 = vstv %s3780
    %v3823 = vmul.f32 %v3822, %v3818
    %v3824 = vmul.f32 %v3822, %v3819
    %v3825 = vmul.f32 %v3822, %v3820
    %v3826 = vmul.f32 %v3822, %v3821
    %v3827 = vadd.f32 %v3813, %v3823
    %v3828 = vadd.f32 %v3814, %v3824
    %v3829 = vadd.f32 %v3815, %v3825
    %v3830 = vadd.f32 %v3816, %v3826
    %3831 = vmatprep.subr.mxu0 0.0
    %3832 = vmatpush1.msra.mxu0 0.0
    %3833 = vmatprep.subr.mxu0 0.0
    %3834 = vmatpush1.msra.mxu0 0.0
    %3835 = vmatprep.subr.mxu0 0.0
    %3836 = vmatpush1.msra.mxu0 0.0
    %3837 = vmatprep.subr.mxu0 0.0
    %3838 = vmatpush1.msra.mxu0 0.0
    %3839 = vmatprep.subr.mxu0 0.0
    %3840 = vmatpush1.msra.mxu0 0.0
    %3841 = vmatprep.subr.mxu0 0.0
    %3842 = vmatpush1.msra.mxu0 0.0
    %3843 = vmatprep.subr.mxu0 0.0
    %3844 = vmatpush1.msra.mxu0 0.0
    %3845 = vmatprep.subr.mxu0 0.0
    %3846 = vmatpush1.msra.mxu0 0.0
    %3847 = vmatprep.subr.mxu0 0.0
    %3848 = vmatpush1.msra.mxu0 0.0
    %3849 = vmatprep.subr.mxu0 0.0
    %3850 = vmatpush1.msra.mxu0 0.0
    %3851 = vmatprep.subr.mxu0 0.0
    %3852 = vmatpush1.msra.mxu0 0.0
    %3853 = vmatprep.subr.mxu0 0.0
    %3854 = vmatpush1.msra.mxu0 0.0
    %3855 = vmatprep.subr.mxu0 0.0
    %3856 = vmatpush1.msra.mxu0 %v3830
    %3857 = vmatprep.subr.mxu0 0.0
    %3858 = vmatpush1.msra.mxu0 %v3829
    %3859 = vmatprep.subr.mxu0 0.0
    %3860 = vmatpush1.msra.mxu0 %v3828
    %3861 = vmatprep.subr.mxu0 0.0
    %3862 = vmatpush1.msra.mxu0 %v3827
    %3863 = vmatprep.subr.mxu0 0.0
    %3864 = vmatpush2.msra.mxu0 0.0
    %3865 = vmatprep.subr.mxu0 0.0
    %3866 = vmatpush2.msra.mxu0 0.0
    %3867 = vmatprep.subr.mxu0 0.0
    %3868 = vmatpush2.msra.mxu0 0.0
    %3869 = vmatprep.subr.mxu0 0.0
    %3870 = vmatpush2.msra.mxu0 0.0
    %3871 = vmatprep.subr.mxu0 0.0
    %3872 = vmatpush2.msra.mxu0 0.0
    %3873 = vmatprep.subr.mxu0 0.0
    %3874 = vmatpush2.msra.mxu0 0.0
    %3875 = vmatprep.subr.mxu0 0.0
    %3876 = vmatpush2.msra.mxu0 0.0
    %3877 = vmatprep.subr.mxu0 0.0
    %3878 = vmatpush2.msra.mxu0 0.0
    %3879 = vmatprep.subr.mxu0 0.0
    %3880 = vmatpush2.msra.mxu0 0.0
    %3881 = vmatprep.subr.mxu0 0.0
    %3882 = vmatpush2.msra.mxu0 0.0
    %3883 = vmatprep.subr.mxu0 0.0
    %3884 = vmatpush2.msra.mxu0 0.0
    %3885 = vmatprep.subr.mxu0 0.0
    %3886 = vmatpush2.msra.mxu0 0.0
    %3887 = vmatprep.subr.mxu0 0.0
    %3888 = vmatpush2.msra.mxu0 0.0
    %3889 = vmatprep.subr.mxu0 0.0
    %3890 = vmatpush2.msra.mxu0 0.0
    %3891 = vmatprep.subr.mxu0 0.0
    %3892 = vmatpush2.msra.mxu0 0.0
    %3893 = vmatprep.subr.mxu0 0.0
    %3894 = vmatpush2.msra.mxu0 0.0
    %3895 = vmatprep.mubr.f32.mxu0 0.0
    %3896 = vmatmul.mubr.f32.gmra.mxu0 %v140
    %v3897 = vpop.f32.mrf.mxu0
    %v3898 = vadd.f32 0.0, %v3897
    %v3899 = vpop.f32.mrf.mxu0
    %3900 = vmatprep.mubr.f32.mxu0 0.0
    %3901 = vmatmul.mubr.f32.gmra.mxu0 %v143
    %v3902 = vpop.f32.mrf.mxu0
    %v3903 = vadd.f32 0.0, %v3902
    %v3904 = vpop.f32.mrf.mxu0
    %3905 = vmatprep.mubr.f32.mxu0 0.0
    %3906 = vmatmul.mubr.f32.gmra.mxu0 %v146
    %v3907 = vpop.f32.mrf.mxu0
    %v3908 = vadd.f32 0.0, %v3907
    %v3909 = vpop.f32.mrf.mxu0
    %3910 = vmatprep.mubr.f32.mxu0 0.0
    %3911 = vmatmul.mubr.f32.gmra.mxu0 %v149
    %v3912 = vpop.f32.mrf.mxu0
    %v3913 = vadd.f32 0.0, %v3912
    %v3914 = vpop.f32.mrf.mxu0
    %3915 = vdwg.mxu0
    %3916 = vmatprep.subr.mxu0 0.0
    %3917 = vmatpush1.msra.mxu0 0.0
    %3918 = vmatprep.subr.mxu0 0.0
    %3919 = vmatpush1.msra.mxu0 0.0
    %3920 = vmatprep.subr.mxu0 0.0
    %3921 = vmatpush1.msra.mxu0 0.0
    %3922 = vmatprep.subr.mxu0 0.0
    %3923 = vmatpush1.msra.mxu0 0.0
    %3924 = vmatprep.subr.mxu0 0.0
    %3925 = vmatpush1.msra.mxu0 0.0
    %3926 = vmatprep.subr.mxu0 0.0
    %3927 = vmatpush1.msra.mxu0 0.0
    %3928 = vmatprep.subr.mxu0 0.0
    %3929 = vmatpush1.msra.mxu0 0.0
    %3930 = vmatprep.subr.mxu0 0.0
    %3931 = vmatpush1.msra.mxu0 0.0
    %3932 = vmatprep.subr.mxu0 0.0
    %3933 = vmatpush1.msra.mxu0 0.0
    %3934 = vmatprep.subr.mxu0 0.0
    %3935 = vmatpush1.msra.mxu0 0.0
    %3936 = vmatprep.subr.mxu0 0.0
    %3937 = vmatpush1.msra.mxu0 0.0
    %3938 = vmatprep.subr.mxu0 0.0
    %3939 = vmatpush1.msra.mxu0 0.0
    %3940 = vmatprep.subr.mxu0 0.0
    %3941 = vmatpush1.msra.mxu0 %v3830
    %3942 = vmatprep.subr.mxu0 0.0
    %3943 = vmatpush1.msra.mxu0 %v3829
    %3944 = vmatprep.subr.mxu0 0.0
    %3945 = vmatpush1.msra.mxu0 %v3828
    %3946 = vmatprep.subr.mxu0 0.0
    %3947 = vmatpush1.msra.mxu0 %v3827
    %3948 = vmatprep.subr.mxu0 0.0
    %3949 = vmatpush2.msra.mxu0 0.0
    %3950 = vmatprep.subr.mxu0 0.0
    %3951 = vmatpush2.msra.mxu0 0.0
    %3952 = vmatprep.subr.mxu0 0.0
    %3953 = vmatpush2.msra.mxu0 0.0
    %3954 = vmatprep.subr.mxu0 0.0
    %3955 = vmatpush2.msra.mxu0 0.0
    %3956 = vmatprep.subr.mxu0 0.0
    %3957 = vmatpush2.msra.mxu0 0.0
    %3958 = vmatprep.subr.mxu0 0.0
    %3959 = vmatpush2.msra.mxu0 0.0
    %3960 = vmatprep.subr.mxu0 0.0
    %3961 = vmatpush2.msra.mxu0 0.0
    %3962 = vmatprep.subr.mxu0 0.0
    %3963 = vmatpush2.msra.mxu0 0.0
    %3964 = vmatprep.subr.mxu0 0.0
    %3965 = vmatpush2.msra.mxu0 0.0
    %3966 = vmatprep.subr.mxu0 0.0
    %3967 = vmatpush2.msra.mxu0 0.0
    %3968 = vmatprep.subr.mxu0 0.0
    %3969 = vmatpush2.msra.mxu0 0.0
    %3970 = vmatprep.subr.mxu0 0.0
    %3971 = vmatpush2.msra.mxu0 0.0
    %3972 = vmatprep.subr.mxu0 0.0
    %3973 = vmatpush2.msra.mxu0 0.0
    %3974 = vmatprep.subr.mxu0 0.0
    %3975 = vmatpush2.msra.mxu0 0.0
    %3976 = vmatprep.subr.mxu0 0.0
    %3977 = vmatpush2.msra.mxu0 0.0
    %3978 = vmatprep.subr.mxu0 0.0
    %3979 = vmatpush2.msra.mxu0 0.0
    %3980 = vmatprep.mubr.f32.mxu0 0.0
    %3981 = vmatmul.mubr.f32.gmra.mxu0 %v237
    %v3982 = vpop.f32.mrf.mxu0
    %v3983 = vadd.f32 0.0, %v3982
    %v3984 = vpop.f32.mrf.mxu0
    %3985 = vmatprep.mubr.f32.mxu0 0.0
    %3986 = vmatmul.mubr.f32.gmra.mxu0 %v240
    %v3987 = vpop.f32.mrf.mxu0
    %v3988 = vadd.f32 0.0, %v3987
    %v3989 = vpop.f32.mrf.mxu0
    %3990 = vmatprep.mubr.f32.mxu0 0.0
    %3991 = vmatmul.mubr.f32.gmra.mxu0 %v243
    %v3992 = vpop.f32.mrf.mxu0
    %v3993 = vadd.f32 0.0, %v3992
    %v3994 = vpop.f32.mrf.mxu0
    %3995 = vmatprep.mubr.f32.mxu0 0.0
    %3996 = vmatmul.mubr.f32.gmra.mxu0 %v246
    %v3997 = vpop.f32.mrf.mxu0
    %v3998 = vadd.f32 0.0, %v3997
    %v3999 = vpop.f32.mrf.mxu0
    %4000 = vdwg.mxu0
    %v4002 = vsel %vm333, %v3827, 0
    %v4005 = vsel %vm333, %v3828, 0
    %v4008 = vsel %vm333, %v3829, 0
    %v4011 = vsel %vm333, %v3830, 0
    %4013 = vmatprep.subr.mxu0 0.0
    %4014 = vmatpush1.msra.mxu0 0.0
    %4015 = vmatprep.subr.mxu0 0.0
    %4016 = vmatpush1.msra.mxu0 0.0
    %4017 = vmatprep.subr.mxu0 0.0
    %4018 = vmatpush1.msra.mxu0 0.0
    %4019 = vmatprep.subr.mxu0 0.0
    %4020 = vmatpush1.msra.mxu0 0.0
    %4021 = vmatprep.subr.mxu0 0.0
    %4022 = vmatpush1.msra.mxu0 0.0
    %4023 = vmatprep.subr.mxu0 0.0
    %4024 = vmatpush1.msra.mxu0 0.0
    %4025 = vmatprep.subr.mxu0 0.0
    %4026 = vmatpush1.msra.mxu0 0.0
    %4027 = vmatprep.subr.mxu0 0.0
    %4028 = vmatpush1.msra.mxu0 0.0
    %4029 = vmatprep.subr.mxu0 0.0
    %4030 = vmatpush1.msra.mxu0 %v108
    %4031 = vmatprep.subr.mxu0 0.0
    %4032 = vmatpush1.msra.mxu0 %v107
    %4033 = vmatprep.subr.mxu0 0.0
    %4034 = vmatpush1.msra.mxu0 %v106
    %4035 = vmatprep.subr.mxu0 0.0
    %4036 = vmatpush1.msra.mxu0 %v105
    %4037 = vmatprep.subr.mxu0 0.0
    %4038 = vmatpush1.msra.mxu0 %v104
    %4039 = vmatprep.subr.mxu0 0.0
    %4040 = vmatpush1.msra.mxu0 %v103
    %4041 = vmatprep.subr.mxu0 0.0
    %4042 = vmatpush1.msra.mxu0 %v102
    %4043 = vmatprep.subr.mxu0 0.0
    %4044 = vmatpush1.msra.mxu0 %v101
    %4045 = vmatprep.subr.mxu0 0.0
    %4046 = vmatpush2.msra.mxu0 0.0
    %4047 = vmatprep.subr.mxu0 0.0
    %4048 = vmatpush2.msra.mxu0 0.0
    %4049 = vmatprep.subr.mxu0 0.0
    %4050 = vmatpush2.msra.mxu0 0.0
    %4051 = vmatprep.subr.mxu0 0.0
    %4052 = vmatpush2.msra.mxu0 0.0
    %4053 = vmatprep.subr.mxu0 0.0
    %4054 = vmatpush2.msra.mxu0 0.0
    %4055 = vmatprep.subr.mxu0 0.0
    %4056 = vmatpush2.msra.mxu0 0.0
    %4057 = vmatprep.subr.mxu0 0.0
    %4058 = vmatpush2.msra.mxu0 0.0
    %4059 = vmatprep.subr.mxu0 0.0
    %4060 = vmatpush2.msra.mxu0 0.0
    %4061 = vmatprep.subr.mxu0 0.0
    %4062 = vmatpush2.msra.mxu0 0.0
    %4063 = vmatprep.subr.mxu0 0.0
    %4064 = vmatpush2.msra.mxu0 0.0
    %4065 = vmatprep.subr.mxu0 0.0
    %4066 = vmatpush2.msra.mxu0 0.0
    %4067 = vmatprep.subr.mxu0 0.0
    %4068 = vmatpush2.msra.mxu0 0.0
    %4069 = vmatprep.subr.mxu0 0.0
    %4070 = vmatpush2.msra.mxu0 0.0
    %4071 = vmatprep.subr.mxu0 0.0
    %4072 = vmatpush2.msra.mxu0 0.0
    %4073 = vmatprep.subr.mxu0 0.0
    %4074 = vmatpush2.msra.mxu0 0.0
    %4075 = vmatprep.subr.mxu0 0.0
    %4076 = vmatpush2.msra.mxu0 0.0
    %4077 = vmatprep.mubr.f32.mxu0 0.0
    %4078 = vmatmul.mubr.f32.gmra.mxu0 %v4002
    %v4079 = vpop.f32.mrf.mxu0
    %v4080 = vadd.f32 0.0, %v4079
    %v4081 = vpop.f32.mrf.mxu0
    %4082 = vmatprep.mubr.f32.mxu0 0.0
    %4083 = vmatmul.mubr.f32.gmra.mxu0 %v4005
    %v4084 = vpop.f32.mrf.mxu0
    %v4085 = vadd.f32 0.0, %v4084
    %v4086 = vpop.f32.mrf.mxu0
    %4087 = vmatprep.mubr.f32.mxu0 0.0
    %4088 = vmatmul.mubr.f32.gmra.mxu0 %v4008
    %v4089 = vpop.f32.mrf.mxu0
    %v4090 = vadd.f32 0.0, %v4089
    %v4091 = vpop.f32.mrf.mxu0
    %4092 = vmatprep.mubr.f32.mxu0 0.0
    %4093 = vmatmul.mubr.f32.gmra.mxu0 %v4011
    %v4094 = vpop.f32.mrf.mxu0
    %v4095 = vadd.f32 0.0, %v4094
    %v4096 = vpop.f32.mrf.mxu0
    %4097 = vdwg.mxu0
    %v4099 = vsel %vm333, %v3898, 0
    %v4102 = vsel %vm333, %v3903, 0
    %v4105 = vsel %vm333, %v3908, 0
    %v4108 = vsel %vm333, %v3913, 0
    %4110 = vmatprep.subr.mxu0 0.0
    %4111 = vmatpush1.msra.mxu0 0.0
    %4112 = vmatprep.subr.mxu0 0.0
    %4113 = vmatpush1.msra.mxu0 0.0
    %4114 = vmatprep.subr.mxu0 0.0
    %4115 = vmatpush1.msra.mxu0 0.0
    %4116 = vmatprep.subr.mxu0 0.0
    %4117 = vmatpush1.msra.mxu0 0.0
    %4118 = vmatprep.subr.mxu0 0.0
    %4119 = vmatpush1.msra.mxu0 0.0
    %4120 = vmatprep.subr.mxu0 0.0
    %4121 = vmatpush1.msra.mxu0 0.0
    %4122 = vmatprep.subr.mxu0 0.0
    %4123 = vmatpush1.msra.mxu0 0.0
    %4124 = vmatprep.subr.mxu0 0.0
    %4125 = vmatpush1.msra.mxu0 0.0
    %4126 = vmatprep.subr.mxu0 0.0
    %4127 = vmatpush1.msra.mxu0 %v99
    %4128 = vmatprep.subr.mxu0 0.0
    %4129 = vmatpush1.msra.mxu0 %v98
    %4130 = vmatprep.subr.mxu0 0.0
    %4131 = vmatpush1.msra.mxu0 %v97
    %4132 = vmatprep.subr.mxu0 0.0
    %4133 = vmatpush1.msra.mxu0 %v96
    %4134 = vmatprep.subr.mxu0 0.0
    %4135 = vmatpush1.msra.mxu0 %v95
    %4136 = vmatprep.subr.mxu0 0.0
    %4137 = vmatpush1.msra.mxu0 %v94
    %4138 = vmatprep.subr.mxu0 0.0
    %4139 = vmatpush1.msra.mxu0 %v93
    %4140 = vmatprep.subr.mxu0 0.0
    %4141 = vmatpush1.msra.mxu0 %v92
    %4142 = vmatprep.subr.mxu0 0.0
    %4143 = vmatpush2.msra.mxu0 0.0
    %4144 = vmatprep.subr.mxu0 0.0
    %4145 = vmatpush2.msra.mxu0 0.0
    %4146 = vmatprep.subr.mxu0 0.0
    %4147 = vmatpush2.msra.mxu0 0.0
    %4148 = vmatprep.subr.mxu0 0.0
    %4149 = vmatpush2.msra.mxu0 0.0
    %4150 = vmatprep.subr.mxu0 0.0
    %4151 = vmatpush2.msra.mxu0 0.0
    %4152 = vmatprep.subr.mxu0 0.0
    %4153 = vmatpush2.msra.mxu0 0.0
    %4154 = vmatprep.subr.mxu0 0.0
    %4155 = vmatpush2.msra.mxu0 0.0
    %4156 = vmatprep.subr.mxu0 0.0
    %4157 = vmatpush2.msra.mxu0 0.0
    %4158 = vmatprep.subr.mxu0 0.0
    %4159 = vmatpush2.msra.mxu0 0.0
    %4160 = vmatprep.subr.mxu0 0.0
    %4161 = vmatpush2.msra.mxu0 0.0
    %4162 = vmatprep.subr.mxu0 0.0
    %4163 = vmatpush2.msra.mxu0 0.0
    %4164 = vmatprep.subr.mxu0 0.0
    %4165 = vmatpush2.msra.mxu0 0.0
    %4166 = vmatprep.subr.mxu0 0.0
    %4167 = vmatpush2.msra.mxu0 0.0
    %4168 = vmatprep.subr.mxu0 0.0
    %4169 = vmatpush2.msra.mxu0 0.0
    %4170 = vmatprep.subr.mxu0 0.0
    %4171 = vmatpush2.msra.mxu0 0.0
    %4172 = vmatprep.subr.mxu0 0.0
    %4173 = vmatpush2.msra.mxu0 0.0
    %4174 = vmatprep.mubr.f32.mxu0 0.0
    %4175 = vmatmul.mubr.f32.gmra.mxu0 %v4099
    %v4176 = vpop.f32.mrf.mxu0
    %v4177 = vadd.f32 %v4080, %v4176
    %v4178 = vpop.f32.mrf.mxu0
    %4179 = vmatprep.mubr.f32.mxu0 0.0
    %4180 = vmatmul.mubr.f32.gmra.mxu0 %v4102
    %v4181 = vpop.f32.mrf.mxu0
    %v4182 = vadd.f32 %v4085, %v4181
    %v4183 = vpop.f32.mrf.mxu0
    %4184 = vmatprep.mubr.f32.mxu0 0.0
    %4185 = vmatmul.mubr.f32.gmra.mxu0 %v4105
    %v4186 = vpop.f32.mrf.mxu0
    %v4187 = vadd.f32 %v4090, %v4186
    %v4188 = vpop.f32.mrf.mxu0
    %4189 = vmatprep.mubr.f32.mxu0 0.0
    %4190 = vmatmul.mubr.f32.gmra.mxu0 %v4108
    %v4191 = vpop.f32.mrf.mxu0
    %v4192 = vadd.f32 %v4095, %v4191
    %v4193 = vpop.f32.mrf.mxu0
    %4194 = vdwg.mxu0
    %v4196 = vsel %vm333, %v3983, 0
    %v4199 = vsel %vm333, %v3988, 0
    %v4202 = vsel %vm333, %v3993, 0
    %v4205 = vsel %vm333, %v3998, 0
    %4207 = vmatprep.subr.mxu0 0.0
    %4208 = vmatpush1.msra.mxu0 0.0
    %4209 = vmatprep.subr.mxu0 0.0
    %4210 = vmatpush1.msra.mxu0 0.0
    %4211 = vmatprep.subr.mxu0 0.0
    %4212 = vmatpush1.msra.mxu0 0.0
    %4213 = vmatprep.subr.mxu0 0.0
    %4214 = vmatpush1.msra.mxu0 0.0
    %4215 = vmatprep.subr.mxu0 0.0
    %4216 = vmatpush1.msra.mxu0 0.0
    %4217 = vmatprep.subr.mxu0 0.0
    %4218 = vmatpush1.msra.mxu0 0.0
    %4219 = vmatprep.subr.mxu0 0.0
    %4220 = vmatpush1.msra.mxu0 0.0
    %4221 = vmatprep.subr.mxu0 0.0
    %4222 = vmatpush1.msra.mxu0 0.0
    %4223 = vmatprep.subr.mxu0 0.0
    %4224 = vmatpush1.msra.mxu0 %v117
    %4225 = vmatprep.subr.mxu0 0.0
    %4226 = vmatpush1.msra.mxu0 %v116
    %4227 = vmatprep.subr.mxu0 0.0
    %4228 = vmatpush1.msra.mxu0 %v115
    %4229 = vmatprep.subr.mxu0 0.0
    %4230 = vmatpush1.msra.mxu0 %v114
    %4231 = vmatprep.subr.mxu0 0.0
    %4232 = vmatpush1.msra.mxu0 %v113
    %4233 = vmatprep.subr.mxu0 0.0
    %4234 = vmatpush1.msra.mxu0 %v112
    %4235 = vmatprep.subr.mxu0 0.0
    %4236 = vmatpush1.msra.mxu0 %v111
    %4237 = vmatprep.subr.mxu0 0.0
    %4238 = vmatpush1.msra.mxu0 %v110
    %4239 = vmatprep.subr.mxu0 0.0
    %4240 = vmatpush2.msra.mxu0 0.0
    %4241 = vmatprep.subr.mxu0 0.0
    %4242 = vmatpush2.msra.mxu0 0.0
    %4243 = vmatprep.subr.mxu0 0.0
    %4244 = vmatpush2.msra.mxu0 0.0
    %4245 = vmatprep.subr.mxu0 0.0
    %4246 = vmatpush2.msra.mxu0 0.0
    %4247 = vmatprep.subr.mxu0 0.0
    %4248 = vmatpush2.msra.mxu0 0.0
    %4249 = vmatprep.subr.mxu0 0.0
    %4250 = vmatpush2.msra.mxu0 0.0
    %4251 = vmatprep.subr.mxu0 0.0
    %4252 = vmatpush2.msra.mxu0 0.0
    %4253 = vmatprep.subr.mxu0 0.0
    %4254 = vmatpush2.msra.mxu0 0.0
    %4255 = vmatprep.subr.mxu0 0.0
    %4256 = vmatpush2.msra.mxu0 0.0
    %4257 = vmatprep.subr.mxu0 0.0
    %4258 = vmatpush2.msra.mxu0 0.0
    %4259 = vmatprep.subr.mxu0 0.0
    %4260 = vmatpush2.msra.mxu0 0.0
    %4261 = vmatprep.subr.mxu0 0.0
    %4262 = vmatpush2.msra.mxu0 0.0
    %4263 = vmatprep.subr.mxu0 0.0
    %4264 = vmatpush2.msra.mxu0 0.0
    %4265 = vmatprep.subr.mxu0 0.0
    %4266 = vmatpush2.msra.mxu0 0.0
    %4267 = vmatprep.subr.mxu0 0.0
    %4268 = vmatpush2.msra.mxu0 0.0
    %4269 = vmatprep.subr.mxu0 0.0
    %4270 = vmatpush2.msra.mxu0 0.0
    %4271 = vmatprep.mubr.f32.mxu0 0.0
    %4272 = vmatmul.mubr.f32.gmra.mxu0 %v4196
    %v4273 = vpop.f32.mrf.mxu0
    %v4274 = vadd.f32 0.0, %v4273
    %v4275 = vpop.f32.mrf.mxu0
    %4276 = vmatprep.mubr.f32.mxu0 0.0
    %4277 = vmatmul.mubr.f32.gmra.mxu0 %v4199
    %v4278 = vpop.f32.mrf.mxu0
    %v4279 = vadd.f32 0.0, %v4278
    %v4280 = vpop.f32.mrf.mxu0
    %4281 = vmatprep.mubr.f32.mxu0 0.0
    %4282 = vmatmul.mubr.f32.gmra.mxu0 %v4202
    %v4283 = vpop.f32.mrf.mxu0
    %v4284 = vadd.f32 0.0, %v4283
    %v4285 = vpop.f32.mrf.mxu0
    %4286 = vmatprep.mubr.f32.mxu0 0.0
    %4287 = vmatmul.mubr.f32.gmra.mxu0 %v4205
    %v4288 = vpop.f32.mrf.mxu0
    %v4289 = vadd.f32 0.0, %v4288
    %v4290 = vpop.f32.mrf.mxu0
    %4291 = vdwg.mxu0
    %v4292 = vadd.f32 %v4177, %v4274
    %v4293 = vadd.f32 %v4182, %v4279
    %v4294 = vadd.f32 %v4187, %v4284
    %v4295 = vadd.f32 %v4192, %v4289
    %v4296 = vadd.f32 %v4292, %v132
    %v4297 = vadd.f32 %v4293, %v132
    %v4298 = vadd.f32 %v4294, %v132
    %v4299 = vadd.f32 %v4295, %v132
    %s4300 = sld [smem:[#allocation11 + $0x7]]
    %s4301 = sld [smem:[#allocation11 + $0x87]]
    %s4302 = sld [smem:[#allocation11 + $0x107]]
    %s4303 = sld [smem:[#allocation11 + $0x187]]
    %v4304 = vstv %s4300
    %v4305 = vmul.f32 %v4304, %v3827
    %v4306 = vmul.f32 %v4304, %v3828
    %v4307 = vmul.f32 %v4304, %v3829
    %v4308 = vmul.f32 %v4304, %v3830
    %v4309 = vstv %s4301
    %v4310 = vmul.f32 %v4309, %v4296
    %v4311 = vmul.f32 %v4309, %v4297
    %v4312 = vmul.f32 %v4309, %v4298
    %v4313 = vmul.f32 %v4309, %v4299
    %v4314 = vsub.f32 %v4305, %v4310
    %v4315 = vsub.f32 %v4306, %v4311
    %v4316 = vsub.f32 %v4307, %v4312
    %v4317 = vsub.f32 %v4308, %v4313
    %v4318 = vmax.f32 %v4314, -1.0
    %v4319 = vmax.f32 %v4315, -1.0
    %v4320 = vmax.f32 %v4316, -1.0
    %v4321 = vmax.f32 %v4317, -1.0
    %v4322 = vmin.f32 %v4318, 1.0
    %v4323 = vmin.f32 %v4319, 1.0
    %v4324 = vmin.f32 %v4320, 1.0
    %v4325 = vmin.f32 %v4321, 1.0
    %v4326 = vstv %s4302
    %v4327 = vmul.f32 %v4326, %v4322
    %v4328 = vmul.f32 %v4326, %v4323
    %v4329 = vmul.f32 %v4326, %v4324
    %v4330 = vmul.f32 %v4326, %v4325
    %v4331 = vstv %s4303
    %v4332 = vmul.f32 %v4331, %v3827
    %v4333 = vmul.f32 %v4331, %v3828
    %v4334 = vmul.f32 %v4331, %v3829
    %v4335 = vmul.f32 %v4331, %v3830
    %v4336 = vadd.f32 %v4327, %v4332
    %v4337 = vadd.f32 %v4328, %v4333
    %v4338 = vadd.f32 %v4329, %v4334
    %v4339 = vadd.f32 %v4330, %v4335
    %s4340 = scalar_lea.vmem [#allocation6], 224
    %v4341 = vld [vmem:[%s4340] sm:$0xff]
    %v4342 = vld [vmem:[%s4340 + $0x8] sm:$0xff]
    %v4343 = vld [vmem:[%s4340 + $0x10] sm:$0xff]
    %v4344 = vld [vmem:[%s4340 + $0x18] sm:$0xff]
    %v4345 = vmul.f32 %v4341, 0.0
    %v4346 = vmul.f32 %v4342, 0.0
    %v4347 = vmul.f32 %v4343, 0.0
    %v4348 = vmul.f32 %v4344, 0.0
    %v4349 = vadd.f32 %v4336, %v4345
    %v4350 = vadd.f32 %v4337, %v4346
    %v4351 = vadd.f32 %v4338, %v4347
    %v4352 = vadd.f32 %v4339, %v4348
    %v4353 = vmax.f32 %v4349, -1.0
    %v4354 = vmax.f32 %v4350, -1.0
    %v4355 = vmax.f32 %v4351, -1.0
    %v4356 = vmax.f32 %v4352, -1.0
    %v4357 = vmin.f32 %v4353, 1.0
    %v4358 = vmin.f32 %v4354, 1.0
    %v4359 = vmin.f32 %v4355, 1.0
    %v4360 = vmin.f32 %v4356, 1.0
    %4361 = vst.msk [vmem:[#allocation12] sm:$0xff] %vm333, %v4357
    %4362 = vst.msk [vmem:[#allocation12 + $0x8] sm:$0xff] %vm333, %v4358
    %4363 = vst.msk [vmem:[#allocation12 + $0x10] sm:$0xff] %vm333, %v4359
    %4364 = vst.msk [vmem:[#allocation12 + $0x18] sm:$0xff] %vm333, %v4360
    // Predicated region
    $region46: #{tpu_custom_call.1} parent=1 // pred_check
      _
    $region47: #{tpu_custom_call.1} parent=1 // pred_check_branch
      %4366 = sbr.rel (0) target = $region49
    $region48: #{tpu_custom_call.1} parent=1 // pred_region
      %s4368 = ssub.s32 512, 512
      %4369 = vsyncadd [#allocation4], %s4368
      %s4370 = sshll.u32 [#allocation12], 4
      %s4371 = int_to_ptr.vmem [resolvable:$true] %s4370
      %4376 = dma.vmem_to_hbm [thread:$0]  %s4371, 512, %s6, [#allocation4], 128, 128, 8
    $region49: #{tpu_custom_call.1} parent=1 // pred_fallthru
      _
    // Predicated region
    $region50: #{tpu_custom_call.1} parent=1 // pred_check
      _
    $region51: #{tpu_custom_call.1} parent=1 // pred_check_branch
      %4378 = sbr.rel (0) target = $region53
    $region52: #{tpu_custom_call.1} parent=1 // pred_region
      %4379 = dma.done [#allocation4], 512
    $region53: #{tpu_custom_call.1} parent=1 // pred_fallthru
      _
    %4380 = vsyncpa [#allocation3], 1
    %4381 = vsyncpa [#allocation7], 1
    %4382 = vsyncpa [#allocation10], 1
    %4383 = vsyncpa [#allocation4], 1
    %4384 = vsyncpa [#allocation5], 1

</llo_original>
